<compile_context>
chip_gen: v6e
topology: v6e:2x2x1
jax: 0.10.0
libtpu: 0.0.40
codegen_flags: <defaults>
</compile_context>

<pallas_src>
import math

import jax
import jax.numpy as jnp
from jax.experimental import pallas as pl
from jax.experimental.pallas import tpu as pltpu


def _round_up(n: int, m: int) -> int:
    return ((n + m - 1) // m) * m


def _pad2d(a, rows: int, cols: int):
    r, c = a.shape
    if r == rows and c == cols:
        return a
    return jnp.pad(a, ((0, rows - r), (0, cols - c)))


def err_mlp_kernel(x_ref, w1_ref, b1_ref, w2_ref, b2_ref, w3_ref, b3_ref, o_ref):
    """Fused 3-layer MLP: relu(x@W1+b1) -> relu(.@W2+b2) -> .@W3+b3.

    x arrives in f32 and is cast to the weights' dtype (bf16) on-chip; all
    matmuls accumulate in f32 on the MXU; bias-add / ReLU are f32 VPU ops.
    """
    cdt = w1_ref.dtype
    h = jnp.dot(x_ref[...].astype(cdt), w1_ref[...],
                preferred_element_type=jnp.float32)
    h = jnp.maximum(h + b1_ref[...], 0.0)
    h = jnp.dot(h.astype(cdt), w2_ref[...], preferred_element_type=jnp.float32)
    h = jnp.maximum(h + b2_ref[...], 0.0)
    out = jnp.dot(h.astype(cdt), w3_ref[...], preferred_element_type=jnp.float32)
    o_ref[...] = (out + b3_ref[...]).astype(o_ref.dtype)


def prepare_err_params(params, *, compute_dtype=jnp.bfloat16):
    """Pad + cast the Err parameters once (cache the result across calls).

    Hidden dim is padded to a multiple of 128 (256 once embed_dim >= 256, to
    fill the v6e/v7x 256x256 MXU); the tiny output dim is left un-padded.
    Padded rows/cols are zero and therefore inert through bias/ReLU/matmul.
    """
    in_dim, e = params["w1"].shape
    n_out = params["w3"].shape[1]
    in_p = _round_up(in_dim, 16)            # bf16 K-dim sublane packing
    e_align = 256 if e >= 256 else 128
    e_p = _round_up(e, e_align)

    prepared = {
        "w1": _pad2d(params["w1"], in_p, e_p).astype(compute_dtype),
        "b1": _pad2d(params["b1"], 1, e_p).astype(jnp.float32),
        "w2": _pad2d(params["w2"], e_p, e_p).astype(compute_dtype),
        "b2": _pad2d(params["b2"], 1, e_p).astype(jnp.float32),
        "w3": _pad2d(params["w3"], e_p, n_out).astype(compute_dtype),
        "b3": _pad2d(params["b3"], 1, n_out).astype(jnp.float32),
        "in_dim": in_dim,
        "in_p": in_p,
        "e_p": e_p,
        "n_out": n_out,
        "compute_dtype": compute_dtype,
    }
    return prepared


def _physical_vmem_bytes() -> int:
    try:
        return int(pltpu.get_tpu_info().vmem_capacity_bytes)
    except Exception:
        return 64 * 1024 * 1024            # assume the smallest (v7x per-TC)


def err_forward(x, prepared, *, batch_tile: int = 512):
    """Pallas forward pass of Err.forward.

    x: (B, num_inputs + z_dim) float32.
    prepared: output of prepare_err_params (padded bf16 weights, f32 biases).
    Returns (B, num_outputs) float32.
    """
    B, in_dim = x.shape
    assert in_dim == prepared["in_dim"], "x feature dim mismatch"
    in_p = prepared["in_p"]
    e_p = prepared["e_p"]
    n_out = prepared["n_out"]
    cdt = prepared["compute_dtype"]

    # Batch tiling: multiples of 16 (bf16 packing).  Aim for tiles of roughly
    # ceil(B/2) (capped at batch_tile) so the "parallel" grid has >= 2 steps
    # for v7x's two TensorCores while staying large enough to amortize the
    # ~0.35 us per-step pipeline overhead on v5e/v6e.
    bt = max(16, min(_round_up(batch_tile, 16), _round_up(pl.cdiv(B, 2), 16)))
    b_pad = _round_up(B, bt)
    grid = (b_pad // bt,)

    # x stays f32; only the (cheap) batch/K raggedness is padded here.  The
    # bf16 cast happens inside the kernel, hidden under the pipeline.
    x_p = _pad2d(x, b_pad, in_p)

    itemsize = jnp.dtype(cdt).itemsize
    w_bytes = (in_p * e_p + e_p * e_p + e_p * n_out) * itemsize
    bias_bytes = (2 * e_p + n_out) * 4
    x_tile_bytes = bt * in_p * 4
    out_tile_bytes = bt * n_out * 4
    inter_bytes = 2 * bt * e_p * 4 + bt * e_p * itemsize

    flops = 2 * b_pad * (in_p * e_p + e_p * e_p + e_p * n_out)
    bytes_accessed = (b_pad * in_p * 4 + w_bytes + bias_bytes
                      + b_pad * n_out * 4)

    vmem_cap = max(_physical_vmem_bytes() - 8 * 1024 * 1024, 16 * 1024 * 1024)

    def build(single_buffer_weights: bool):
        # Grid-invariant weights/biases: fetched once; single-buffer them when
        # pl.Buffered(1) is available to halve their VMEM residency.
        spec_kwargs = ({"pipeline_mode": pl.Buffered(1)}
                       if single_buffer_weights else {})

        def const_spec(shape):
            return pl.BlockSpec(shape, lambda i: (0, 0), **spec_kwargs)

        wbuf = 1 if single_buffer_weights else 2
        need = (wbuf * (w_bytes + bias_bytes)
                + 2 * (x_tile_bytes + out_tile_bytes)
                + inter_bytes
                + 2 * 1024 * 1024)
        vmem_limit = int(min(max(need, 8 * 1024 * 1024), vmem_cap))

        return pl.pallas_call(
            err_mlp_kernel,
            out_shape=jax.ShapeDtypeStruct((b_pad, n_out), jnp.float32),
            grid=grid,
            in_specs=[
                pl.BlockSpec((bt, in_p), lambda i: (i, 0)),
                const_spec((in_p, e_p)),
                const_spec((1, e_p)),
                const_spec((e_p, e_p)),
                const_spec((1, e_p)),
                const_spec((e_p, n_out)),
                const_spec((1, n_out)),
            ],
            out_specs=pl.BlockSpec((bt, n_out), lambda i: (i, 0)),
            compiler_params=pltpu.CompilerParams(
                dimension_semantics=("parallel",),
                vmem_limit_bytes=vmem_limit,
            ),
            cost_estimate=pl.CostEstimate(
                flops=int(flops),
                transcendentals=0,
                bytes_accessed=int(bytes_accessed),
            ),
        )

    args = (x_p, prepared["w1"], prepared["b1"], prepared["w2"],
            prepared["b2"], prepared["w3"], prepared["b3"])
    try:
        out_padded = build(True)(*args)
    except Exception:
        # Fallback if pipeline_mode=pl.Buffered(1) is not supported by the
        # installed JAX/Mosaic; default double-buffering is still correct.
        out_padded = build(False)(*args)

    # Only the batch padding remains to strip; (b_pad, n_out) is tiny.
    return out_padded[:B] if b_pad != B else out_padded


def xavier_uniform(key, fan_in, fan_out, gain=1.0):
    # Matches torch.nn.init.xavier_uniform_ semantics; returned as (in, out).
    a = gain * math.sqrt(6.0 / (fan_in + fan_out))
    return jax.random.uniform(key, (fan_in, fan_out), jnp.float32, -a, a)


def init_err_params(key, num_inputs, z_dim, embed_dim, num_outputs):
    k1, k2, k3 = jax.random.split(key, 3)
    in_dim = num_inputs + z_dim
    return {
        "w1": xavier_uniform(k1, in_dim, embed_dim),
        "b1": jnp.zeros((1, embed_dim), jnp.float32),
        "w2": xavier_uniform(k2, embed_dim, embed_dim),
        "b2": jnp.zeros((1, embed_dim), jnp.float32),
        "w3": xavier_uniform(k3, embed_dim, num_outputs),
        "b3": jnp.zeros((1, num_outputs), jnp.float32),
    }


def err_forward_ref(x, p, compute_dtype=jnp.float32):
    # Pure-JAX reference; compute_dtype=bfloat16 emulates the kernel's
    # bf16-operand / f32-accumulate matmuls.
    def dot(a, w):
        return jnp.dot(a.astype(compute_dtype), w.astype(compute_dtype),
                       preferred_element_type=jnp.float32)

    h = jnp.maximum(dot(x, p["w1"]) + p["b1"], 0.0)
    h = jnp.maximum(dot(h, p["w2"]) + p["b2"], 0.0)
    return dot(h, p["w3"]) + p["b3"]


if __name__ == "__main__":
    # Shapes consistent with Err(num_inputs, z_dim, embed_dim, num_outputs).
    # Batch is deliberately ragged and large enough that the grid has two
    # "parallel" steps (bt=512 -> grid=(2,)) so the pipeline / megacore path
    # is exercised.
    num_inputs, z_dim, embed_dim, num_outputs = 24, 8, 32, 4
    batch = 1000

    key = jax.random.PRNGKey(0)
    kp, kx = jax.random.split(key)
    params = init_err_params(kp, num_inputs, z_dim, embed_dim, num_outputs)
    x = jax.random.normal(kx, (batch, num_inputs + z_dim), jnp.float32)

    prepared = prepare_err_params(params)          # pad + cast ONCE
    out = jax.block_until_ready(err_forward(x, prepared, batch_tile=512))
    assert out.shape == (batch, num_outputs)
    assert out.dtype == jnp.float32

    # Tight check vs. a reference emulating the kernel's bf16/f32-acc matmuls,
    # plus a looser sanity check vs. the pure-f32 reference.
    ref_bf16 = err_forward_ref(x, params, compute_dtype=jnp.bfloat16)
    ref_f32 = err_forward_ref(x, params, compute_dtype=jnp.float32)
    assert jnp.allclose(out, ref_bf16, atol=2e-3, rtol=2e-3)
    assert jnp.allclose(out, ref_f32, atol=5e-2, rtol=5e-2)

    # TODO(synk): Err.update() (Adam step, MSE backward, grad-norm clipping)
    # is a training procedure, not part of the forward kernel.
    print("KERNEL_OK")
</pallas_src>

<mosaic_0001>
module attributes {stable_mosaic.version = 11 : i64} {
  func.func @err_mlp_kernel(%arg0: i32, %arg1: memref<512x32xf32, #tpu.memory_space<vmem>>, %arg2: memref<32x128xbf16, #tpu.memory_space<vmem>>, %arg3: memref<1x128xf32, #tpu.memory_space<vmem>>, %arg4: memref<128x128xbf16, #tpu.memory_space<vmem>>, %arg5: memref<1x128xf32, #tpu.memory_space<vmem>>, %arg6: memref<128x4xbf16, #tpu.memory_space<vmem>>, %arg7: memref<1x4xf32, #tpu.memory_space<vmem>>, %arg8: memref<512x4xf32, #tpu.memory_space<vmem>>) attributes {dimension_semantics = [#tpu.dimension_semantics<parallel>], iteration_bounds = array<i64: 2>, scalar_prefetch = 0 : i64, scratch_operands = 0 : i64, tpu.core_type = #tpu.core_type<tc>, window_params = [{transform_indices = @transform_0, window_bounds = array<i64: 512, 32>}, {pipeline_mode = #tpu.pipeline_mode<synchronous>, transform_indices = @transform_1, window_bounds = array<i64: 32, 128>}, {pipeline_mode = #tpu.pipeline_mode<synchronous>, transform_indices = @transform_2, window_bounds = array<i64: 1, 128>}, {pipeline_mode = #tpu.pipeline_mode<synchronous>, transform_indices = @transform_3, window_bounds = array<i64: 128, 128>}, {pipeline_mode = #tpu.pipeline_mode<synchronous>, transform_indices = @transform_4, window_bounds = array<i64: 1, 128>}, {pipeline_mode = #tpu.pipeline_mode<synchronous>, transform_indices = @transform_5, window_bounds = array<i64: 128, 4>}, {pipeline_mode = #tpu.pipeline_mode<synchronous>, transform_indices = @transform_6, window_bounds = array<i64: 1, 4>}, {transform_indices = @transform_7, window_bounds = array<i64: 512, 4>}]} {
    %c0 = arith.constant 0 : index
    %c0_0 = arith.constant 0 : index
    %0 = vector.load %arg1[%c0, %c0_0] : memref<512x32xf32, #tpu.memory_space<vmem>>, vector<512x32xf32>
    %1 = arith.truncf %0 : vector<512x32xf32> to vector<512x32xbf16>
    %c0_1 = arith.constant 0 : index
    %c0_2 = arith.constant 0 : index
    %2 = vector.load %arg2[%c0_1, %c0_2] : memref<32x128xbf16, #tpu.memory_space<vmem>>, vector<32x128xbf16>
    %cst = arith.constant dense<0.000000e+00> : vector<512x128xf32>
    %3 = tpu.matmul %1, %2, %cst {dimension_numbers = #tpu.dot_dimension_numbers<[1], [0], [0], [1], [0, 0, 1, 1], [], []>} : vector<512x32xbf16>, vector<32x128xbf16>, vector<512x128xf32> -> vector<512x128xf32>
    %c0_3 = arith.constant 0 : index
    %c0_4 = arith.constant 0 : index
    %4 = vector.load %arg3[%c0_3, %c0_4] : memref<1x128xf32, #tpu.memory_space<vmem>>, vector<1x128xf32>
    %5 = vector.broadcast %4 : vector<1x128xf32> to vector<512x128xf32>
    %6 = arith.addf %3, %5 : vector<512x128xf32>
    %cst_5 = arith.constant 0.000000e+00 : f32
    %7 = vector.broadcast %cst_5 : f32 to vector<512x128xf32>
    %8 = arith.maximumf %6, %7 : vector<512x128xf32>
    %9 = arith.truncf %8 : vector<512x128xf32> to vector<512x128xbf16>
    %c0_6 = arith.constant 0 : index
    %c0_7 = arith.constant 0 : index
    %10 = vector.load %arg4[%c0_6, %c0_7] : memref<128x128xbf16, #tpu.memory_space<vmem>>, vector<128x128xbf16>
    %cst_8 = arith.constant dense<0.000000e+00> : vector<512x128xf32>
    %11 = tpu.matmul %9, %10, %cst_8 {dimension_numbers = #tpu.dot_dimension_numbers<[1], [0], [0], [1], [0, 0, 1, 1], [], []>} : vector<512x128xbf16>, vector<128x128xbf16>, vector<512x128xf32> -> vector<512x128xf32>
    %c0_9 = arith.constant 0 : index
    %c0_10 = arith.constant 0 : index
    %12 = vector.load %arg5[%c0_9, %c0_10] : memref<1x128xf32, #tpu.memory_space<vmem>>, vector<1x128xf32>
    %13 = vector.broadcast %12 : vector<1x128xf32> to vector<512x128xf32>
    %14 = arith.addf %11, %13 : vector<512x128xf32>
    %cst_11 = arith.constant 0.000000e+00 : f32
    %15 = vector.broadcast %cst_11 : f32 to vector<512x128xf32>
    %16 = arith.maximumf %14, %15 : vector<512x128xf32>
    %17 = arith.truncf %16 : vector<512x128xf32> to vector<512x128xbf16>
    %c0_12 = arith.constant 0 : index
    %c0_13 = arith.constant 0 : index
    %18 = vector.load %arg6[%c0_12, %c0_13] : memref<128x4xbf16, #tpu.memory_space<vmem>>, vector<128x4xbf16>
    %cst_14 = arith.constant dense<0.000000e+00> : vector<512x4xf32>
    %19 = tpu.matmul %17, %18, %cst_14 {dimension_numbers = #tpu.dot_dimension_numbers<[1], [0], [0], [1], [0, 0, 1, 1], [], []>} : vector<512x128xbf16>, vector<128x4xbf16>, vector<512x4xf32> -> vector<512x4xf32>
    %c0_15 = arith.constant 0 : index
    %c0_16 = arith.constant 0 : index
    %20 = vector.load %arg7[%c0_15, %c0_16] : memref<1x4xf32, #tpu.memory_space<vmem>>, vector<1x4xf32>
    %21 = vector.broadcast %20 : vector<1x4xf32> to vector<512x4xf32>
    %22 = arith.addf %19, %21 : vector<512x4xf32>
    %c0_17 = arith.constant 0 : index
    %c0_18 = arith.constant 0 : index
    %23 = vector.load %arg8[%c0_17, %c0_18] : memref<512x4xf32, #tpu.memory_space<vmem>>, vector<512x4xf32>
    tpu.vector_store %arg8[%c0_17, %c0_18], %22 {strides = array<i32>} : memref<512x4xf32, #tpu.memory_space<vmem>>, vector<512x4xf32>,
    return
  }
  func.func @transform_0(%arg0: i32) -> (i32, i32) {
    %c0_i32 = arith.constant 0 : i32
    %c0_i32_0 = arith.constant 0 : i32
    return %arg0, %c0_i32 : i32, i32
  }
  func.func @transform_1(%arg0: i32) -> (i32, i32) {
    %c0_i32 = arith.constant 0 : i32
    %c0_i32_0 = arith.constant 0 : i32
    %c0_i32_1 = arith.constant 0 : i32
    return %c0_i32, %c0_i32_0 : i32, i32
  }
  func.func @transform_2(%arg0: i32) -> (i32, i32) {
    %c0_i32 = arith.constant 0 : i32
    %c0_i32_0 = arith.constant 0 : i32
    %c0_i32_1 = arith.constant 0 : i32
    return %c0_i32, %c0_i32_0 : i32, i32
  }
  func.func @transform_3(%arg0: i32) -> (i32, i32) {
    %c0_i32 = arith.constant 0 : i32
    %c0_i32_0 = arith.constant 0 : i32
    %c0_i32_1 = arith.constant 0 : i32
    return %c0_i32, %c0_i32_0 : i32, i32
  }
  func.func @transform_4(%arg0: i32) -> (i32, i32) {
    %c0_i32 = arith.constant 0 : i32
    %c0_i32_0 = arith.constant 0 : i32
    %c0_i32_1 = arith.constant 0 : i32
    return %c0_i32, %c0_i32_0 : i32, i32
  }
  func.func @transform_5(%arg0: i32) -> (i32, i32) {
    %c0_i32 = arith.constant 0 : i32
    %c0_i32_0 = arith.constant 0 : i32
    %c0_i32_1 = arith.constant 0 : i32
    return %c0_i32, %c0_i32_0 : i32, i32
  }
  func.func @transform_6(%arg0: i32) -> (i32, i32) {
    %c0_i32 = arith.constant 0 : i32
    %c0_i32_0 = arith.constant 0 : i32
    %c0_i32_1 = arith.constant 0 : i32
    return %c0_i32, %c0_i32_0 : i32, i32
  }
  func.func @transform_7(%arg0: i32) -> (i32, i32) {
    %c0_i32 = arith.constant 0 : i32
    %c0_i32_0 = arith.constant 0 : i32
    return %arg0, %c0_i32 : i32, i32
  }
}

module attributes {stable_mosaic.version = 11 : i64} {
  func.func @err_mlp_kernel(%arg0: i32, %arg1: memref<512x32xf32, #tpu.memory_space<vmem>>, %arg2: memref<32x128xbf16, #tpu.memory_space<vmem>>, %arg3: memref<1x128xf32, #tpu.memory_space<vmem>>, %arg4: memref<128x128xbf16, #tpu.memory_space<vmem>>, %arg5: memref<1x128xf32, #tpu.memory_space<vmem>>, %arg6: memref<128x4xbf16, #tpu.memory_space<vmem>>, %arg7: memref<1x4xf32, #tpu.memory_space<vmem>>, %arg8: memref<512x4xf32, #tpu.memory_space<vmem>>) attributes {dimension_semantics = [#tpu.dimension_semantics<parallel>], iteration_bounds = array<i64: 2>, scalar_prefetch = 0 : i64, scratch_operands = 0 : i64, tpu.core_type = #tpu.core_type<tc>, window_params = [{transform_indices = @transform_0, window_bounds = array<i64: 512, 32>}, {pipeline_mode = #tpu.pipeline_mode<synchronous>, transform_indices = @transform_1, window_bounds = array<i64: 32, 128>}, {pipeline_mode = #tpu.pipeline_mode<synchronous>, transform_indices = @transform_2, window_bounds = array<i64: 1, 128>}, {pipeline_mode = #tpu.pipeline_mode<synchronous>, transform_indices = @transform_3, window_bounds = array<i64: 128, 128>}, {pipeline_mode = #tpu.pipeline_mode<synchronous>, transform_indices = @transform_4, window_bounds = array<i64: 1, 128>}, {pipeline_mode = #tpu.pipeline_mode<synchronous>, transform_indices = @transform_5, window_bounds = array<i64: 128, 4>}, {pipeline_mode = #tpu.pipeline_mode<synchronous>, transform_indices = @transform_6, window_bounds = array<i64: 1, 4>}, {transform_indices = @transform_7, window_bounds = array<i64: 512, 4>}]} {
    %c0 = arith.constant 0 : index
    %c0_0 = arith.constant 0 : index
    %0 = vector.load %arg1[%c0, %c0_0] : memref<512x32xf32, #tpu.memory_space<vmem>>, vector<512x32xf32>
    %1 = arith.truncf %0 : vector<512x32xf32> to vector<512x32xbf16>
    %c0_1 = arith.constant 0 : index
    %c0_2 = arith.constant 0 : index
    %2 = vector.load %arg2[%c0_1, %c0_2] : memref<32x128xbf16, #tpu.memory_space<vmem>>, vector<32x128xbf16>
    %cst = arith.constant dense<0.000000e+00> : vector<512x128xf32>
    %3 = tpu.matmul %1, %2, %cst {dimension_numbers = #tpu.dot_dimension_numbers<[1], [0], [0], [1], [0, 0, 1, 1], [], []>} : vector<512x32xbf16>, vector<32x128xbf16>, vector<512x128xf32> -> vector<512x128xf32>
    %c0_3 = arith.constant 0 : index
    %c0_4 = arith.constant 0 : index
    %4 = vector.load %arg3[%c0_3, %c0_4] : memref<1x128xf32, #tpu.memory_space<vmem>>, vector<1x128xf32>
    %5 = vector.broadcast %4 : vector<1x128xf32> to vector<512x128xf32>
    %6 = arith.addf %3, %5 : vector<512x128xf32>
    %cst_5 = arith.constant 0.000000e+00 : f32
    %7 = vector.broadcast %cst_5 : f32 to vector<512x128xf32>
    %8 = arith.maximumf %6, %7 : vector<512x128xf32>
    %9 = arith.truncf %8 : vector<512x128xf32> to vector<512x128xbf16>
    %c0_6 = arith.constant 0 : index
    %c0_7 = arith.constant 0 : index
    %10 = vector.load %arg4[%c0_6, %c0_7] : memref<128x128xbf16, #tpu.memory_space<vmem>>, vector<128x128xbf16>
    %cst_8 = arith.constant dense<0.000000e+00> : vector<512x128xf32>
    %11 = tpu.matmul %9, %10, %cst_8 {dimension_numbers = #tpu.dot_dimension_numbers<[1], [0], [0], [1], [0, 0, 1, 1], [], []>} : vector<512x128xbf16>, vector<128x128xbf16>, vector<512x128xf32> -> vector<512x128xf32>
    %c0_9 = arith.constant 0 : index
    %c0_10 = arith.constant 0 : index
    %12 = vector.load %arg5[%c0_9, %c0_10] : memref<1x128xf32, #tpu.memory_space<vmem>>, vector<1x128xf32>
    %13 = vector.broadcast %12 : vector<1x128xf32> to vector<512x128xf32>
    %14 = arith.addf %11, %13 : vector<512x128xf32>
    %cst_11 = arith.constant 0.000000e+00 : f32
    %15 = vector.broadcast %cst_11 : f32 to vector<512x128xf32>
    %16 = arith.maximumf %14, %15 : vector<512x128xf32>
    %17 = arith.truncf %16 : vector<512x128xf32> to vector<512x128xbf16>
    %c0_12 = arith.constant 0 : index
    %c0_13 = arith.constant 0 : index
    %18 = vector.load %arg6[%c0_12, %c0_13] : memref<128x4xbf16, #tpu.memory_space<vmem>>, vector<128x4xbf16>
    %cst_14 = arith.constant dense<0.000000e+00> : vector<512x4xf32>
    %19 = tpu.matmul %17, %18, %cst_14 {dimension_numbers = #tpu.dot_dimension_numbers<[1], [0], [0], [1], [0, 0, 1, 1], [], []>} : vector<512x128xbf16>, vector<128x4xbf16>, vector<512x4xf32> -> vector<512x4xf32>
    %c0_15 = arith.constant 0 : index
    %c0_16 = arith.constant 0 : index
    %20 = vector.load %arg7[%c0_15, %c0_16] : memref<1x4xf32, #tpu.memory_space<vmem>>, vector<1x4xf32>
    %21 = vector.broadcast %20 : vector<1x4xf32> to vector<512x4xf32>
    %22 = arith.addf %19, %21 : vector<512x4xf32>
    %c0_17 = arith.constant 0 : index
    %c0_18 = arith.constant 0 : index
    %23 = vector.load %arg8[%c0_17, %c0_18] : memref<512x4xf32, #tpu.memory_space<vmem>>, vector<512x4xf32>
    tpu.vector_store %arg8[%c0_17, %c0_18], %22 {strides = array<i32>} : memref<512x4xf32, #tpu.memory_space<vmem>>, vector<512x4xf32>,
    return
  }
  func.func @transform_0(%arg0: i32) -> (i32, i32) {
    %c0_i32 = arith.constant 0 : i32
    %c0_i32_0 = arith.constant 0 : i32
    return %arg0, %c0_i32 : i32, i32
  }
  func.func @transform_1(%arg0: i32) -> (i32, i32) {
    %c0_i32 = arith.constant 0 : i32
    %c0_i32_0 = arith.constant 0 : i32
    %c0_i32_1 = arith.constant 0 : i32
    return %c0_i32, %c0_i32_0 : i32, i32
  }
  func.func @transform_2(%arg0: i32) -> (i32, i32) {
    %c0_i32 = arith.constant 0 : i32
    %c0_i32_0 = arith.constant 0 : i32
    %c0_i32_1 = arith.constant 0 : i32
    return %c0_i32, %c0_i32_0 : i32, i32
  }
  func.func @transform_3(%arg0: i32) -> (i32, i32) {
    %c0_i32 = arith.constant 0 : i32
    %c0_i32_0 = arith.constant 0 : i32
    %c0_i32_1 = arith.constant 0 : i32
    return %c0_i32, %c0_i32_0 : i32, i32
  }
  func.func @transform_4(%arg0: i32) -> (i32, i32) {
    %c0_i32 = arith.constant 0 : i32
    %c0_i32_0 = arith.constant 0 : i32
    %c0_i32_1 = arith.constant 0 : i32
    return %c0_i32, %c0_i32_0 : i32, i32
  }
  func.func @transform_5(%arg0: i32) -> (i32, i32) {
    %c0_i32 = arith.constant 0 : i32
    %c0_i32_0 = arith.constant 0 : i32
    %c0_i32_1 = arith.constant 0 : i32
    return %c0_i32, %c0_i32_0 : i32, i32
  }
  func.func @transform_6(%arg0: i32) -> (i32, i32) {
    %c0_i32 = arith.constant 0 : i32
    %c0_i32_0 = arith.constant 0 : i32
    %c0_i32_1 = arith.constant 0 : i32
    return %c0_i32, %c0_i32_0 : i32, i32
  }
  func.func @transform_7(%arg0: i32) -> (i32, i32) {
    %c0_i32 = arith.constant 0 : i32
    %c0_i32_0 = arith.constant 0 : i32
    return %arg0, %c0_i32 : i32, i32
  }
}

</mosaic_0001>

<llo_original>
// kernel: tpu_custom_call.1
$region0: #{tpu_custom_call.1}
  #allocation0 [shape = 'u32[]', space=smem, size = 0x4, offset = 0x4, fixed_abs, tag = 'smem constant byte address 0x4 - core index']
  #allocation1 [shape = 'u32[144,128]{1,0:T(1,128)}', space=vmem, size = 0x12000, scoped, tag = 'internal scratch']
  %s0 = inlined_call_operand.vmem [shape: f32[1024,32], index: 0, kind: input, shape index: {}]
  %s1 = inlined_call_operand.vmem [shape: bf16[32,128], index: 1, kind: input, shape index: {}]
  %s2 = inlined_call_operand.vmem [shape: f32[1,128], index: 2, kind: input, shape index: {}]
  %s3 = inlined_call_operand.vmem [shape: bf16[128,128], index: 3, kind: input, shape index: {}]
  %s4 = inlined_call_operand.vmem [shape: f32[1,128], index: 4, kind: input, shape index: {}]
  %s5 = inlined_call_operand.vmem [shape: bf16[128,4], index: 5, kind: input, shape index: {}]
  %s6 = inlined_call_operand.vmem [shape: f32[1,4], index: 6, kind: input, shape index: {}]
  %s7 = inlined_call_operand.vmem [shape: f32[1024,4], index: 7, kind: output, shape index: {}]
  %s8 = sld [smem:[#allocation0]]
  $region61: #{tpu_custom_call.1} parent=0
    _
  %s10 = ssub.s32 1, %s8
  %s11 = scalar_select 0, %s10, %s8
  loop: start=0, step=1, limit=4
  $region2: #{tpu_custom_call.1} parent=0 // loop_pre_header
    _
  $region3: #{tpu_custom_call.1} parent=0 // loop_header
    %s13 = sphi 0, %s17
    %p14 = scmp.ge.s32.totalorder %s13, 4
    %s23 = sphi 0, %s25
    %s26 = sphi 0, %s23
    %s27 = sphi 0, %s26
    %s43 = sphi 0, %s27
    %s47 = sphi 0, %s47
    %s49 = sphi 0, %s47
    %s50 = sphi 0, %s49
    %s64 = sphi 0, %s50
    %s68 = sphi 0, %s68
    %s70 = sphi 0, %s68
    %s71 = sphi 0, %s70
    %s85 = sphi 0, %s71
    %s89 = sphi 0, %s89
    %s91 = sphi 0, %s89
    %s92 = sphi 0, %s91
    %s106 = sphi 0, %s92
    %s110 = sphi 0, %s110
    %s112 = sphi 0, %s110
    %s113 = sphi 0, %s112
    %s127 = sphi 0, %s113
    %s131 = sphi 0, %s131
    %s133 = sphi 0, %s131
    %s134 = sphi 0, %s133
    %s148 = sphi 0, %s134
    %s152 = sphi 0, %s152
    %s154 = sphi 0, %s152
    %s155 = sphi 0, %s154
    %s169 = sphi 0, %s155
    %s175 = sphi 0, %s177
    %s178 = sphi 0, %s175
    %s179 = sphi 0, %s178
    %s195 = sphi 0, %s179
  $region4: #{tpu_custom_call.1} parent=0 // loop_header_branch
    %16 = sbr.rel (%p14) target = $region8
  $region5: #{tpu_custom_call.1} parent=0 // loop_body
    %s18 = ssub.s32 %s13, 1
    %s19 = ssub.s32 %s13, 2
    %s20 = sadd.s32 %s13, 1
    %s21 = ssub.s32 %s13, %s20
    %p22 = scmp.eq.s32.totalorder %s21, 0
    %s24 = sadd.s32 %s23, 1
    %s25 = scalar_select %p22, %s23, %s24
    %p28 = pneg %p22
    %p29 = scmp.eq.s32.totalorder %s13, 1
    %p30 = por %p28, %p29
    %p31 = scmp.ne.s32.totalorder %s23, %s26
    %p32 = scmp.eq.s32.totalorder %s13, 0
    %p33 = por %p31, %p32
    %p34 = scmp.ne.s32.totalorder %s23, %s26
    %p35 = scmp.eq.s32.totalorder %s18, 1
    %p36 = por %p34, %p35
    %p37 = scmp.ne.s32.totalorder %s26, %s27
    %p38 = scmp.eq.s32.totalorder %s18, 0
    %p39 = por %p37, %p38
    %p40 = scmp.ne.s32.totalorder %s26, %s27
    %p41 = scmp.eq.s32.totalorder %s19, 1
    %p42 = por %p40, %p41
    %p44 = scmp.ne.s32.totalorder %s27, %s43
    %p45 = scmp.eq.s32.totalorder %s19, 0
    %p46 = por %p44, %p45
    %s48 = sadd.s32 %s47, 1
    %p51 = scmp.eq.s32.totalorder %s13, 1
    %p52 = scmp.ne.s32.totalorder %s47, %s49
    %p53 = scmp.eq.s32.totalorder %s13, 0
    %p54 = por %p52, %p53
    %p55 = scmp.ne.s32.totalorder %s47, %s49
    %p56 = scmp.eq.s32.totalorder %s18, 1
    %p57 = por %p55, %p56
    %p58 = scmp.ne.s32.totalorder %s49, %s50
    %p59 = scmp.eq.s32.totalorder %s18, 0
    %p60 = por %p58, %p59
    %p61 = scmp.ne.s32.totalorder %s49, %s50
    %p62 = scmp.eq.s32.totalorder %s19, 1
    %p63 = por %p61, %p62
    %p65 = scmp.ne.s32.totalorder %s50, %s64
    %p66 = scmp.eq.s32.totalorder %s19, 0
    %p67 = por %p65, %p66
    %s69 = sadd.s32 %s68, 1
    %p72 = scmp.eq.s32.totalorder %s13, 1
    %p73 = scmp.ne.s32.totalorder %s68, %s70
    %p74 = scmp.eq.s32.totalorder %s13, 0
    %p75 = por %p73, %p74
    %p76 = scmp.ne.s32.totalorder %s68, %s70
    %p77 = scmp.eq.s32.totalorder %s18, 1
    %p78 = por %p76, %p77
    %p79 = scmp.ne.s32.totalorder %s70, %s71
    %p80 = scmp.eq.s32.totalorder %s18, 0
    %p81 = por %p79, %p80
    %p82 = scmp.ne.s32.totalorder %s70, %s71
    %p83 = scmp.eq.s32.totalorder %s19, 1
    %p84 = por %p82, %p83
    %p86 = scmp.ne.s32.totalorder %s71, %s85
    %p87 = scmp.eq.s32.totalorder %s19, 0
    %p88 = por %p86, %p87
    %s90 = sadd.s32 %s89, 1
    %p93 = scmp.eq.s32.totalorder %s13, 1
    %p94 = scmp.ne.s32.totalorder %s89, %s91
    %p95 = scmp.eq.s32.totalorder %s13, 0
    %p96 = por %p94, %p95
    %p97 = scmp.ne.s32.totalorder %s89, %s91
    %p98 = scmp.eq.s32.totalorder %s18, 1
    %p99 = por %p97, %p98
    %p100 = scmp.ne.s32.totalorder %s91, %s92
    %p101 = scmp.eq.s32.totalorder %s18, 0
    %p102 = por %p100, %p101
    %p103 = scmp.ne.s32.totalorder %s91, %s92
    %p104 = scmp.eq.s32.totalorder %s19, 1
    %p105 = por %p103, %p104
    %p107 = scmp.ne.s32.totalorder %s92, %s106
    %p108 = scmp.eq.s32.totalorder %s19, 0
    %p109 = por %p107, %p108
    %s111 = sadd.s32 %s110, 1
    %p114 = scmp.eq.s32.totalorder %s13, 1
    %p115 = scmp.ne.s32.totalorder %s110, %s112
    %p116 = scmp.eq.s32.totalorder %s13, 0
    %p117 = por %p115, %p116
    %p118 = scmp.ne.s32.totalorder %s110, %s112
    %p119 = scmp.eq.s32.totalorder %s18, 1
    %p120 = por %p118, %p119
    %p121 = scmp.ne.s32.totalorder %s112, %s113
    %p122 = scmp.eq.s32.totalorder %s18, 0
    %p123 = por %p121, %p122
    %p124 = scmp.ne.s32.totalorder %s112, %s113
    %p125 = scmp.eq.s32.totalorder %s19, 1
    %p126 = por %p124, %p125
    %p128 = scmp.ne.s32.totalorder %s113, %s127
    %p129 = scmp.eq.s32.totalorder %s19, 0
    %p130 = por %p128, %p129
    %s132 = sadd.s32 %s131, 1
    %p135 = scmp.eq.s32.totalorder %s13, 1
    %p136 = scmp.ne.s32.totalorder %s131, %s133
    %p137 = scmp.eq.s32.totalorder %s13, 0
    %p138 = por %p136, %p137
    %p139 = scmp.ne.s32.totalorder %s131, %s133
    %p140 = scmp.eq.s32.totalorder %s18, 1
    %p141 = por %p139, %p140
    %p142 = scmp.ne.s32.totalorder %s133, %s134
    %p143 = scmp.eq.s32.totalorder %s18, 0
    %p144 = por %p142, %p143
    %p145 = scmp.ne.s32.totalorder %s133, %s134
    %p146 = scmp.eq.s32.totalorder %s19, 1
    %p147 = por %p145, %p146
    %p149 = scmp.ne.s32.totalorder %s134, %s148
    %p150 = scmp.eq.s32.totalorder %s19, 0
    %p151 = por %p149, %p150
    %s153 = sadd.s32 %s152, 1
    %p156 = scmp.eq.s32.totalorder %s13, 1
    %p157 = scmp.ne.s32.totalorder %s152, %s154
    %p158 = scmp.eq.s32.totalorder %s13, 0
    %p159 = por %p157, %p158
    %p160 = scmp.ne.s32.totalorder %s152, %s154
    %p161 = scmp.eq.s32.totalorder %s18, 1
    %p162 = por %p160, %p161
    %p163 = scmp.ne.s32.totalorder %s154, %s155
    %p164 = scmp.eq.s32.totalorder %s18, 0
    %p165 = por %p163, %p164
    %p166 = scmp.ne.s32.totalorder %s154, %s155
    %p167 = scmp.eq.s32.totalorder %s19, 1
    %p168 = por %p166, %p167
    %p170 = scmp.ne.s32.totalorder %s155, %s169
    %p171 = scmp.eq.s32.totalorder %s19, 0
    %p172 = por %p170, %p171
    %s173 = ssub.s32 %s13, %s20
    %p174 = scmp.eq.s32.totalorder %s173, 0
    %s176 = sadd.s32 %s175, 1
    %s177 = scalar_select %p174, %s175, %s176
    %p180 = pneg %p174
    %p181 = scmp.eq.s32.totalorder %s13, 1
    %p182 = por %p180, %p181
    %p183 = scmp.ne.s32.totalorder %s175, %s178
    %p184 = scmp.eq.s32.totalorder %s13, 0
    %p185 = por %p183, %p184
    %p186 = scmp.ne.s32.totalorder %s175, %s178
    %p187 = scmp.eq.s32.totalorder %s18, 1
    %p188 = por %p186, %p187
    %p189 = scmp.ne.s32.totalorder %s178, %s179
    %p190 = scmp.eq.s32.totalorder %s18, 0
    %p191 = por %p189, %p190
    %p192 = scmp.ne.s32.totalorder %s178, %s179
    %p193 = scmp.eq.s32.totalorder %s19, 1
    %p194 = por %p192, %p193
    %p196 = scmp.ne.s32.totalorder %s179, %s195
    %p197 = scmp.eq.s32.totalorder %s19, 0
    %p198 = por %p196, %p197
    %p199 = scmp.le.s32.totalorder 1, %s13
    %p200 = scmp.lt.s32.totalorder %s13, 3
    %p201 = pnand %p199, %p200
    %p202 = pneg %p201
    // Predicated region
    $region9: #{tpu_custom_call.1} parent=5 // pred_check
      _
    $region10: #{tpu_custom_call.1} parent=5 // pred_check_branch
      %204 = sbr.rel (%p201) target = $region12
    $region11: #{tpu_custom_call.1} parent=5 // pred_region
      %s205 = ssub.s32 %s13, 1
      // Predicated region
      $region13: #{tpu_custom_call.1} parent=11 // pred_check
        %p206 = pneg %p60
      $region14: #{tpu_custom_call.1} parent=11 // pred_check_branch
        %208 = sbr.rel (%p206) target = $region16
      $region15: #{tpu_custom_call.1} parent=11 // pred_region
        _
      $region16: #{tpu_custom_call.1} parent=11 // pred_fallthru
        _
      // Predicated region
      $region17: #{tpu_custom_call.1} parent=11 // pred_check
        %p209 = pneg %p81
      $region18: #{tpu_custom_call.1} parent=11 // pred_check_branch
        %211 = sbr.rel (%p209) target = $region20
      $region19: #{tpu_custom_call.1} parent=11 // pred_region
        _
      $region20: #{tpu_custom_call.1} parent=11 // pred_fallthru
        _
      // Predicated region
      $region21: #{tpu_custom_call.1} parent=11 // pred_check
        %p212 = pneg %p102
      $region22: #{tpu_custom_call.1} parent=11 // pred_check_branch
        %214 = sbr.rel (%p212) target = $region24
      $region23: #{tpu_custom_call.1} parent=11 // pred_region
        _
      $region24: #{tpu_custom_call.1} parent=11 // pred_fallthru
        _
      // Predicated region
      $region25: #{tpu_custom_call.1} parent=11 // pred_check
        %p215 = pneg %p123
      $region26: #{tpu_custom_call.1} parent=11 // pred_check_branch
        %217 = sbr.rel (%p215) target = $region28
      $region27: #{tpu_custom_call.1} parent=11 // pred_region
        _
      $region28: #{tpu_custom_call.1} parent=11 // pred_fallthru
        _
      // Predicated region
      $region29: #{tpu_custom_call.1} parent=11 // pred_check
        %p218 = pneg %p144
      $region30: #{tpu_custom_call.1} parent=11 // pred_check_branch
        %220 = sbr.rel (%p218) target = $region32
      $region31: #{tpu_custom_call.1} parent=11 // pred_region
        _
      $region32: #{tpu_custom_call.1} parent=11 // pred_fallthru
        _
      // Predicated region
      $region33: #{tpu_custom_call.1} parent=11 // pred_check
        %p221 = pneg %p165
      $region34: #{tpu_custom_call.1} parent=11 // pred_check_branch
        %223 = sbr.rel (%p221) target = $region36
      $region35: #{tpu_custom_call.1} parent=11 // pred_region
        _
      $region36: #{tpu_custom_call.1} parent=11 // pred_fallthru
        _
    $region12: #{tpu_custom_call.1} parent=5 // pred_fallthru
      _
    %p224 = scmp.lt.s32.totalorder %s13, 2
    // Predicated region
    $region37: #{tpu_custom_call.1} parent=5 // pred_check
      %p225 = pneg %p224
    $region38: #{tpu_custom_call.1} parent=5 // pred_check_branch
      %227 = sbr.rel (%p225) target = $region40
    $region39: #{tpu_custom_call.1} parent=5 // pred_region
      // Predicated region
      $region41: #{tpu_custom_call.1} parent=39 // pred_check
        %p228 = pneg %p33
      $region42: #{tpu_custom_call.1} parent=39 // pred_check_branch
        %230 = sbr.rel (%p228) target = $region44
      $region43: #{tpu_custom_call.1} parent=39 // pred_region
        %s231 = smul.u32 64, %s13
        %p232 = scmp.lt.s32.totalorder %s231, 127
        %s233 = scalar_select %p232, %s231, 127
        %s234 = smul.addr %s233, 8
        %s235 = scalar_lea.vmem %s0, %s234
        %s236 = smul.u32 64, %s13
      $region44: #{tpu_custom_call.1} parent=39 // pred_fallthru
        _
    $region40: #{tpu_custom_call.1} parent=5 // pred_fallthru
      _
    %p237 = scmp.le.s32.totalorder 1, %s13
    %p238 = scmp.lt.s32.totalorder %s13, 3
    %p239 = pnand %p237, %p238
    %p240 = pneg %p239
    // Predicated region
    $region45: #{tpu_custom_call.1} parent=5 // pred_check
      _
    $region46: #{tpu_custom_call.1} parent=5 // pred_check_branch
      %242 = sbr.rel (%p239) target = $region48
    $region47: #{tpu_custom_call.1} parent=5 // pred_region
      %s243 = ssub.s32 %s13, 1
      %s244 = smul.u32 64, %s18
      %p245 = scmp.lt.s32.totalorder %s244, 127
      %s246 = scalar_select %p245, %s244, 127
      %s247 = smul.addr %s246, 8
      %s248 = scalar_lea.vmem %s0, %s247
      %p249 = pneg %p39
      %p250 = pneg %p36
      %p251 = pneg %p60
      %p252 = pneg %p57
      %p253 = pneg %p81
      %p254 = pneg %p78
      %p255 = pneg %p102
      %p256 = pneg %p99
      %p257 = pneg %p123
      %p258 = pneg %p120
      %p259 = pneg %p144
      %p260 = pneg %p141
      %p261 = pneg %p165
      %p262 = pneg %p162
      %p263 = pneg %p191
      %p264 = pneg %p188
      %s265 = smul.u32 64, %s18
      %p266 = scmp.lt.s32.totalorder %s265, 127
      %s267 = scalar_select %p266, %s265, 127
      %s268 = smul.addr %s267, 8
      %s269 = scalar_lea.vmem %s7, %s268
      %s270 = smul.u32 64, %s18
      %p271 = scmp.lt.s32.totalorder %s270, 127
      %s272 = scalar_select %p271, %s270, 127
      %s273 = smul.addr %s272, 8
      %s274 = scalar_lea.vmem %s0, %s273
      %s275 = smul.u32 64, %s18
      %s276 = smul.u32 64, %s18
      %p277 = scmp.lt.s32.totalorder %s276, 127
      %s278 = scalar_select %p277, %s276, 127
      %s279 = smul.addr %s278, 8
      %s280 = scalar_lea.vmem %s7, %s279
      %s281 = smul.u32 64, %s18
      %v283 = vld [vmem:[%s274] sm:$0xff]
      %v284 = vld [vmem:[%s274 + $0x8] sm:$0xff]
      %v285 = vld [vmem:[%s274 + $0x10] sm:$0xff]
      %v286 = vld [vmem:[%s274 + $0x18] sm:$0xff]
      %v287 = vld [vmem:[%s274 + $0x20] sm:$0xff]
      %v288 = vld [vmem:[%s274 + $0x28] sm:$0xff]
      %v289 = vld [vmem:[%s274 + $0x30] sm:$0xff]
      %v290 = vld [vmem:[%s274 + $0x38] sm:$0xff]
      %v291 = vld [vmem:[%s274 + $0x40] sm:$0xff]
      %v292 = vld [vmem:[%s274 + $0x48] sm:$0xff]
      %v293 = vld [vmem:[%s274 + $0x50] sm:$0xff]
      %v294 = vld [vmem:[%s274 + $0x58] sm:$0xff]
      %v295 = vld [vmem:[%s274 + $0x60] sm:$0xff]
      %v296 = vld [vmem:[%s274 + $0x68] sm:$0xff]
      %v297 = vld [vmem:[%s274 + $0x70] sm:$0xff]
      %v298 = vld [vmem:[%s274 + $0x78] sm:$0xff]
      %v299 = vld [vmem:[%s274 + $0x80] sm:$0xff]
      %v300 = vld [vmem:[%s274 + $0x88] sm:$0xff]
      %v301 = vld [vmem:[%s274 + $0x90] sm:$0xff]
      %v302 = vld [vmem:[%s274 + $0x98] sm:$0xff]
      %v303 = vld [vmem:[%s274 + $0xa0] sm:$0xff]
      %v304 = vld [vmem:[%s274 + $0xa8] sm:$0xff]
      %v305 = vld [vmem:[%s274 + $0xb0] sm:$0xff]
      %v306 = vld [vmem:[%s274 + $0xb8] sm:$0xff]
      %v307 = vld [vmem:[%s274 + $0xc0] sm:$0xff]
      %v308 = vld [vmem:[%s274 + $0xc8] sm:$0xff]
      %v309 = vld [vmem:[%s274 + $0xd0] sm:$0xff]
      %v310 = vld [vmem:[%s274 + $0xd8] sm:$0xff]
      %v311 = vld [vmem:[%s274 + $0xe0] sm:$0xff]
      %v312 = vld [vmem:[%s274 + $0xe8] sm:$0xff]
      %v313 = vld [vmem:[%s274 + $0xf0] sm:$0xff]
      %v314 = vld [vmem:[%s274 + $0xf8] sm:$0xff]
      %v315 = vld [vmem:[%s274 + $0x100] sm:$0xff]
      %v316 = vld [vmem:[%s274 + $0x108] sm:$0xff]
      %v317 = vld [vmem:[%s274 + $0x110] sm:$0xff]
      %v318 = vld [vmem:[%s274 + $0x118] sm:$0xff]
      %v319 = vld [vmem:[%s274 + $0x120] sm:$0xff]
      %v320 = vld [vmem:[%s274 + $0x128] sm:$0xff]
      %v321 = vld [vmem:[%s274 + $0x130] sm:$0xff]
      %v322 = vld [vmem:[%s274 + $0x138] sm:$0xff]
      %v323 = vld [vmem:[%s274 + $0x140] sm:$0xff]
      %v324 = vld [vmem:[%s274 + $0x148] sm:$0xff]
      %v325 = vld [vmem:[%s274 + $0x150] sm:$0xff]
      %v326 = vld [vmem:[%s274 + $0x158] sm:$0xff]
      %v327 = vld [vmem:[%s274 + $0x160] sm:$0xff]
      %v328 = vld [vmem:[%s274 + $0x168] sm:$0xff]
      %v329 = vld [vmem:[%s274 + $0x170] sm:$0xff]
      %v330 = vld [vmem:[%s274 + $0x178] sm:$0xff]
      %v331 = vld [vmem:[%s274 + $0x180] sm:$0xff]
      %v332 = vld [vmem:[%s274 + $0x188] sm:$0xff]
      %v333 = vld [vmem:[%s274 + $0x190] sm:$0xff]
      %v334 = vld [vmem:[%s274 + $0x198] sm:$0xff]
      %v335 = vld [vmem:[%s274 + $0x1a0] sm:$0xff]
      %v336 = vld [vmem:[%s274 + $0x1a8] sm:$0xff]
      %v337 = vld [vmem:[%s274 + $0x1b0] sm:$0xff]
      %v338 = vld [vmem:[%s274 + $0x1b8] sm:$0xff]
      %v339 = vld [vmem:[%s274 + $0x1c0] sm:$0xff]
      %v340 = vld [vmem:[%s274 + $0x1c8] sm:$0xff]
      %v341 = vld [vmem:[%s274 + $0x1d0] sm:$0xff]
      %v342 = vld [vmem:[%s274 + $0x1d8] sm:$0xff]
      %v343 = vld [vmem:[%s274 + $0x1e0] sm:$0xff]
      %v344 = vld [vmem:[%s274 + $0x1e8] sm:$0xff]
      %v345 = vld [vmem:[%s274 + $0x1f0] sm:$0xff]
      %v346 = vld [vmem:[%s274 + $0x1f8] sm:$0xff]
      %v347 = vpack.c.bf16 %v284, %v283
      %v348 = vpack.c.bf16 %v286, %v285
      %v349 = vpack.c.bf16 %v288, %v287
      %v350 = vpack.c.bf16 %v290, %v289
      %v351 = vpack.c.bf16 %v292, %v291
      %v352 = vpack.c.bf16 %v294, %v293
      %v353 = vpack.c.bf16 %v296, %v295
      %v354 = vpack.c.bf16 %v298, %v297
      %v355 = vpack.c.bf16 %v300, %v299
      %v356 = vpack.c.bf16 %v302, %v301
      %v357 = vpack.c.bf16 %v304, %v303
      %v358 = vpack.c.bf16 %v306, %v305
      %v359 = vpack.c.bf16 %v308, %v307
      %v360 = vpack.c.bf16 %v310, %v309
      %v361 = vpack.c.bf16 %v312, %v311
      %v362 = vpack.c.bf16 %v314, %v313
      %v363 = vpack.c.bf16 %v316, %v315
      %v364 = vpack.c.bf16 %v318, %v317
      %v365 = vpack.c.bf16 %v320, %v319
      %v366 = vpack.c.bf16 %v322, %v321
      %v367 = vpack.c.bf16 %v324, %v323
      %v368 = vpack.c.bf16 %v326, %v325
      %v369 = vpack.c.bf16 %v328, %v327
      %v370 = vpack.c.bf16 %v330, %v329
      %v371 = vpack.c.bf16 %v332, %v331
      %v372 = vpack.c.bf16 %v334, %v333
      %v373 = vpack.c.bf16 %v336, %v335
      %v374 = vpack.c.bf16 %v338, %v337
      %v375 = vpack.c.bf16 %v340, %v339
      %v376 = vpack.c.bf16 %v342, %v341
      %v377 = vpack.c.bf16 %v344, %v343
      %v378 = vpack.c.bf16 %v346, %v345
      %v379 = vld [vmem:[%s1] sm:$0xf]
      %v380 = vld [vmem:[%s1 + $0x4] sm:$0xf]
      %v381 = vld [vmem:[%s1 + $0x8] sm:$0xf]
      %v382 = vld [vmem:[%s1 + $0xc] sm:$0xf]
      %v383 = vld [vmem:[%s2] sm:$0x1]
      %v385 = vlaneseq
      %v386 = vshrl.u32 %v385, 7
      %v387 = vsub.s32 0, %v386
      %v388 = vrot.slane %v383, %v387
      %v394 = vunpack.c.l.b16 %v379
      %v395 = vunpack.c.l.b16 %v380
      %v396 = vunpack.c.l.b16 %v381
      %v397 = vunpack.c.l.b16 %v382
      %v398 = vpack.c.b16 %v395, %v394
      %v399 = vpack.c.b16 %v397, %v396
      %vm402 = vcmask 261120
      %v404 = vsel %vm402, %v347, 0
      %v407 = vsel %vm402, %v348, 0
      %v410 = vsel %vm402, %v349, 0
      %v413 = vsel %vm402, %v350, 0
      %v416 = vsel %vm402, %v351, 0
      %v419 = vsel %vm402, %v352, 0
      %v422 = vsel %vm402, %v353, 0
      %v425 = vsel %vm402, %v354, 0
      %v428 = vsel %vm402, %v355, 0
      %v431 = vsel %vm402, %v356, 0
      %v434 = vsel %vm402, %v357, 0
      %v437 = vsel %vm402, %v358, 0
      %v440 = vsel %vm402, %v359, 0
      %v443 = vsel %vm402, %v360, 0
      %v446 = vsel %vm402, %v361, 0
      %v449 = vsel %vm402, %v362, 0
      %v452 = vsel %vm402, %v363, 0
      %v455 = vsel %vm402, %v364, 0
      %v458 = vsel %vm402, %v365, 0
      %v461 = vsel %vm402, %v366, 0
      %v464 = vsel %vm402, %v367, 0
      %v467 = vsel %vm402, %v368, 0
      %v470 = vsel %vm402, %v369, 0
      %v473 = vsel %vm402, %v370, 0
      %v476 = vsel %vm402, %v371, 0
      %v479 = vsel %vm402, %v372, 0
      %v482 = vsel %vm402, %v373, 0
      %v485 = vsel %vm402, %v374, 0
      %v488 = vsel %vm402, %v375, 0
      %v491 = vsel %vm402, %v376, 0
      %v494 = vsel %vm402, %v377, 0
      %v497 = vsel %vm402, %v378, 0
      %499 = vmatprep.subr.bf16.mxu0 0
      %500 = vmatpush1.bf16.msra.mxu0 0
      %501 = vmatprep.subr.bf16.mxu0 0
      %502 = vmatpush1.bf16.msra.mxu0 0
      %503 = vmatprep.subr.bf16.mxu0 0
      %504 = vmatpush1.bf16.msra.mxu0 0
      %505 = vmatprep.subr.bf16.mxu0 0
      %506 = vmatpush1.bf16.msra.mxu0 0
      %507 = vmatprep.subr.bf16.mxu0 0
      %508 = vmatpush1.bf16.msra.mxu0 0
      %509 = vmatprep.subr.bf16.mxu0 0
      %510 = vmatpush1.bf16.msra.mxu0 0
      %511 = vmatprep.subr.bf16.mxu0 0
      %512 = vmatpush1.bf16.msra.mxu0 %v399
      %513 = vmatprep.subr.bf16.mxu0 0
      %514 = vmatpush1.bf16.msra.mxu0 %v398
      %515 = vmatprep.subr.bf16.mxu0 0
      %516 = vmatpush2.bf16.msra.mxu0 0
      %517 = vmatprep.subr.bf16.mxu0 0
      %518 = vmatpush2.bf16.msra.mxu0 0
      %519 = vmatprep.subr.bf16.mxu0 0
      %520 = vmatpush2.bf16.msra.mxu0 0
      %521 = vmatprep.subr.bf16.mxu0 0
      %522 = vmatpush2.bf16.msra.mxu0 0
      %523 = vmatprep.subr.bf16.mxu0 0
      %524 = vmatpush2.bf16.msra.mxu0 0
      %525 = vmatprep.subr.bf16.mxu0 0
      %526 = vmatpush2.bf16.msra.mxu0 0
      %527 = vmatprep.subr.bf16.mxu0 0
      %528 = vmatpush2.bf16.msra.mxu0 0
      %529 = vmatprep.subr.bf16.mxu0 0
      %530 = vmatpush2.bf16.msra.mxu0 0
      %531 = vmatprep.mubr.bf16.mxu0 0
      %532 = vmatmul.mubr.bf16.gmra.mxu0 %v404
      %v533 = vpop.f32.mrf.mxu0
      %v534 = vadd.f32 %v388, %v533
      %v535 = vpop.f32.mrf.mxu0
      %v536 = vpop.f32.mrf.mxu0
      %v537 = vadd.f32 %v388, %v536
      %v538 = vpop.f32.mrf.mxu0
      %539 = vmatprep.mubr.bf16.mxu0 0
      %540 = vmatmul.mubr.bf16.gmra.mxu0 %v407
      %v541 = vpop.f32.mrf.mxu0
      %v542 = vadd.f32 %v388, %v541
      %v543 = vpop.f32.mrf.mxu0
      %v544 = vpop.f32.mrf.mxu0
      %v545 = vadd.f32 %v388, %v544
      %v546 = vpop.f32.mrf.mxu0
      %547 = vmatprep.mubr.bf16.mxu0 0
      %548 = vmatmul.mubr.bf16.gmra.mxu0 %v410
      %v549 = vpop.f32.mrf.mxu0
      %v550 = vadd.f32 %v388, %v549
      %v551 = vpop.f32.mrf.mxu0
      %v552 = vpop.f32.mrf.mxu0
      %v553 = vadd.f32 %v388, %v552
      %v554 = vpop.f32.mrf.mxu0
      %555 = vmatprep.mubr.bf16.mxu0 0
      %556 = vmatmul.mubr.bf16.gmra.mxu0 %v413
      %v557 = vpop.f32.mrf.mxu0
      %v558 = vadd.f32 %v388, %v557
      %v559 = vpop.f32.mrf.mxu0
      %v560 = vpop.f32.mrf.mxu0
      %v561 = vadd.f32 %v388, %v560
      %v562 = vpop.f32.mrf.mxu0
      %563 = vmatprep.mubr.bf16.mxu0 0
      %564 = vmatmul.mubr.bf16.gmra.mxu0 %v416
      %v565 = vpop.f32.mrf.mxu0
      %v566 = vadd.f32 %v388, %v565
      %v567 = vpop.f32.mrf.mxu0
      %v568 = vpop.f32.mrf.mxu0
      %v569 = vadd.f32 %v388, %v568
      %v570 = vpop.f32.mrf.mxu0
      %571 = vmatprep.mubr.bf16.mxu0 0
      %572 = vmatmul.mubr.bf16.gmra.mxu0 %v419
      %v573 = vpop.f32.mrf.mxu0
      %v574 = vadd.f32 %v388, %v573
      %v575 = vpop.f32.mrf.mxu0
      %v576 = vpop.f32.mrf.mxu0
      %v577 = vadd.f32 %v388, %v576
      %v578 = vpop.f32.mrf.mxu0
      %579 = vmatprep.mubr.bf16.mxu0 0
      %580 = vmatmul.mubr.bf16.gmra.mxu0 %v422
      %v581 = vpop.f32.mrf.mxu0
      %v582 = vadd.f32 %v388, %v581
      %v583 = vpop.f32.mrf.mxu0
      %v584 = vpop.f32.mrf.mxu0
      %v585 = vadd.f32 %v388, %v584
      %v586 = vpop.f32.mrf.mxu0
      %587 = vmatprep.mubr.bf16.mxu0 0
      %588 = vmatmul.mubr.bf16.gmra.mxu0 %v425
      %v589 = vpop.f32.mrf.mxu0
      %v590 = vadd.f32 %v388, %v589
      %v591 = vpop.f32.mrf.mxu0
      %v592 = vpop.f32.mrf.mxu0
      %v593 = vadd.f32 %v388, %v592
      %v594 = vpop.f32.mrf.mxu0
      %595 = vmatprep.mubr.bf16.mxu0 0
      %596 = vmatmul.mubr.bf16.gmra.mxu0 %v428
      %v597 = vpop.f32.mrf.mxu0
      %v598 = vadd.f32 %v388, %v597
      %v599 = vpop.f32.mrf.mxu0
      %v600 = vpop.f32.mrf.mxu0
      %v601 = vadd.f32 %v388, %v600
      %v602 = vpop.f32.mrf.mxu0
      %603 = vmatprep.mubr.bf16.mxu0 0
      %604 = vmatmul.mubr.bf16.gmra.mxu0 %v431
      %v605 = vpop.f32.mrf.mxu0
      %v606 = vadd.f32 %v388, %v605
      %v607 = vpop.f32.mrf.mxu0
      %v608 = vpop.f32.mrf.mxu0
      %v609 = vadd.f32 %v388, %v608
      %v610 = vpop.f32.mrf.mxu0
      %611 = vmatprep.mubr.bf16.mxu0 0
      %612 = vmatmul.mubr.bf16.gmra.mxu0 %v434
      %v613 = vpop.f32.mrf.mxu0
      %v614 = vadd.f32 %v388, %v613
      %v615 = vpop.f32.mrf.mxu0
      %v616 = vpop.f32.mrf.mxu0
      %v617 = vadd.f32 %v388, %v616
      %v618 = vpop.f32.mrf.mxu0
      %619 = vmatprep.mubr.bf16.mxu0 0
      %620 = vmatmul.mubr.bf16.gmra.mxu0 %v437
      %v621 = vpop.f32.mrf.mxu0
      %v622 = vadd.f32 %v388, %v621
      %v623 = vpop.f32.mrf.mxu0
      %v624 = vpop.f32.mrf.mxu0
      %v625 = vadd.f32 %v388, %v624
      %v626 = vpop.f32.mrf.mxu0
      %627 = vmatprep.mubr.bf16.mxu0 0
      %628 = vmatmul.mubr.bf16.gmra.mxu0 %v440
      %v629 = vpop.f32.mrf.mxu0
      %v630 = vadd.f32 %v388, %v629
      %v631 = vpop.f32.mrf.mxu0
      %v632 = vpop.f32.mrf.mxu0
      %v633 = vadd.f32 %v388, %v632
      %v634 = vpop.f32.mrf.mxu0
      %635 = vmatprep.mubr.bf16.mxu0 0
      %636 = vmatmul.mubr.bf16.gmra.mxu0 %v443
      %v637 = vpop.f32.mrf.mxu0
      %v638 = vadd.f32 %v388, %v637
      %v639 = vpop.f32.mrf.mxu0
      %v640 = vpop.f32.mrf.mxu0
      %v641 = vadd.f32 %v388, %v640
      %v642 = vpop.f32.mrf.mxu0
      %643 = vmatprep.mubr.bf16.mxu0 0
      %644 = vmatmul.mubr.bf16.gmra.mxu0 %v446
      %v645 = vpop.f32.mrf.mxu0
      %v646 = vadd.f32 %v388, %v645
      %v647 = vpop.f32.mrf.mxu0
      %v648 = vpop.f32.mrf.mxu0
      %v649 = vadd.f32 %v388, %v648
      %v650 = vpop.f32.mrf.mxu0
      %651 = vmatprep.mubr.bf16.mxu0 0
      %652 = vmatmul.mubr.bf16.gmra.mxu0 %v449
      %v653 = vpop.f32.mrf.mxu0
      %v654 = vadd.f32 %v388, %v653
      %v655 = vpop.f32.mrf.mxu0
      %v656 = vpop.f32.mrf.mxu0
      %v657 = vadd.f32 %v388, %v656
      %v658 = vpop.f32.mrf.mxu0
      %659 = vmatprep.mubr.bf16.mxu0 0
      %660 = vmatmul.mubr.bf16.gmra.mxu0 %v452
      %v661 = vpop.f32.mrf.mxu0
      %v662 = vadd.f32 %v388, %v661
      %v663 = vpop.f32.mrf.mxu0
      %v664 = vpop.f32.mrf.mxu0
      %v665 = vadd.f32 %v388, %v664
      %v666 = vpop.f32.mrf.mxu0
      %667 = vmatprep.mubr.bf16.mxu0 0
      %668 = vmatmul.mubr.bf16.gmra.mxu0 %v455
      %v669 = vpop.f32.mrf.mxu0
      %v670 = vadd.f32 %v388, %v669
      %v671 = vpop.f32.mrf.mxu0
      %v672 = vpop.f32.mrf.mxu0
      %v673 = vadd.f32 %v388, %v672
      %v674 = vpop.f32.mrf.mxu0
      %675 = vmatprep.mubr.bf16.mxu0 0
      %676 = vmatmul.mubr.bf16.gmra.mxu0 %v458
      %v677 = vpop.f32.mrf.mxu0
      %v678 = vadd.f32 %v388, %v677
      %v679 = vpop.f32.mrf.mxu0
      %v680 = vpop.f32.mrf.mxu0
      %v681 = vadd.f32 %v388, %v680
      %v682 = vpop.f32.mrf.mxu0
      %683 = vmatprep.mubr.bf16.mxu0 0
      %684 = vmatmul.mubr.bf16.gmra.mxu0 %v461
      %v685 = vpop.f32.mrf.mxu0
      %v686 = vadd.f32 %v388, %v685
      %v687 = vpop.f32.mrf.mxu0
      %v688 = vpop.f32.mrf.mxu0
      %v689 = vadd.f32 %v388, %v688
      %v690 = vpop.f32.mrf.mxu0
      %691 = vmatprep.mubr.bf16.mxu0 0
      %692 = vmatmul.mubr.bf16.gmra.mxu0 %v464
      %v693 = vpop.f32.mrf.mxu0
      %v694 = vadd.f32 %v388, %v693
      %v695 = vpop.f32.mrf.mxu0
      %v696 = vpop.f32.mrf.mxu0
      %v697 = vadd.f32 %v388, %v696
      %v698 = vpop.f32.mrf.mxu0
      %699 = vmatprep.mubr.bf16.mxu0 0
      %700 = vmatmul.mubr.bf16.gmra.mxu0 %v467
      %v701 = vpop.f32.mrf.mxu0
      %v702 = vadd.f32 %v388, %v701
      %v703 = vpop.f32.mrf.mxu0
      %v704 = vpop.f32.mrf.mxu0
      %v705 = vadd.f32 %v388, %v704
      %v706 = vpop.f32.mrf.mxu0
      %707 = vmatprep.mubr.bf16.mxu0 0
      %708 = vmatmul.mubr.bf16.gmra.mxu0 %v470
      %v709 = vpop.f32.mrf.mxu0
      %v710 = vadd.f32 %v388, %v709
      %v711 = vpop.f32.mrf.mxu0
      %v712 = vpop.f32.mrf.mxu0
      %v713 = vadd.f32 %v388, %v712
      %v714 = vpop.f32.mrf.mxu0
      %715 = vmatprep.mubr.bf16.mxu0 0
      %716 = vmatmul.mubr.bf16.gmra.mxu0 %v473
      %v717 = vpop.f32.mrf.mxu0
      %v718 = vadd.f32 %v388, %v717
      %v719 = vpop.f32.mrf.mxu0
      %v720 = vpop.f32.mrf.mxu0
      %v721 = vadd.f32 %v388, %v720
      %v722 = vpop.f32.mrf.mxu0
      %723 = vmatprep.mubr.bf16.mxu0 0
      %724 = vmatmul.mubr.bf16.gmra.mxu0 %v476
      %v725 = vpop.f32.mrf.mxu0
      %v726 = vadd.f32 %v388, %v725
      %v727 = vpop.f32.mrf.mxu0
      %v728 = vpop.f32.mrf.mxu0
      %v729 = vadd.f32 %v388, %v728
      %v730 = vpop.f32.mrf.mxu0
      %731 = vmatprep.mubr.bf16.mxu0 0
      %732 = vmatmul.mubr.bf16.gmra.mxu0 %v479
      %v733 = vpop.f32.mrf.mxu0
      %v734 = vadd.f32 %v388, %v733
      %v735 = vpop.f32.mrf.mxu0
      %v736 = vpop.f32.mrf.mxu0
      %v737 = vadd.f32 %v388, %v736
      %v738 = vpop.f32.mrf.mxu0
      %739 = vmatprep.mubr.bf16.mxu0 0
      %740 = vmatmul.mubr.bf16.gmra.mxu0 %v482
      %v741 = vpop.f32.mrf.mxu0
      %v742 = vadd.f32 %v388, %v741
      %v743 = vpop.f32.mrf.mxu0
      %v744 = vpop.f32.mrf.mxu0
      %v745 = vadd.f32 %v388, %v744
      %v746 = vpop.f32.mrf.mxu0
      %747 = vmatprep.mubr.bf16.mxu0 0
      %748 = vmatmul.mubr.bf16.gmra.mxu0 %v485
      %v749 = vpop.f32.mrf.mxu0
      %v750 = vadd.f32 %v388, %v749
      %v751 = vpop.f32.mrf.mxu0
      %v752 = vpop.f32.mrf.mxu0
      %v753 = vadd.f32 %v388, %v752
      %v754 = vpop.f32.mrf.mxu0
      %755 = vmatprep.mubr.bf16.mxu0 0
      %756 = vmatmul.mubr.bf16.gmra.mxu0 %v488
      %v757 = vpop.f32.mrf.mxu0
      %v758 = vadd.f32 %v388, %v757
      %v759 = vpop.f32.mrf.mxu0
      %v760 = vpop.f32.mrf.mxu0
      %v761 = vadd.f32 %v388, %v760
      %v762 = vpop.f32.mrf.mxu0
      %763 = vmatprep.mubr.bf16.mxu0 0
      %764 = vmatmul.mubr.bf16.gmra.mxu0 %v491
      %v765 = vpop.f32.mrf.mxu0
      %v766 = vadd.f32 %v388, %v765
      %v767 = vpop.f32.mrf.mxu0
      %v768 = vpop.f32.mrf.mxu0
      %v769 = vadd.f32 %v388, %v768
      %v770 = vpop.f32.mrf.mxu0
      %771 = vmatprep.mubr.bf16.mxu0 0
      %772 = vmatmul.mubr.bf16.gmra.mxu0 %v494
      %v773 = vpop.f32.mrf.mxu0
      %v774 = vadd.f32 %v388, %v773
      %v775 = vpop.f32.mrf.mxu0
      %v776 = vpop.f32.mrf.mxu0
      %v777 = vadd.f32 %v388, %v776
      %v778 = vpop.f32.mrf.mxu0
      %779 = vmatprep.mubr.bf16.mxu0 0
      %780 = vmatmul.mubr.bf16.gmra.mxu0 %v497
      %v781 = vpop.f32.mrf.mxu0
      %v782 = vadd.f32 %v388, %v781
      %v783 = vpop.f32.mrf.mxu0
      %v784 = vpop.f32.mrf.mxu0
      %v785 = vadd.f32 %v388, %v784
      %v786 = vpop.f32.mrf.mxu0
      %787 = vdwg.mxu0
      %v788 = vmax.f32 %v534, 0.0
      %v789 = vmax.f32 %v537, 0.0
      %v790 = vmax.f32 %v542, 0.0
      %v791 = vmax.f32 %v545, 0.0
      %v792 = vmax.f32 %v550, 0.0
      %v793 = vmax.f32 %v553, 0.0
      %v794 = vmax.f32 %v558, 0.0
      %v795 = vmax.f32 %v561, 0.0
      %v796 = vmax.f32 %v566, 0.0
      %v797 = vmax.f32 %v569, 0.0
      %v798 = vmax.f32 %v574, 0.0
      %v799 = vmax.f32 %v577, 0.0
      %v800 = vmax.f32 %v582, 0.0
      %v801 = vmax.f32 %v585, 0.0
      %v802 = vmax.f32 %v590, 0.0
      %v803 = vmax.f32 %v593, 0.0
      %v804 = vmax.f32 %v598, 0.0
      %v805 = vmax.f32 %v601, 0.0
      %v806 = vmax.f32 %v606, 0.0
      %v807 = vmax.f32 %v609, 0.0
      %v808 = vmax.f32 %v614, 0.0
      %v809 = vmax.f32 %v617, 0.0
      %v810 = vmax.f32 %v622, 0.0
      %v811 = vmax.f32 %v625, 0.0
      %v812 = vmax.f32 %v630, 0.0
      %v813 = vmax.f32 %v633, 0.0
      %v814 = vmax.f32 %v638, 0.0
      %v815 = vmax.f32 %v641, 0.0
      %v816 = vmax.f32 %v646, 0.0
      %v817 = vmax.f32 %v649, 0.0
      %v818 = vmax.f32 %v654, 0.0
      %v819 = vmax.f32 %v657, 0.0
      %v820 = vmax.f32 %v662, 0.0
      %v821 = vmax.f32 %v665, 0.0
      %v822 = vmax.f32 %v670, 0.0
      %v823 = vmax.f32 %v673, 0.0
      %v824 = vmax.f32 %v678, 0.0
      %v825 = vmax.f32 %v681, 0.0
      %v826 = vmax.f32 %v686, 0.0
      %v827 = vmax.f32 %v689, 0.0
      %v828 = vmax.f32 %v694, 0.0
      %v829 = vmax.f32 %v697, 0.0
      %v830 = vmax.f32 %v702, 0.0
      %v831 = vmax.f32 %v705, 0.0
      %v832 = vmax.f32 %v710, 0.0
      %v833 = vmax.f32 %v713, 0.0
      %v834 = vmax.f32 %v718, 0.0
      %v835 = vmax.f32 %v721, 0.0
      %v836 = vmax.f32 %v726, 0.0
      %v837 = vmax.f32 %v729, 0.0
      %v838 = vmax.f32 %v734, 0.0
      %v839 = vmax.f32 %v737, 0.0
      %v840 = vmax.f32 %v742, 0.0
      %v841 = vmax.f32 %v745, 0.0
      %v842 = vmax.f32 %v750, 0.0
      %v843 = vmax.f32 %v753, 0.0
      %v844 = vmax.f32 %v758, 0.0
      %v845 = vmax.f32 %v761, 0.0
      %v846 = vmax.f32 %v766, 0.0
      %v847 = vmax.f32 %v769, 0.0
      %v848 = vmax.f32 %v774, 0.0
      %v849 = vmax.f32 %v777, 0.0
      %v850 = vmax.f32 %v782, 0.0
      %v851 = vmax.f32 %v785, 0.0
      %v852 = vpack.c.bf16 %v789, %v788
      %v853 = vpack.c.bf16 %v791, %v790
      %v854 = vpack.c.bf16 %v793, %v792
      %v855 = vpack.c.bf16 %v795, %v794
      %v856 = vpack.c.bf16 %v797, %v796
      %v857 = vpack.c.bf16 %v799, %v798
      %v858 = vpack.c.bf16 %v801, %v800
      %v859 = vpack.c.bf16 %v803, %v802
      %v860 = vpack.c.bf16 %v805, %v804
      %v861 = vpack.c.bf16 %v807, %v806
      %v862 = vpack.c.bf16 %v809, %v808
      %v863 = vpack.c.bf16 %v811, %v810
      %v864 = vpack.c.bf16 %v813, %v812
      %v865 = vpack.c.bf16 %v815, %v814
      %v866 = vpack.c.bf16 %v817, %v816
      %v867 = vpack.c.bf16 %v819, %v818
      %v868 = vpack.c.bf16 %v821, %v820
      %v869 = vpack.c.bf16 %v823, %v822
      %v870 = vpack.c.bf16 %v825, %v824
      %v871 = vpack.c.bf16 %v827, %v826
      %v872 = vpack.c.bf16 %v829, %v828
      %v873 = vpack.c.bf16 %v831, %v830
      %v874 = vpack.c.bf16 %v833, %v832
      %v875 = vpack.c.bf16 %v835, %v834
      %v876 = vpack.c.bf16 %v837, %v836
      %v877 = vpack.c.bf16 %v839, %v838
      %v878 = vpack.c.bf16 %v841, %v840
      %v879 = vpack.c.bf16 %v843, %v842
      %v880 = vpack.c.bf16 %v845, %v844
      %v881 = vpack.c.bf16 %v847, %v846
      %v882 = vpack.c.bf16 %v849, %v848
      %v883 = vpack.c.bf16 %v851, %v850
      %v884 = vld [vmem:[%s3] sm:$0xf]
      %v885 = vld [vmem:[%s3 + $0x4] sm:$0xf]
      %v886 = vld [vmem:[%s3 + $0x8] sm:$0xf]
      %v887 = vld [vmem:[%s3 + $0xc] sm:$0xf]
      %v888 = vld [vmem:[%s3 + $0x10] sm:$0xf]
      %v889 = vld [vmem:[%s3 + $0x14] sm:$0xf]
      %v890 = vld [vmem:[%s3 + $0x18] sm:$0xf]
      %v891 = vld [vmem:[%s3 + $0x1c] sm:$0xf]
      %v892 = vld [vmem:[%s3 + $0x20] sm:$0xf]
      %v893 = vld [vmem:[%s3 + $0x24] sm:$0xf]
      %v894 = vld [vmem:[%s3 + $0x28] sm:$0xf]
      %v895 = vld [vmem:[%s3 + $0x2c] sm:$0xf]
      %v896 = vld [vmem:[%s3 + $0x30] sm:$0xf]
      %v897 = vld [vmem:[%s3 + $0x34] sm:$0xf]
      %v898 = vld [vmem:[%s3 + $0x38] sm:$0xf]
      %v899 = vld [vmem:[%s3 + $0x3c] sm:$0xf]
      %v900 = vld [vmem:[%s4] sm:$0x1]
      %v902 = vlaneseq
      %v903 = vshrl.u32 %v902, 7
      %v904 = vsub.s32 0, %v903
      %v905 = vrot.slane %v900, %v904
      %v923 = vunpack.c.l.b16 %v884
      %v924 = vunpack.c.l.b16 %v885
      %v925 = vunpack.c.l.b16 %v886
      %v926 = vunpack.c.l.b16 %v887
      %v927 = vunpack.c.l.b16 %v888
      %v928 = vunpack.c.l.b16 %v889
      %v929 = vunpack.c.l.b16 %v890
      %v930 = vunpack.c.l.b16 %v891
      %v931 = vunpack.c.l.b16 %v892
      %v932 = vunpack.c.l.b16 %v893
      %v933 = vunpack.c.l.b16 %v894
      %v934 = vunpack.c.l.b16 %v895
      %v935 = vunpack.c.l.b16 %v896
      %v936 = vunpack.c.l.b16 %v897
      %v937 = vunpack.c.l.b16 %v898
      %v938 = vunpack.c.l.b16 %v899
      %v939 = vpack.c.b16 %v924, %v923
      %v940 = vpack.c.b16 %v926, %v925
      %v941 = vpack.c.b16 %v928, %v927
      %v942 = vpack.c.b16 %v930, %v929
      %v943 = vpack.c.b16 %v932, %v931
      %v944 = vpack.c.b16 %v934, %v933
      %v945 = vpack.c.b16 %v936, %v935
      %v946 = vpack.c.b16 %v938, %v937
      %955 = vmatprep.subr.bf16.mxu0 0
      %956 = vmatpush1.bf16.msra.mxu0 %v946
      %957 = vmatprep.subr.bf16.mxu0 0
      %958 = vmatpush1.bf16.msra.mxu0 %v945
      %959 = vmatprep.subr.bf16.mxu0 0
      %960 = vmatpush1.bf16.msra.mxu0 %v944
      %961 = vmatprep.subr.bf16.mxu0 0
      %962 = vmatpush1.bf16.msra.mxu0 %v943
      %963 = vmatprep.subr.bf16.mxu0 0
      %964 = vmatpush1.bf16.msra.mxu0 %v942
      %965 = vmatprep.subr.bf16.mxu0 0
      %966 = vmatpush1.bf16.msra.mxu0 %v941
      %967 = vmatprep.subr.bf16.mxu0 0
      %968 = vmatpush1.bf16.msra.mxu0 %v940
      %969 = vmatprep.subr.bf16.mxu0 0
      %970 = vmatpush1.bf16.msra.mxu0 %v939
      %971 = vmatprep.subr.bf16.mxu0 0
      %972 = vmatpush2.bf16.msra.mxu0 0
      %973 = vmatprep.subr.bf16.mxu0 0
      %974 = vmatpush2.bf16.msra.mxu0 0
      %975 = vmatprep.subr.bf16.mxu0 0
      %976 = vmatpush2.bf16.msra.mxu0 0
      %977 = vmatprep.subr.bf16.mxu0 0
      %978 = vmatpush2.bf16.msra.mxu0 0
      %979 = vmatprep.subr.bf16.mxu0 0
      %980 = vmatpush2.bf16.msra.mxu0 0
      %981 = vmatprep.subr.bf16.mxu0 0
      %982 = vmatpush2.bf16.msra.mxu0 0
      %983 = vmatprep.subr.bf16.mxu0 0
      %984 = vmatpush2.bf16.msra.mxu0 0
      %985 = vmatprep.subr.bf16.mxu0 0
      %986 = vmatpush2.bf16.msra.mxu0 0
      %987 = vmatprep.mubr.bf16.mxu0 0
      %988 = vmatmul.mubr.bf16.gmra.mxu0 %v852
      %v989 = vpop.f32.mrf.mxu0
      %v990 = vadd.f32 %v905, %v989
      %v991 = vpop.f32.mrf.mxu0
      %v992 = vpop.f32.mrf.mxu0
      %v993 = vadd.f32 %v905, %v992
      %v994 = vpop.f32.mrf.mxu0
      %995 = vmatprep.mubr.bf16.mxu0 0
      %996 = vmatmul.mubr.bf16.gmra.mxu0 %v853
      %v997 = vpop.f32.mrf.mxu0
      %v998 = vadd.f32 %v905, %v997
      %v999 = vpop.f32.mrf.mxu0
      %v1000 = vpop.f32.mrf.mxu0
      %v1001 = vadd.f32 %v905, %v1000
      %v1002 = vpop.f32.mrf.mxu0
      %1003 = vmatprep.mubr.bf16.mxu0 0
      %1004 = vmatmul.mubr.bf16.gmra.mxu0 %v854
      %v1005 = vpop.f32.mrf.mxu0
      %v1006 = vadd.f32 %v905, %v1005
      %v1007 = vpop.f32.mrf.mxu0
      %v1008 = vpop.f32.mrf.mxu0
      %v1009 = vadd.f32 %v905, %v1008
      %v1010 = vpop.f32.mrf.mxu0
      %1011 = vmatprep.mubr.bf16.mxu0 0
      %1012 = vmatmul.mubr.bf16.gmra.mxu0 %v855
      %v1013 = vpop.f32.mrf.mxu0
      %v1014 = vadd.f32 %v905, %v1013
      %v1015 = vpop.f32.mrf.mxu0
      %v1016 = vpop.f32.mrf.mxu0
      %v1017 = vadd.f32 %v905, %v1016
      %v1018 = vpop.f32.mrf.mxu0
      %1019 = vmatprep.mubr.bf16.mxu0 0
      %1020 = vmatmul.mubr.bf16.gmra.mxu0 %v856
      %v1021 = vpop.f32.mrf.mxu0
      %v1022 = vadd.f32 %v905, %v1021
      %v1023 = vpop.f32.mrf.mxu0
      %v1024 = vpop.f32.mrf.mxu0
      %v1025 = vadd.f32 %v905, %v1024
      %v1026 = vpop.f32.mrf.mxu0
      %1027 = vmatprep.mubr.bf16.mxu0 0
      %1028 = vmatmul.mubr.bf16.gmra.mxu0 %v857
      %v1029 = vpop.f32.mrf.mxu0
      %v1030 = vadd.f32 %v905, %v1029
      %v1031 = vpop.f32.mrf.mxu0
      %v1032 = vpop.f32.mrf.mxu0
      %v1033 = vadd.f32 %v905, %v1032
      %v1034 = vpop.f32.mrf.mxu0
      %1035 = vmatprep.mubr.bf16.mxu0 0
      %1036 = vmatmul.mubr.bf16.gmra.mxu0 %v858
      %v1037 = vpop.f32.mrf.mxu0
      %v1038 = vadd.f32 %v905, %v1037
      %v1039 = vpop.f32.mrf.mxu0
      %v1040 = vpop.f32.mrf.mxu0
      %v1041 = vadd.f32 %v905, %v1040
      %v1042 = vpop.f32.mrf.mxu0
      %1043 = vmatprep.mubr.bf16.mxu0 0
      %1044 = vmatmul.mubr.bf16.gmra.mxu0 %v859
      %v1045 = vpop.f32.mrf.mxu0
      %v1046 = vadd.f32 %v905, %v1045
      %v1047 = vpop.f32.mrf.mxu0
      %v1048 = vpop.f32.mrf.mxu0
      %v1049 = vadd.f32 %v905, %v1048
      %v1050 = vpop.f32.mrf.mxu0
      %1051 = vmatprep.mubr.bf16.mxu0 0
      %1052 = vmatmul.mubr.bf16.gmra.mxu0 %v860
      %v1053 = vpop.f32.mrf.mxu0
      %v1054 = vadd.f32 %v905, %v1053
      %v1055 = vpop.f32.mrf.mxu0
      %v1056 = vpop.f32.mrf.mxu0
      %v1057 = vadd.f32 %v905, %v1056
      %v1058 = vpop.f32.mrf.mxu0
      %1059 = vmatprep.mubr.bf16.mxu0 0
      %1060 = vmatmul.mubr.bf16.gmra.mxu0 %v861
      %v1061 = vpop.f32.mrf.mxu0
      %v1062 = vadd.f32 %v905, %v1061
      %v1063 = vpop.f32.mrf.mxu0
      %v1064 = vpop.f32.mrf.mxu0
      %v1065 = vadd.f32 %v905, %v1064
      %v1066 = vpop.f32.mrf.mxu0
      %1067 = vmatprep.mubr.bf16.mxu0 0
      %1068 = vmatmul.mubr.bf16.gmra.mxu0 %v862
      %v1069 = vpop.f32.mrf.mxu0
      %v1070 = vadd.f32 %v905, %v1069
      %v1071 = vpop.f32.mrf.mxu0
      %v1072 = vpop.f32.mrf.mxu0
      %v1073 = vadd.f32 %v905, %v1072
      %v1074 = vpop.f32.mrf.mxu0
      %1075 = vmatprep.mubr.bf16.mxu0 0
      %1076 = vmatmul.mubr.bf16.gmra.mxu0 %v863
      %v1077 = vpop.f32.mrf.mxu0
      %v1078 = vadd.f32 %v905, %v1077
      %v1079 = vpop.f32.mrf.mxu0
      %v1080 = vpop.f32.mrf.mxu0
      %v1081 = vadd.f32 %v905, %v1080
      %v1082 = vpop.f32.mrf.mxu0
      %1083 = vmatprep.mubr.bf16.mxu0 0
      %1084 = vmatmul.mubr.bf16.gmra.mxu0 %v864
      %v1085 = vpop.f32.mrf.mxu0
      %v1086 = vadd.f32 %v905, %v1085
      %v1087 = vpop.f32.mrf.mxu0
      %v1088 = vpop.f32.mrf.mxu0
      %v1089 = vadd.f32 %v905, %v1088
      %v1090 = vpop.f32.mrf.mxu0
      %1091 = vmatprep.mubr.bf16.mxu0 0
      %1092 = vmatmul.mubr.bf16.gmra.mxu0 %v865
      %v1093 = vpop.f32.mrf.mxu0
      %v1094 = vadd.f32 %v905, %v1093
      %v1095 = vpop.f32.mrf.mxu0
      %v1096 = vpop.f32.mrf.mxu0
      %v1097 = vadd.f32 %v905, %v1096
      %v1098 = vpop.f32.mrf.mxu0
      %1099 = vmatprep.mubr.bf16.mxu0 0
      %1100 = vmatmul.mubr.bf16.gmra.mxu0 %v866
      %v1101 = vpop.f32.mrf.mxu0
      %v1102 = vadd.f32 %v905, %v1101
      %v1103 = vpop.f32.mrf.mxu0
      %v1104 = vpop.f32.mrf.mxu0
      %v1105 = vadd.f32 %v905, %v1104
      %v1106 = vpop.f32.mrf.mxu0
      %1107 = vmatprep.mubr.bf16.mxu0 0
      %1108 = vmatmul.mubr.bf16.gmra.mxu0 %v867
      %v1109 = vpop.f32.mrf.mxu0
      %v1110 = vadd.f32 %v905, %v1109
      %v1111 = vpop.f32.mrf.mxu0
      %v1112 = vpop.f32.mrf.mxu0
      %v1113 = vadd.f32 %v905, %v1112
      %v1114 = vpop.f32.mrf.mxu0
      %1115 = vmatprep.mubr.bf16.mxu0 0
      %1116 = vmatmul.mubr.bf16.gmra.mxu0 %v868
      %v1117 = vpop.f32.mrf.mxu0
      %v1118 = vadd.f32 %v905, %v1117
      %v1119 = vpop.f32.mrf.mxu0
      %v1120 = vpop.f32.mrf.mxu0
      %v1121 = vadd.f32 %v905, %v1120
      %v1122 = vpop.f32.mrf.mxu0
      %1123 = vmatprep.mubr.bf16.mxu0 0
      %1124 = vmatmul.mubr.bf16.gmra.mxu0 %v869
      %v1125 = vpop.f32.mrf.mxu0
      %v1126 = vadd.f32 %v905, %v1125
      %v1127 = vpop.f32.mrf.mxu0
      %v1128 = vpop.f32.mrf.mxu0
      %v1129 = vadd.f32 %v905, %v1128
      %v1130 = vpop.f32.mrf.mxu0
      %1131 = vmatprep.mubr.bf16.mxu0 0
      %1132 = vmatmul.mubr.bf16.gmra.mxu0 %v870
      %v1133 = vpop.f32.mrf.mxu0
      %v1134 = vadd.f32 %v905, %v1133
      %v1135 = vpop.f32.mrf.mxu0
      %v1136 = vpop.f32.mrf.mxu0
      %v1137 = vadd.f32 %v905, %v1136
      %v1138 = vpop.f32.mrf.mxu0
      %1139 = vmatprep.mubr.bf16.mxu0 0
      %1140 = vmatmul.mubr.bf16.gmra.mxu0 %v871
      %v1141 = vpop.f32.mrf.mxu0
      %v1142 = vadd.f32 %v905, %v1141
      %v1143 = vpop.f32.mrf.mxu0
      %v1144 = vpop.f32.mrf.mxu0
      %v1145 = vadd.f32 %v905, %v1144
      %v1146 = vpop.f32.mrf.mxu0
      %1147 = vmatprep.mubr.bf16.mxu0 0
      %1148 = vmatmul.mubr.bf16.gmra.mxu0 %v872
      %v1149 = vpop.f32.mrf.mxu0
      %v1150 = vadd.f32 %v905, %v1149
      %v1151 = vpop.f32.mrf.mxu0
      %v1152 = vpop.f32.mrf.mxu0
      %v1153 = vadd.f32 %v905, %v1152
      %v1154 = vpop.f32.mrf.mxu0
      %1155 = vmatprep.mubr.bf16.mxu0 0
      %1156 = vmatmul.mubr.bf16.gmra.mxu0 %v873
      %v1157 = vpop.f32.mrf.mxu0
      %v1158 = vadd.f32 %v905, %v1157
      %v1159 = vpop.f32.mrf.mxu0
      %v1160 = vpop.f32.mrf.mxu0
      %v1161 = vadd.f32 %v905, %v1160
      %v1162 = vpop.f32.mrf.mxu0
      %1163 = vmatprep.mubr.bf16.mxu0 0
      %1164 = vmatmul.mubr.bf16.gmra.mxu0 %v874
      %v1165 = vpop.f32.mrf.mxu0
      %v1166 = vadd.f32 %v905, %v1165
      %v1167 = vpop.f32.mrf.mxu0
      %v1168 = vpop.f32.mrf.mxu0
      %v1169 = vadd.f32 %v905, %v1168
      %v1170 = vpop.f32.mrf.mxu0
      %1171 = vmatprep.mubr.bf16.mxu0 0
      %1172 = vmatmul.mubr.bf16.gmra.mxu0 %v875
      %v1173 = vpop.f32.mrf.mxu0
      %v1174 = vadd.f32 %v905, %v1173
      %v1175 = vpop.f32.mrf.mxu0
      %v1176 = vpop.f32.mrf.mxu0
      %v1177 = vadd.f32 %v905, %v1176
      %v1178 = vpop.f32.mrf.mxu0
      %1179 = vmatprep.mubr.bf16.mxu0 0
      %1180 = vmatmul.mubr.bf16.gmra.mxu0 %v876
      %v1181 = vpop.f32.mrf.mxu0
      %v1182 = vadd.f32 %v905, %v1181
      %v1183 = vpop.f32.mrf.mxu0
      %v1184 = vpop.f32.mrf.mxu0
      %v1185 = vadd.f32 %v905, %v1184
      %v1186 = vpop.f32.mrf.mxu0
      %1187 = vmatprep.mubr.bf16.mxu0 0
      %1188 = vmatmul.mubr.bf16.gmra.mxu0 %v877
      %v1189 = vpop.f32.mrf.mxu0
      %v1190 = vadd.f32 %v905, %v1189
      %v1191 = vpop.f32.mrf.mxu0
      %v1192 = vpop.f32.mrf.mxu0
      %v1193 = vadd.f32 %v905, %v1192
      %v1194 = vpop.f32.mrf.mxu0
      %1195 = vmatprep.mubr.bf16.mxu0 0
      %1196 = vmatmul.mubr.bf16.gmra.mxu0 %v878
      %v1197 = vpop.f32.mrf.mxu0
      %v1198 = vadd.f32 %v905, %v1197
      %v1199 = vpop.f32.mrf.mxu0
      %v1200 = vpop.f32.mrf.mxu0
      %v1201 = vadd.f32 %v905, %v1200
      %v1202 = vpop.f32.mrf.mxu0
      %1203 = vmatprep.mubr.bf16.mxu0 0
      %1204 = vmatmul.mubr.bf16.gmra.mxu0 %v879
      %v1205 = vpop.f32.mrf.mxu0
      %v1206 = vadd.f32 %v905, %v1205
      %v1207 = vpop.f32.mrf.mxu0
      %v1208 = vpop.f32.mrf.mxu0
      %v1209 = vadd.f32 %v905, %v1208
      %v1210 = vpop.f32.mrf.mxu0
      %1211 = vmatprep.mubr.bf16.mxu0 0
      %1212 = vmatmul.mubr.bf16.gmra.mxu0 %v880
      %v1213 = vpop.f32.mrf.mxu0
      %v1214 = vadd.f32 %v905, %v1213
      %v1215 = vpop.f32.mrf.mxu0
      %v1216 = vpop.f32.mrf.mxu0
      %v1217 = vadd.f32 %v905, %v1216
      %v1218 = vpop.f32.mrf.mxu0
      %1219 = vmatprep.mubr.bf16.mxu0 0
      %1220 = vmatmul.mubr.bf16.gmra.mxu0 %v881
      %v1221 = vpop.f32.mrf.mxu0
      %v1222 = vadd.f32 %v905, %v1221
      %v1223 = vpop.f32.mrf.mxu0
      %v1224 = vpop.f32.mrf.mxu0
      %v1225 = vadd.f32 %v905, %v1224
      %v1226 = vpop.f32.mrf.mxu0
      %1227 = vmatprep.mubr.bf16.mxu0 0
      %1228 = vmatmul.mubr.bf16.gmra.mxu0 %v882
      %v1229 = vpop.f32.mrf.mxu0
      %v1230 = vadd.f32 %v905, %v1229
      %v1231 = vpop.f32.mrf.mxu0
      %v1232 = vpop.f32.mrf.mxu0
      %v1233 = vadd.f32 %v905, %v1232
      %v1234 = vpop.f32.mrf.mxu0
      %1235 = vmatprep.mubr.bf16.mxu0 0
      %1236 = vmatmul.mubr.bf16.gmra.mxu0 %v883
      %v1237 = vpop.f32.mrf.mxu0
      %v1238 = vadd.f32 %v905, %v1237
      %v1239 = vpop.f32.mrf.mxu0
      %v1240 = vpop.f32.mrf.mxu0
      %v1241 = vadd.f32 %v905, %v1240
      %v1242 = vpop.f32.mrf.mxu0
      %1243 = vdwg.mxu0
      %v1244 = vmax.f32 %v990, 0.0
      %v1245 = vmax.f32 %v993, 0.0
      %v1246 = vmax.f32 %v998, 0.0
      %v1247 = vmax.f32 %v1001, 0.0
      %v1248 = vmax.f32 %v1006, 0.0
      %v1249 = vmax.f32 %v1009, 0.0
      %v1250 = vmax.f32 %v1014, 0.0
      %v1251 = vmax.f32 %v1017, 0.0
      %v1252 = vmax.f32 %v1022, 0.0
      %v1253 = vmax.f32 %v1025, 0.0
      %v1254 = vmax.f32 %v1030, 0.0
      %v1255 = vmax.f32 %v1033, 0.0
      %v1256 = vmax.f32 %v1038, 0.0
      %v1257 = vmax.f32 %v1041, 0.0
      %v1258 = vmax.f32 %v1046, 0.0
      %v1259 = vmax.f32 %v1049, 0.0
      %v1260 = vmax.f32 %v1054, 0.0
      %v1261 = vmax.f32 %v1057, 0.0
      %v1262 = vmax.f32 %v1062, 0.0
      %v1263 = vmax.f32 %v1065, 0.0
      %v1264 = vmax.f32 %v1070, 0.0
      %v1265 = vmax.f32 %v1073, 0.0
      %v1266 = vmax.f32 %v1078, 0.0
      %v1267 = vmax.f32 %v1081, 0.0
      %v1268 = vmax.f32 %v1086, 0.0
      %v1269 = vmax.f32 %v1089, 0.0
      %v1270 = vmax.f32 %v1094, 0.0
      %v1271 = vmax.f32 %v1097, 0.0
      %v1272 = vmax.f32 %v1102, 0.0
      %v1273 = vmax.f32 %v1105, 0.0
      %v1274 = vmax.f32 %v1110, 0.0
      %v1275 = vmax.f32 %v1113, 0.0
      %v1276 = vmax.f32 %v1118, 0.0
      %v1277 = vmax.f32 %v1121, 0.0
      %v1278 = vmax.f32 %v1126, 0.0
      %v1279 = vmax.f32 %v1129, 0.0
      %v1280 = vmax.f32 %v1134, 0.0
      %v1281 = vmax.f32 %v1137, 0.0
      %v1282 = vmax.f32 %v1142, 0.0
      %v1283 = vmax.f32 %v1145, 0.0
      %v1284 = vmax.f32 %v1150, 0.0
      %v1285 = vmax.f32 %v1153, 0.0
      %v1286 = vmax.f32 %v1158, 0.0
      %v1287 = vmax.f32 %v1161, 0.0
      %v1288 = vmax.f32 %v1166, 0.0
      %v1289 = vmax.f32 %v1169, 0.0
      %v1290 = vmax.f32 %v1174, 0.0
      %v1291 = vmax.f32 %v1177, 0.0
      %v1292 = vmax.f32 %v1182, 0.0
      %v1293 = vmax.f32 %v1185, 0.0
      %v1294 = vmax.f32 %v1190, 0.0
      %v1295 = vmax.f32 %v1193, 0.0
      %v1296 = vmax.f32 %v1198, 0.0
      %v1297 = vmax.f32 %v1201, 0.0
      %v1298 = vmax.f32 %v1206, 0.0
      %v1299 = vmax.f32 %v1209, 0.0
      %v1300 = vmax.f32 %v1214, 0.0
      %v1301 = vmax.f32 %v1217, 0.0
      %v1302 = vmax.f32 %v1222, 0.0
      %v1303 = vmax.f32 %v1225, 0.0
      %v1304 = vmax.f32 %v1230, 0.0
      %v1305 = vmax.f32 %v1233, 0.0
      %v1306 = vmax.f32 %v1238, 0.0
      %v1307 = vmax.f32 %v1241, 0.0
      %v1308 = vpack.c.bf16 %v1245, %v1244
      %v1309 = vpack.c.bf16 %v1247, %v1246
      %v1310 = vpack.c.bf16 %v1249, %v1248
      %v1311 = vpack.c.bf16 %v1251, %v1250
      %v1312 = vpack.c.bf16 %v1253, %v1252
      %v1313 = vpack.c.bf16 %v1255, %v1254
      %v1314 = vpack.c.bf16 %v1257, %v1256
      %v1315 = vpack.c.bf16 %v1259, %v1258
      %v1316 = vpack.c.bf16 %v1261, %v1260
      %v1317 = vpack.c.bf16 %v1263, %v1262
      %v1318 = vpack.c.bf16 %v1265, %v1264
      %v1319 = vpack.c.bf16 %v1267, %v1266
      %v1320 = vpack.c.bf16 %v1269, %v1268
      %v1321 = vpack.c.bf16 %v1271, %v1270
      %v1322 = vpack.c.bf16 %v1273, %v1272
      %v1323 = vpack.c.bf16 %v1275, %v1274
      %v1324 = vpack.c.bf16 %v1277, %v1276
      %v1325 = vpack.c.bf16 %v1279, %v1278
      %v1326 = vpack.c.bf16 %v1281, %v1280
      %v1327 = vpack.c.bf16 %v1283, %v1282
      %v1328 = vpack.c.bf16 %v1285, %v1284
      %v1329 = vpack.c.bf16 %v1287, %v1286
      %v1330 = vpack.c.bf16 %v1289, %v1288
      %v1331 = vpack.c.bf16 %v1291, %v1290
      %v1332 = vpack.c.bf16 %v1293, %v1292
      %v1333 = vpack.c.bf16 %v1295, %v1294
      %v1334 = vpack.c.bf16 %v1297, %v1296
      %v1335 = vpack.c.bf16 %v1299, %v1298
      %v1336 = vpack.c.bf16 %v1301, %v1300
      %v1337 = vpack.c.bf16 %v1303, %v1302
      %v1338 = vpack.c.bf16 %v1305, %v1304
      %v1339 = vpack.c.bf16 %v1307, %v1306
      %v1340 = vld [vmem:[%s5] sm:$0xf]
      %v1341 = vld [vmem:[%s5 + $0x4] sm:$0xf]
      %v1342 = vld [vmem:[%s5 + $0x8] sm:$0xf]
      %v1343 = vld [vmem:[%s5 + $0xc] sm:$0xf]
      %v1344 = vld [vmem:[%s5 + $0x10] sm:$0xf]
      %v1345 = vld [vmem:[%s5 + $0x14] sm:$0xf]
      %v1346 = vld [vmem:[%s5 + $0x18] sm:$0xf]
      %v1347 = vld [vmem:[%s5 + $0x1c] sm:$0xf]
      %v1348 = vld [vmem:[%s5 + $0x20] sm:$0xf]
      %v1349 = vld [vmem:[%s5 + $0x24] sm:$0xf]
      %v1350 = vld [vmem:[%s5 + $0x28] sm:$0xf]
      %v1351 = vld [vmem:[%s5 + $0x2c] sm:$0xf]
      %v1352 = vld [vmem:[%s5 + $0x30] sm:$0xf]
      %v1353 = vld [vmem:[%s5 + $0x34] sm:$0xf]
      %v1354 = vld [vmem:[%s5 + $0x38] sm:$0xf]
      %v1355 = vld [vmem:[%s5 + $0x3c] sm:$0xf]
      %v1356 = vld [vmem:[%s6] sm:$0x1]
      %v1358 = vlaneseq
      %v1359 = vshrl.u32 %v1358, 7
      %v1360 = vsub.s32 0, %v1359
      %v1361 = vrot.slane %v1356, %v1360
      %v1379 = vunpack.c.l.b16 %v1340
      %v1380 = vunpack.c.l.b16 %v1341
      %v1381 = vunpack.c.l.b16 %v1342
      %v1382 = vunpack.c.l.b16 %v1343
      %v1383 = vunpack.c.l.b16 %v1344
      %v1384 = vunpack.c.l.b16 %v1345
      %v1385 = vunpack.c.l.b16 %v1346
      %v1386 = vunpack.c.l.b16 %v1347
      %v1387 = vunpack.c.l.b16 %v1348
      %v1388 = vunpack.c.l.b16 %v1349
      %v1389 = vunpack.c.l.b16 %v1350
      %v1390 = vunpack.c.l.b16 %v1351
      %v1391 = vunpack.c.l.b16 %v1352
      %v1392 = vunpack.c.l.b16 %v1353
      %v1393 = vunpack.c.l.b16 %v1354
      %v1394 = vunpack.c.l.b16 %v1355
      %v1395 = vpack.c.b16 %v1380, %v1379
      %v1396 = vpack.c.b16 %v1382, %v1381
      %v1397 = vpack.c.b16 %v1384, %v1383
      %v1398 = vpack.c.b16 %v1386, %v1385
      %v1399 = vpack.c.b16 %v1388, %v1387
      %v1400 = vpack.c.b16 %v1390, %v1389
      %v1401 = vpack.c.b16 %v1392, %v1391
      %v1402 = vpack.c.b16 %v1394, %v1393
      %1411 = vmatprep.subr.bf16.mxu0 0
      %1412 = vmatpush1.bf16.msra.mxu0 %v1402
      %1413 = vmatprep.subr.bf16.mxu0 0
      %1414 = vmatpush1.bf16.msra.mxu0 %v1401
      %1415 = vmatprep.subr.bf16.mxu0 0
      %1416 = vmatpush1.bf16.msra.mxu0 %v1400
      %1417 = vmatprep.subr.bf16.mxu0 0
      %1418 = vmatpush1.bf16.msra.mxu0 %v1399
      %1419 = vmatprep.subr.bf16.mxu0 0
      %1420 = vmatpush1.bf16.msra.mxu0 %v1398
      %1421 = vmatprep.subr.bf16.mxu0 0
      %1422 = vmatpush1.bf16.msra.mxu0 %v1397
      %1423 = vmatprep.subr.bf16.mxu0 0
      %1424 = vmatpush1.bf16.msra.mxu0 %v1396
      %1425 = vmatprep.subr.bf16.mxu0 0
      %1426 = vmatpush1.bf16.msra.mxu0 %v1395
      %1427 = vmatprep.subr.bf16.mxu0 0
      %1428 = vmatpush2.bf16.msra.mxu0 0
      %1429 = vmatprep.subr.bf16.mxu0 0
      %1430 = vmatpush2.bf16.msra.mxu0 0
      %1431 = vmatprep.subr.bf16.mxu0 0
      %1432 = vmatpush2.bf16.msra.mxu0 0
      %1433 = vmatprep.subr.bf16.mxu0 0
      %1434 = vmatpush2.bf16.msra.mxu0 0
      %1435 = vmatprep.subr.bf16.mxu0 0
      %1436 = vmatpush2.bf16.msra.mxu0 0
      %1437 = vmatprep.subr.bf16.mxu0 0
      %1438 = vmatpush2.bf16.msra.mxu0 0
      %1439 = vmatprep.subr.bf16.mxu0 0
      %1440 = vmatpush2.bf16.msra.mxu0 0
      %1441 = vmatprep.subr.bf16.mxu0 0
      %1442 = vmatpush2.bf16.msra.mxu0 0
      %1443 = vmatprep.mubr.bf16.mxu0 0
      %1444 = vmatmul.mubr.bf16.gmra.mxu0 %v1308
      %v1445 = vpop.f32.mrf.mxu0
      %v1446 = vadd.f32 %v1361, %v1445
      %v1447 = vpop.f32.mrf.mxu0
      %v1448 = vpop.f32.mrf.mxu0
      %v1449 = vadd.f32 %v1361, %v1448
      %v1450 = vpop.f32.mrf.mxu0
      %1451 = vmatprep.mubr.bf16.mxu0 0
      %1452 = vmatmul.mubr.bf16.gmra.mxu0 %v1309
      %v1453 = vpop.f32.mrf.mxu0
      %v1454 = vadd.f32 %v1361, %v1453
      %v1455 = vpop.f32.mrf.mxu0
      %v1456 = vpop.f32.mrf.mxu0
      %v1457 = vadd.f32 %v1361, %v1456
      %v1458 = vpop.f32.mrf.mxu0
      %1459 = vmatprep.mubr.bf16.mxu0 0
      %1460 = vmatmul.mubr.bf16.gmra.mxu0 %v1310
      %v1461 = vpop.f32.mrf.mxu0
      %v1462 = vadd.f32 %v1361, %v1461
      %v1463 = vpop.f32.mrf.mxu0
      %v1464 = vpop.f32.mrf.mxu0
      %v1465 = vadd.f32 %v1361, %v1464
      %v1466 = vpop.f32.mrf.mxu0
      %1467 = vmatprep.mubr.bf16.mxu0 0
      %1468 = vmatmul.mubr.bf16.gmra.mxu0 %v1311
      %v1469 = vpop.f32.mrf.mxu0
      %v1470 = vadd.f32 %v1361, %v1469
      %v1471 = vpop.f32.mrf.mxu0
      %v1472 = vpop.f32.mrf.mxu0
      %v1473 = vadd.f32 %v1361, %v1472
      %v1474 = vpop.f32.mrf.mxu0
      %1475 = vmatprep.mubr.bf16.mxu0 0
      %1476 = vmatmul.mubr.bf16.gmra.mxu0 %v1312
      %v1477 = vpop.f32.mrf.mxu0
      %v1478 = vadd.f32 %v1361, %v1477
      %v1479 = vpop.f32.mrf.mxu0
      %v1480 = vpop.f32.mrf.mxu0
      %v1481 = vadd.f32 %v1361, %v1480
      %v1482 = vpop.f32.mrf.mxu0
      %1483 = vmatprep.mubr.bf16.mxu0 0
      %1484 = vmatmul.mubr.bf16.gmra.mxu0 %v1313
      %v1485 = vpop.f32.mrf.mxu0
      %v1486 = vadd.f32 %v1361, %v1485
      %v1487 = vpop.f32.mrf.mxu0
      %v1488 = vpop.f32.mrf.mxu0
      %v1489 = vadd.f32 %v1361, %v1488
      %v1490 = vpop.f32.mrf.mxu0
      %1491 = vmatprep.mubr.bf16.mxu0 0
      %1492 = vmatmul.mubr.bf16.gmra.mxu0 %v1314
      %v1493 = vpop.f32.mrf.mxu0
      %v1494 = vadd.f32 %v1361, %v1493
      %v1495 = vpop.f32.mrf.mxu0
      %v1496 = vpop.f32.mrf.mxu0
      %v1497 = vadd.f32 %v1361, %v1496
      %v1498 = vpop.f32.mrf.mxu0
      %1499 = vmatprep.mubr.bf16.mxu0 0
      %1500 = vmatmul.mubr.bf16.gmra.mxu0 %v1315
      %v1501 = vpop.f32.mrf.mxu0
      %v1502 = vadd.f32 %v1361, %v1501
      %v1503 = vpop.f32.mrf.mxu0
      %v1504 = vpop.f32.mrf.mxu0
      %v1505 = vadd.f32 %v1361, %v1504
      %v1506 = vpop.f32.mrf.mxu0
      %1507 = vmatprep.mubr.bf16.mxu0 0
      %1508 = vmatmul.mubr.bf16.gmra.mxu0 %v1316
      %v1509 = vpop.f32.mrf.mxu0
      %v1510 = vadd.f32 %v1361, %v1509
      %v1511 = vpop.f32.mrf.mxu0
      %v1512 = vpop.f32.mrf.mxu0
      %v1513 = vadd.f32 %v1361, %v1512
      %v1514 = vpop.f32.mrf.mxu0
      %1515 = vmatprep.mubr.bf16.mxu0 0
      %1516 = vmatmul.mubr.bf16.gmra.mxu0 %v1317
      %v1517 = vpop.f32.mrf.mxu0
      %v1518 = vadd.f32 %v1361, %v1517
      %v1519 = vpop.f32.mrf.mxu0
      %v1520 = vpop.f32.mrf.mxu0
      %v1521 = vadd.f32 %v1361, %v1520
      %v1522 = vpop.f32.mrf.mxu0
      %1523 = vmatprep.mubr.bf16.mxu0 0
      %1524 = vmatmul.mubr.bf16.gmra.mxu0 %v1318
      %v1525 = vpop.f32.mrf.mxu0
      %v1526 = vadd.f32 %v1361, %v1525
      %v1527 = vpop.f32.mrf.mxu0
      %v1528 = vpop.f32.mrf.mxu0
      %v1529 = vadd.f32 %v1361, %v1528
      %v1530 = vpop.f32.mrf.mxu0
      %1531 = vmatprep.mubr.bf16.mxu0 0
      %1532 = vmatmul.mubr.bf16.gmra.mxu0 %v1319
      %v1533 = vpop.f32.mrf.mxu0
      %v1534 = vadd.f32 %v1361, %v1533
      %v1535 = vpop.f32.mrf.mxu0
      %v1536 = vpop.f32.mrf.mxu0
      %v1537 = vadd.f32 %v1361, %v1536
      %v1538 = vpop.f32.mrf.mxu0
      %1539 = vmatprep.mubr.bf16.mxu0 0
      %1540 = vmatmul.mubr.bf16.gmra.mxu0 %v1320
      %v1541 = vpop.f32.mrf.mxu0
      %v1542 = vadd.f32 %v1361, %v1541
      %v1543 = vpop.f32.mrf.mxu0
      %v1544 = vpop.f32.mrf.mxu0
      %v1545 = vadd.f32 %v1361, %v1544
      %v1546 = vpop.f32.mrf.mxu0
      %1547 = vmatprep.mubr.bf16.mxu0 0
      %1548 = vmatmul.mubr.bf16.gmra.mxu0 %v1321
      %v1549 = vpop.f32.mrf.mxu0
      %v1550 = vadd.f32 %v1361, %v1549
      %v1551 = vpop.f32.mrf.mxu0
      %v1552 = vpop.f32.mrf.mxu0
      %v1553 = vadd.f32 %v1361, %v1552
      %v1554 = vpop.f32.mrf.mxu0
      %1555 = vmatprep.mubr.bf16.mxu0 0
      %1556 = vmatmul.mubr.bf16.gmra.mxu0 %v1322
      %v1557 = vpop.f32.mrf.mxu0
      %v1558 = vadd.f32 %v1361, %v1557
      %v1559 = vpop.f32.mrf.mxu0
      %v1560 = vpop.f32.mrf.mxu0
      %v1561 = vadd.f32 %v1361, %v1560
      %v1562 = vpop.f32.mrf.mxu0
      %1563 = vmatprep.mubr.bf16.mxu0 0
      %1564 = vmatmul.mubr.bf16.gmra.mxu0 %v1323
      %v1565 = vpop.f32.mrf.mxu0
      %v1566 = vadd.f32 %v1361, %v1565
      %v1567 = vpop.f32.mrf.mxu0
      %v1568 = vpop.f32.mrf.mxu0
      %v1569 = vadd.f32 %v1361, %v1568
      %v1570 = vpop.f32.mrf.mxu0
      %1571 = vmatprep.mubr.bf16.mxu0 0
      %1572 = vmatmul.mubr.bf16.gmra.mxu0 %v1324
      %v1573 = vpop.f32.mrf.mxu0
      %v1574 = vadd.f32 %v1361, %v1573
      %v1575 = vpop.f32.mrf.mxu0
      %v1576 = vpop.f32.mrf.mxu0
      %v1577 = vadd.f32 %v1361, %v1576
      %v1578 = vpop.f32.mrf.mxu0
      %1579 = vmatprep.mubr.bf16.mxu0 0
      %1580 = vmatmul.mubr.bf16.gmra.mxu0 %v1325
      %v1581 = vpop.f32.mrf.mxu0
      %v1582 = vadd.f32 %v1361, %v1581
      %v1583 = vpop.f32.mrf.mxu0
      %v1584 = vpop.f32.mrf.mxu0
      %v1585 = vadd.f32 %v1361, %v1584
      %v1586 = vpop.f32.mrf.mxu0
      %1587 = vmatprep.mubr.bf16.mxu0 0
      %1588 = vmatmul.mubr.bf16.gmra.mxu0 %v1326
      %v1589 = vpop.f32.mrf.mxu0
      %v1590 = vadd.f32 %v1361, %v1589
      %v1591 = vpop.f32.mrf.mxu0
      %v1592 = vpop.f32.mrf.mxu0
      %v1593 = vadd.f32 %v1361, %v1592
      %v1594 = vpop.f32.mrf.mxu0
      %1595 = vmatprep.mubr.bf16.mxu0 0
      %1596 = vmatmul.mubr.bf16.gmra.mxu0 %v1327
      %v1597 = vpop.f32.mrf.mxu0
      %v1598 = vadd.f32 %v1361, %v1597
      %v1599 = vpop.f32.mrf.mxu0
      %v1600 = vpop.f32.mrf.mxu0
      %v1601 = vadd.f32 %v1361, %v1600
      %v1602 = vpop.f32.mrf.mxu0
      %1603 = vmatprep.mubr.bf16.mxu0 0
      %1604 = vmatmul.mubr.bf16.gmra.mxu0 %v1328
      %v1605 = vpop.f32.mrf.mxu0
      %v1606 = vadd.f32 %v1361, %v1605
      %v1607 = vpop.f32.mrf.mxu0
      %v1608 = vpop.f32.mrf.mxu0
      %v1609 = vadd.f32 %v1361, %v1608
      %v1610 = vpop.f32.mrf.mxu0
      %1611 = vmatprep.mubr.bf16.mxu0 0
      %1612 = vmatmul.mubr.bf16.gmra.mxu0 %v1329
      %v1613 = vpop.f32.mrf.mxu0
      %v1614 = vadd.f32 %v1361, %v1613
      %v1615 = vpop.f32.mrf.mxu0
      %v1616 = vpop.f32.mrf.mxu0
      %v1617 = vadd.f32 %v1361, %v1616
      %v1618 = vpop.f32.mrf.mxu0
      %1619 = vmatprep.mubr.bf16.mxu0 0
      %1620 = vmatmul.mubr.bf16.gmra.mxu0 %v1330
      %v1621 = vpop.f32.mrf.mxu0
      %v1622 = vadd.f32 %v1361, %v1621
      %v1623 = vpop.f32.mrf.mxu0
      %v1624 = vpop.f32.mrf.mxu0
      %v1625 = vadd.f32 %v1361, %v1624
      %v1626 = vpop.f32.mrf.mxu0
      %1627 = vmatprep.mubr.bf16.mxu0 0
      %1628 = vmatmul.mubr.bf16.gmra.mxu0 %v1331
      %v1629 = vpop.f32.mrf.mxu0
      %v1630 = vadd.f32 %v1361, %v1629
      %v1631 = vpop.f32.mrf.mxu0
      %v1632 = vpop.f32.mrf.mxu0
      %v1633 = vadd.f32 %v1361, %v1632
      %v1634 = vpop.f32.mrf.mxu0
      %1635 = vmatprep.mubr.bf16.mxu0 0
      %1636 = vmatmul.mubr.bf16.gmra.mxu0 %v1332
      %v1637 = vpop.f32.mrf.mxu0
      %v1638 = vadd.f32 %v1361, %v1637
      %v1639 = vpop.f32.mrf.mxu0
      %v1640 = vpop.f32.mrf.mxu0
      %v1641 = vadd.f32 %v1361, %v1640
      %v1642 = vpop.f32.mrf.mxu0
      %1643 = vmatprep.mubr.bf16.mxu0 0
      %1644 = vmatmul.mubr.bf16.gmra.mxu0 %v1333
      %v1645 = vpop.f32.mrf.mxu0
      %v1646 = vadd.f32 %v1361, %v1645
      %v1647 = vpop.f32.mrf.mxu0
      %v1648 = vpop.f32.mrf.mxu0
      %v1649 = vadd.f32 %v1361, %v1648
      %v1650 = vpop.f32.mrf.mxu0
      %1651 = vmatprep.mubr.bf16.mxu0 0
      %1652 = vmatmul.mubr.bf16.gmra.mxu0 %v1334
      %v1653 = vpop.f32.mrf.mxu0
      %v1654 = vadd.f32 %v1361, %v1653
      %v1655 = vpop.f32.mrf.mxu0
      %v1656 = vpop.f32.mrf.mxu0
      %v1657 = vadd.f32 %v1361, %v1656
      %v1658 = vpop.f32.mrf.mxu0
      %1659 = vmatprep.mubr.bf16.mxu0 0
      %1660 = vmatmul.mubr.bf16.gmra.mxu0 %v1335
      %v1661 = vpop.f32.mrf.mxu0
      %v1662 = vadd.f32 %v1361, %v1661
      %v1663 = vpop.f32.mrf.mxu0
      %v1664 = vpop.f32.mrf.mxu0
      %v1665 = vadd.f32 %v1361, %v1664
      %v1666 = vpop.f32.mrf.mxu0
      %1667 = vmatprep.mubr.bf16.mxu0 0
      %1668 = vmatmul.mubr.bf16.gmra.mxu0 %v1336
      %v1669 = vpop.f32.mrf.mxu0
      %v1670 = vadd.f32 %v1361, %v1669
      %v1671 = vpop.f32.mrf.mxu0
      %v1672 = vpop.f32.mrf.mxu0
      %v1673 = vadd.f32 %v1361, %v1672
      %v1674 = vpop.f32.mrf.mxu0
      %1675 = vmatprep.mubr.bf16.mxu0 0
      %1676 = vmatmul.mubr.bf16.gmra.mxu0 %v1337
      %v1677 = vpop.f32.mrf.mxu0
      %v1678 = vadd.f32 %v1361, %v1677
      %v1679 = vpop.f32.mrf.mxu0
      %v1680 = vpop.f32.mrf.mxu0
      %v1681 = vadd.f32 %v1361, %v1680
      %v1682 = vpop.f32.mrf.mxu0
      %1683 = vmatprep.mubr.bf16.mxu0 0
      %1684 = vmatmul.mubr.bf16.gmra.mxu0 %v1338
      %v1685 = vpop.f32.mrf.mxu0
      %v1686 = vadd.f32 %v1361, %v1685
      %v1687 = vpop.f32.mrf.mxu0
      %v1688 = vpop.f32.mrf.mxu0
      %v1689 = vadd.f32 %v1361, %v1688
      %v1690 = vpop.f32.mrf.mxu0
      %1691 = vmatprep.mubr.bf16.mxu0 0
      %1692 = vmatmul.mubr.bf16.gmra.mxu0 %v1339
      %v1693 = vpop.f32.mrf.mxu0
      %v1694 = vadd.f32 %v1361, %v1693
      %v1695 = vpop.f32.mrf.mxu0
      %v1696 = vpop.f32.mrf.mxu0
      %v1697 = vadd.f32 %v1361, %v1696
      %v1698 = vpop.f32.mrf.mxu0
      %1699 = vdwg.mxu0
      %vm1700 = vcmask 31744
      %1701 = vst.msk [vmem:[%s280] sm:$0xff] %vm1700, %v1446
      %1702 = vst.msk [vmem:[%s280 + $0x8] sm:$0xff] %vm1700, %v1449
      %1703 = vst.msk [vmem:[%s280 + $0x10] sm:$0xff] %vm1700, %v1454
      %1704 = vst.msk [vmem:[%s280 + $0x18] sm:$0xff] %vm1700, %v1457
      %1705 = vst.msk [vmem:[%s280 + $0x20] sm:$0xff] %vm1700, %v1462
      %1706 = vst.msk [vmem:[%s280 + $0x28] sm:$0xff] %vm1700, %v1465
      %1707 = vst.msk [vmem:[%s280 + $0x30] sm:$0xff] %vm1700, %v1470
      %1708 = vst.msk [vmem:[%s280 + $0x38] sm:$0xff] %vm1700, %v1473
      %1709 = vst.msk [vmem:[%s280 + $0x40] sm:$0xff] %vm1700, %v1478
      %1710 = vst.msk [vmem:[%s280 + $0x48] sm:$0xff] %vm1700, %v1481
      %1711 = vst.msk [vmem:[%s280 + $0x50] sm:$0xff] %vm1700, %v1486
      %1712 = vst.msk [vmem:[%s280 + $0x58] sm:$0xff] %vm1700, %v1489
      %1713 = vst.msk [vmem:[%s280 + $0x60] sm:$0xff] %vm1700, %v1494
      %1714 = vst.msk [vmem:[%s280 + $0x68] sm:$0xff] %vm1700, %v1497
      %1715 = vst.msk [vmem:[%s280 + $0x70] sm:$0xff] %vm1700, %v1502
      %1716 = vst.msk [vmem:[%s280 + $0x78] sm:$0xff] %vm1700, %v1505
      %1717 = vst.msk [vmem:[%s280 + $0x80] sm:$0xff] %vm1700, %v1510
      %1718 = vst.msk [vmem:[%s280 + $0x88] sm:$0xff] %vm1700, %v1513
      %1719 = vst.msk [vmem:[%s280 + $0x90] sm:$0xff] %vm1700, %v1518
      %1720 = vst.msk [vmem:[%s280 + $0x98] sm:$0xff] %vm1700, %v1521
      %1721 = vst.msk [vmem:[%s280 + $0xa0] sm:$0xff] %vm1700, %v1526
      %1722 = vst.msk [vmem:[%s280 + $0xa8] sm:$0xff] %vm1700, %v1529
      %1723 = vst.msk [vmem:[%s280 + $0xb0] sm:$0xff] %vm1700, %v1534
      %1724 = vst.msk [vmem:[%s280 + $0xb8] sm:$0xff] %vm1700, %v1537
      %1725 = vst.msk [vmem:[%s280 + $0xc0] sm:$0xff] %vm1700, %v1542
      %1726 = vst.msk [vmem:[%s280 + $0xc8] sm:$0xff] %vm1700, %v1545
      %1727 = vst.msk [vmem:[%s280 + $0xd0] sm:$0xff] %vm1700, %v1550
      %1728 = vst.msk [vmem:[%s280 + $0xd8] sm:$0xff] %vm1700, %v1553
      %1729 = vst.msk [vmem:[%s280 + $0xe0] sm:$0xff] %vm1700, %v1558
      %1730 = vst.msk [vmem:[%s280 + $0xe8] sm:$0xff] %vm1700, %v1561
      %1731 = vst.msk [vmem:[%s280 + $0xf0] sm:$0xff] %vm1700, %v1566
      %1732 = vst.msk [vmem:[%s280 + $0xf8] sm:$0xff] %vm1700, %v1569
      %1733 = vst.msk [vmem:[%s280 + $0x100] sm:$0xff] %vm1700, %v1574
      %1734 = vst.msk [vmem:[%s280 + $0x108] sm:$0xff] %vm1700, %v1577
      %1735 = vst.msk [vmem:[%s280 + $0x110] sm:$0xff] %vm1700, %v1582
      %1736 = vst.msk [vmem:[%s280 + $0x118] sm:$0xff] %vm1700, %v1585
      %1737 = vst.msk [vmem:[%s280 + $0x120] sm:$0xff] %vm1700, %v1590
      %1738 = vst.msk [vmem:[%s280 + $0x128] sm:$0xff] %vm1700, %v1593
      %1739 = vst.msk [vmem:[%s280 + $0x130] sm:$0xff] %vm1700, %v1598
      %1740 = vst.msk [vmem:[%s280 + $0x138] sm:$0xff] %vm1700, %v1601
      %1741 = vst.msk [vmem:[%s280 + $0x140] sm:$0xff] %vm1700, %v1606
      %1742 = vst.msk [vmem:[%s280 + $0x148] sm:$0xff] %vm1700, %v1609
      %1743 = vst.msk [vmem:[%s280 + $0x150] sm:$0xff] %vm1700, %v1614
      %1744 = vst.msk [vmem:[%s280 + $0x158] sm:$0xff] %vm1700, %v1617
      %1745 = vst.msk [vmem:[%s280 + $0x160] sm:$0xff] %vm1700, %v1622
      %1746 = vst.msk [vmem:[%s280 + $0x168] sm:$0xff] %vm1700, %v1625
      %1747 = vst.msk [vmem:[%s280 + $0x170] sm:$0xff] %vm1700, %v1630
      %1748 = vst.msk [vmem:[%s280 + $0x178] sm:$0xff] %vm1700, %v1633
      %1749 = vst.msk [vmem:[%s280 + $0x180] sm:$0xff] %vm1700, %v1638
      %1750 = vst.msk [vmem:[%s280 + $0x188] sm:$0xff] %vm1700, %v1641
      %1751 = vst.msk [vmem:[%s280 + $0x190] sm:$0xff] %vm1700, %v1646
      %1752 = vst.msk [vmem:[%s280 + $0x198] sm:$0xff] %vm1700, %v1649
      %1753 = vst.msk [vmem:[%s280 + $0x1a0] sm:$0xff] %vm1700, %v1654
      %1754 = vst.msk [vmem:[%s280 + $0x1a8] sm:$0xff] %vm1700, %v1657
      %1755 = vst.msk [vmem:[%s280 + $0x1b0] sm:$0xff] %vm1700, %v1662
      %1756 = vst.msk [vmem:[%s280 + $0x1b8] sm:$0xff] %vm1700, %v1665
      %1757 = vst.msk [vmem:[%s280 + $0x1c0] sm:$0xff] %vm1700, %v1670
      %1758 = vst.msk [vmem:[%s280 + $0x1c8] sm:$0xff] %vm1700, %v1673
      %1759 = vst.msk [vmem:[%s280 + $0x1d0] sm:$0xff] %vm1700, %v1678
      %1760 = vst.msk [vmem:[%s280 + $0x1d8] sm:$0xff] %vm1700, %v1681
      %1761 = vst.msk [vmem:[%s280 + $0x1e0] sm:$0xff] %vm1700, %v1686
      %1762 = vst.msk [vmem:[%s280 + $0x1e8] sm:$0xff] %vm1700, %v1689
      %1763 = vst.msk [vmem:[%s280 + $0x1f0] sm:$0xff] %vm1700, %v1694
      %1764 = vst.msk [vmem:[%s280 + $0x1f8] sm:$0xff] %vm1700, %v1697
      %s1765 = smul.u32 64, %s18
      %p1766 = scmp.lt.s32.totalorder %s1765, 127
      %s1767 = scalar_select %p1766, %s1765, 127
      %s1768 = smul.addr %s1767, 8
      %s1769 = scalar_lea.vmem %s7, %s1768
      // Predicated region
      $region49: #{tpu_custom_call.1} parent=47 // pred_check
        %p1770 = pneg %p188
      $region50: #{tpu_custom_call.1} parent=47 // pred_check_branch
        %1772 = sbr.rel (%p1770) target = $region52
      $region51: #{tpu_custom_call.1} parent=47 // pred_region
        %s1773 = smul.u32 64, %s18
      $region52: #{tpu_custom_call.1} parent=47 // pred_fallthru
        _
    $region48: #{tpu_custom_call.1} parent=5 // pred_fallthru
      _
    %p1774 = scmp.le.s32.totalorder 2, %s13
    // Predicated region
    $region53: #{tpu_custom_call.1} parent=5 // pred_check
      %p1775 = pneg %p1774
    $region54: #{tpu_custom_call.1} parent=5 // pred_check_branch
      %1777 = sbr.rel (%p1775) target = $region56
    $region55: #{tpu_custom_call.1} parent=5 // pred_region
      %s1778 = ssub.s32 %s13, 2
      // Predicated region
      $region57: #{tpu_custom_call.1} parent=55 // pred_check
        %p1779 = pneg %p194
      $region58: #{tpu_custom_call.1} parent=55 // pred_check_branch
        %1781 = sbr.rel (%p1779) target = $region60
      $region59: #{tpu_custom_call.1} parent=55 // pred_region
        %s1782 = smul.u32 64, %s19
        %p1783 = scmp.lt.s32.totalorder %s1782, 127
        %s1784 = scalar_select %p1783, %s1782, 127
        %s1785 = smul.addr %s1784, 8
        %s1786 = scalar_lea.vmem %s7, %s1785
      $region60: #{tpu_custom_call.1} parent=55 // pred_fallthru
        _
    $region56: #{tpu_custom_call.1} parent=5 // pred_fallthru
      _
  $region6: #{tpu_custom_call.1} parent=0 // loop_footer
    %s17 = sadd.s32 1, %s13
  $region7: #{tpu_custom_call.1} parent=0 // loop_footer_branch
    %12 = sbr.rel target = $region3
  $region8: #{tpu_custom_call.1} parent=0 // loop_exit
    _

// kernel: tpu_custom_call.1
$region0: #{tpu_custom_call.1}
  #allocation0 [shape = 'u32[]', space=smem, size = 0x4, offset = 0x4, fixed_abs, tag = 'smem constant byte address 0x4 - core index']
  #allocation1 [shape = 'u32[144,128]{1,0:T(1,128)}', space=vmem, size = 0x12000, scoped, tag = 'internal scratch']
  %s0 = inlined_call_operand.vmem [shape: f32[1024,32], index: 0, kind: input, shape index: {}]
  %s1 = inlined_call_operand.vmem [shape: bf16[32,128], index: 1, kind: input, shape index: {}]
  %s2 = inlined_call_operand.vmem [shape: f32[1,128], index: 2, kind: input, shape index: {}]
  %s3 = inlined_call_operand.vmem [shape: bf16[128,128], index: 3, kind: input, shape index: {}]
  %s4 = inlined_call_operand.vmem [shape: f32[1,128], index: 4, kind: input, shape index: {}]
  %s5 = inlined_call_operand.vmem [shape: bf16[128,4], index: 5, kind: input, shape index: {}]
  %s6 = inlined_call_operand.vmem [shape: f32[1,4], index: 6, kind: input, shape index: {}]
  %s7 = inlined_call_operand.vmem [shape: f32[1024,4], index: 7, kind: output, shape index: {}]
  %s8 = sld [smem:[#allocation0]]
  $region61: #{tpu_custom_call.1} parent=0
    _
  %s10 = ssub.s32 1, %s8
  %s11 = scalar_select 0, %s10, %s8
  loop: start=0, step=1, limit=4
  $region2: #{tpu_custom_call.1} parent=0 // loop_pre_header
    _
  $region3: #{tpu_custom_call.1} parent=0 // loop_header
    %s13 = sphi 0, %s17
    %p14 = scmp.ge.s32.totalorder %s13, 4
    %s23 = sphi 0, %s25
    %s26 = sphi 0, %s23
    %s27 = sphi 0, %s26
    %s43 = sphi 0, %s27
    %s47 = sphi 0, %s47
    %s49 = sphi 0, %s47
    %s50 = sphi 0, %s49
    %s64 = sphi 0, %s50
    %s68 = sphi 0, %s68
    %s70 = sphi 0, %s68
    %s71 = sphi 0, %s70
    %s85 = sphi 0, %s71
    %s89 = sphi 0, %s89
    %s91 = sphi 0, %s89
    %s92 = sphi 0, %s91
    %s106 = sphi 0, %s92
    %s110 = sphi 0, %s110
    %s112 = sphi 0, %s110
    %s113 = sphi 0, %s112
    %s127 = sphi 0, %s113
    %s131 = sphi 0, %s131
    %s133 = sphi 0, %s131
    %s134 = sphi 0, %s133
    %s148 = sphi 0, %s134
    %s152 = sphi 0, %s152
    %s154 = sphi 0, %s152
    %s155 = sphi 0, %s154
    %s169 = sphi 0, %s155
    %s175 = sphi 0, %s177
    %s178 = sphi 0, %s175
    %s179 = sphi 0, %s178
    %s195 = sphi 0, %s179
  $region4: #{tpu_custom_call.1} parent=0 // loop_header_branch
    %16 = sbr.rel (%p14) target = $region8
  $region5: #{tpu_custom_call.1} parent=0 // loop_body
    %s18 = ssub.s32 %s13, 1
    %s19 = ssub.s32 %s13, 2
    %s20 = sadd.s32 %s13, 1
    %s21 = ssub.s32 %s13, %s20
    %p22 = scmp.eq.s32.totalorder %s21, 0
    %s24 = sadd.s32 %s23, 1
    %s25 = scalar_select %p22, %s23, %s24
    %p28 = pneg %p22
    %p29 = scmp.eq.s32.totalorder %s13, 1
    %p30 = por %p28, %p29
    %p31 = scmp.ne.s32.totalorder %s23, %s26
    %p32 = scmp.eq.s32.totalorder %s13, 0
    %p33 = por %p31, %p32
    %p34 = scmp.ne.s32.totalorder %s23, %s26
    %p35 = scmp.eq.s32.totalorder %s18, 1
    %p36 = por %p34, %p35
    %p37 = scmp.ne.s32.totalorder %s26, %s27
    %p38 = scmp.eq.s32.totalorder %s18, 0
    %p39 = por %p37, %p38
    %p40 = scmp.ne.s32.totalorder %s26, %s27
    %p41 = scmp.eq.s32.totalorder %s19, 1
    %p42 = por %p40, %p41
    %p44 = scmp.ne.s32.totalorder %s27, %s43
    %p45 = scmp.eq.s32.totalorder %s19, 0
    %p46 = por %p44, %p45
    %s48 = sadd.s32 %s47, 1
    %p51 = scmp.eq.s32.totalorder %s13, 1
    %p52 = scmp.ne.s32.totalorder %s47, %s49
    %p53 = scmp.eq.s32.totalorder %s13, 0
    %p54 = por %p52, %p53
    %p55 = scmp.ne.s32.totalorder %s47, %s49
    %p56 = scmp.eq.s32.totalorder %s18, 1
    %p57 = por %p55, %p56
    %p58 = scmp.ne.s32.totalorder %s49, %s50
    %p59 = scmp.eq.s32.totalorder %s18, 0
    %p60 = por %p58, %p59
    %p61 = scmp.ne.s32.totalorder %s49, %s50
    %p62 = scmp.eq.s32.totalorder %s19, 1
    %p63 = por %p61, %p62
    %p65 = scmp.ne.s32.totalorder %s50, %s64
    %p66 = scmp.eq.s32.totalorder %s19, 0
    %p67 = por %p65, %p66
    %s69 = sadd.s32 %s68, 1
    %p72 = scmp.eq.s32.totalorder %s13, 1
    %p73 = scmp.ne.s32.totalorder %s68, %s70
    %p74 = scmp.eq.s32.totalorder %s13, 0
    %p75 = por %p73, %p74
    %p76 = scmp.ne.s32.totalorder %s68, %s70
    %p77 = scmp.eq.s32.totalorder %s18, 1
    %p78 = por %p76, %p77
    %p79 = scmp.ne.s32.totalorder %s70, %s71
    %p80 = scmp.eq.s32.totalorder %s18, 0
    %p81 = por %p79, %p80
    %p82 = scmp.ne.s32.totalorder %s70, %s71
    %p83 = scmp.eq.s32.totalorder %s19, 1
    %p84 = por %p82, %p83
    %p86 = scmp.ne.s32.totalorder %s71, %s85
    %p87 = scmp.eq.s32.totalorder %s19, 0
    %p88 = por %p86, %p87
    %s90 = sadd.s32 %s89, 1
    %p93 = scmp.eq.s32.totalorder %s13, 1
    %p94 = scmp.ne.s32.totalorder %s89, %s91
    %p95 = scmp.eq.s32.totalorder %s13, 0
    %p96 = por %p94, %p95
    %p97 = scmp.ne.s32.totalorder %s89, %s91
    %p98 = scmp.eq.s32.totalorder %s18, 1
    %p99 = por %p97, %p98
    %p100 = scmp.ne.s32.totalorder %s91, %s92
    %p101 = scmp.eq.s32.totalorder %s18, 0
    %p102 = por %p100, %p101
    %p103 = scmp.ne.s32.totalorder %s91, %s92
    %p104 = scmp.eq.s32.totalorder %s19, 1
    %p105 = por %p103, %p104
    %p107 = scmp.ne.s32.totalorder %s92, %s106
    %p108 = scmp.eq.s32.totalorder %s19, 0
    %p109 = por %p107, %p108
    %s111 = sadd.s32 %s110, 1
    %p114 = scmp.eq.s32.totalorder %s13, 1
    %p115 = scmp.ne.s32.totalorder %s110, %s112
    %p116 = scmp.eq.s32.totalorder %s13, 0
    %p117 = por %p115, %p116
    %p118 = scmp.ne.s32.totalorder %s110, %s112
    %p119 = scmp.eq.s32.totalorder %s18, 1
    %p120 = por %p118, %p119
    %p121 = scmp.ne.s32.totalorder %s112, %s113
    %p122 = scmp.eq.s32.totalorder %s18, 0
    %p123 = por %p121, %p122
    %p124 = scmp.ne.s32.totalorder %s112, %s113
    %p125 = scmp.eq.s32.totalorder %s19, 1
    %p126 = por %p124, %p125
    %p128 = scmp.ne.s32.totalorder %s113, %s127
    %p129 = scmp.eq.s32.totalorder %s19, 0
    %p130 = por %p128, %p129
    %s132 = sadd.s32 %s131, 1
    %p135 = scmp.eq.s32.totalorder %s13, 1
    %p136 = scmp.ne.s32.totalorder %s131, %s133
    %p137 = scmp.eq.s32.totalorder %s13, 0
    %p138 = por %p136, %p137
    %p139 = scmp.ne.s32.totalorder %s131, %s133
    %p140 = scmp.eq.s32.totalorder %s18, 1
    %p141 = por %p139, %p140
    %p142 = scmp.ne.s32.totalorder %s133, %s134
    %p143 = scmp.eq.s32.totalorder %s18, 0
    %p144 = por %p142, %p143
    %p145 = scmp.ne.s32.totalorder %s133, %s134
    %p146 = scmp.eq.s32.totalorder %s19, 1
    %p147 = por %p145, %p146
    %p149 = scmp.ne.s32.totalorder %s134, %s148
    %p150 = scmp.eq.s32.totalorder %s19, 0
    %p151 = por %p149, %p150
    %s153 = sadd.s32 %s152, 1
    %p156 = scmp.eq.s32.totalorder %s13, 1
    %p157 = scmp.ne.s32.totalorder %s152, %s154
    %p158 = scmp.eq.s32.totalorder %s13, 0
    %p159 = por %p157, %p158
    %p160 = scmp.ne.s32.totalorder %s152, %s154
    %p161 = scmp.eq.s32.totalorder %s18, 1
    %p162 = por %p160, %p161
    %p163 = scmp.ne.s32.totalorder %s154, %s155
    %p164 = scmp.eq.s32.totalorder %s18, 0
    %p165 = por %p163, %p164
    %p166 = scmp.ne.s32.totalorder %s154, %s155
    %p167 = scmp.eq.s32.totalorder %s19, 1
    %p168 = por %p166, %p167
    %p170 = scmp.ne.s32.totalorder %s155, %s169
    %p171 = scmp.eq.s32.totalorder %s19, 0
    %p172 = por %p170, %p171
    %s173 = ssub.s32 %s13, %s20
    %p174 = scmp.eq.s32.totalorder %s173, 0
    %s176 = sadd.s32 %s175, 1
    %s177 = scalar_select %p174, %s175, %s176
    %p180 = pneg %p174
    %p181 = scmp.eq.s32.totalorder %s13, 1
    %p182 = por %p180, %p181
    %p183 = scmp.ne.s32.totalorder %s175, %s178
    %p184 = scmp.eq.s32.totalorder %s13, 0
    %p185 = por %p183, %p184
    %p186 = scmp.ne.s32.totalorder %s175, %s178
    %p187 = scmp.eq.s32.totalorder %s18, 1
    %p188 = por %p186, %p187
    %p189 = scmp.ne.s32.totalorder %s178, %s179
    %p190 = scmp.eq.s32.totalorder %s18, 0
    %p191 = por %p189, %p190
    %p192 = scmp.ne.s32.totalorder %s178, %s179
    %p193 = scmp.eq.s32.totalorder %s19, 1
    %p194 = por %p192, %p193
    %p196 = scmp.ne.s32.totalorder %s179, %s195
    %p197 = scmp.eq.s32.totalorder %s19, 0
    %p198 = por %p196, %p197
    %p199 = scmp.le.s32.totalorder 1, %s13
    %p200 = scmp.lt.s32.totalorder %s13, 3
    %p201 = pnand %p199, %p200
    %p202 = pneg %p201
    // Predicated region
    $region9: #{tpu_custom_call.1} parent=5 // pred_check
      _
    $region10: #{tpu_custom_call.1} parent=5 // pred_check_branch
      %204 = sbr.rel (%p201) target = $region12
    $region11: #{tpu_custom_call.1} parent=5 // pred_region
      %s205 = ssub.s32 %s13, 1
      // Predicated region
      $region13: #{tpu_custom_call.1} parent=11 // pred_check
        %p206 = pneg %p60
      $region14: #{tpu_custom_call.1} parent=11 // pred_check_branch
        %208 = sbr.rel (%p206) target = $region16
      $region15: #{tpu_custom_call.1} parent=11 // pred_region
        _
      $region16: #{tpu_custom_call.1} parent=11 // pred_fallthru
        _
      // Predicated region
      $region17: #{tpu_custom_call.1} parent=11 // pred_check
        %p209 = pneg %p81
      $region18: #{tpu_custom_call.1} parent=11 // pred_check_branch
        %211 = sbr.rel (%p209) target = $region20
      $region19: #{tpu_custom_call.1} parent=11 // pred_region
        _
      $region20: #{tpu_custom_call.1} parent=11 // pred_fallthru
        _
      // Predicated region
      $region21: #{tpu_custom_call.1} parent=11 // pred_check
        %p212 = pneg %p102
      $region22: #{tpu_custom_call.1} parent=11 // pred_check_branch
        %214 = sbr.rel (%p212) target = $region24
      $region23: #{tpu_custom_call.1} parent=11 // pred_region
        _
      $region24: #{tpu_custom_call.1} parent=11 // pred_fallthru
        _
      // Predicated region
      $region25: #{tpu_custom_call.1} parent=11 // pred_check
        %p215 = pneg %p123
      $region26: #{tpu_custom_call.1} parent=11 // pred_check_branch
        %217 = sbr.rel (%p215) target = $region28
      $region27: #{tpu_custom_call.1} parent=11 // pred_region
        _
      $region28: #{tpu_custom_call.1} parent=11 // pred_fallthru
        _
      // Predicated region
      $region29: #{tpu_custom_call.1} parent=11 // pred_check
        %p218 = pneg %p144
      $region30: #{tpu_custom_call.1} parent=11 // pred_check_branch
        %220 = sbr.rel (%p218) target = $region32
      $region31: #{tpu_custom_call.1} parent=11 // pred_region
        _
      $region32: #{tpu_custom_call.1} parent=11 // pred_fallthru
        _
      // Predicated region
      $region33: #{tpu_custom_call.1} parent=11 // pred_check
        %p221 = pneg %p165
      $region34: #{tpu_custom_call.1} parent=11 // pred_check_branch
        %223 = sbr.rel (%p221) target = $region36
      $region35: #{tpu_custom_call.1} parent=11 // pred_region
        _
      $region36: #{tpu_custom_call.1} parent=11 // pred_fallthru
        _
    $region12: #{tpu_custom_call.1} parent=5 // pred_fallthru
      _
    %p224 = scmp.lt.s32.totalorder %s13, 2
    // Predicated region
    $region37: #{tpu_custom_call.1} parent=5 // pred_check
      %p225 = pneg %p224
    $region38: #{tpu_custom_call.1} parent=5 // pred_check_branch
      %227 = sbr.rel (%p225) target = $region40
    $region39: #{tpu_custom_call.1} parent=5 // pred_region
      // Predicated region
      $region41: #{tpu_custom_call.1} parent=39 // pred_check
        %p228 = pneg %p33
      $region42: #{tpu_custom_call.1} parent=39 // pred_check_branch
        %230 = sbr.rel (%p228) target = $region44
      $region43: #{tpu_custom_call.1} parent=39 // pred_region
        %s231 = smul.u32 64, %s13
        %p232 = scmp.lt.s32.totalorder %s231, 127
        %s233 = scalar_select %p232, %s231, 127
        %s234 = smul.addr %s233, 8
        %s235 = scalar_lea.vmem %s0, %s234
        %s236 = smul.u32 64, %s13
      $region44: #{tpu_custom_call.1} parent=39 // pred_fallthru
        _
    $region40: #{tpu_custom_call.1} parent=5 // pred_fallthru
      _
    %p237 = scmp.le.s32.totalorder 1, %s13
    %p238 = scmp.lt.s32.totalorder %s13, 3
    %p239 = pnand %p237, %p238
    %p240 = pneg %p239
    // Predicated region
    $region45: #{tpu_custom_call.1} parent=5 // pred_check
      _
    $region46: #{tpu_custom_call.1} parent=5 // pred_check_branch
      %242 = sbr.rel (%p239) target = $region48
    $region47: #{tpu_custom_call.1} parent=5 // pred_region
      %s243 = ssub.s32 %s13, 1
      %s244 = smul.u32 64, %s18
      %p245 = scmp.lt.s32.totalorder %s244, 127
      %s246 = scalar_select %p245, %s244, 127
      %s247 = smul.addr %s246, 8
      %s248 = scalar_lea.vmem %s0, %s247
      %p249 = pneg %p39
      %p250 = pneg %p36
      %p251 = pneg %p60
      %p252 = pneg %p57
      %p253 = pneg %p81
      %p254 = pneg %p78
      %p255 = pneg %p102
      %p256 = pneg %p99
      %p257 = pneg %p123
      %p258 = pneg %p120
      %p259 = pneg %p144
      %p260 = pneg %p141
      %p261 = pneg %p165
      %p262 = pneg %p162
      %p263 = pneg %p191
      %p264 = pneg %p188
      %s265 = smul.u32 64, %s18
      %p266 = scmp.lt.s32.totalorder %s265, 127
      %s267 = scalar_select %p266, %s265, 127
      %s268 = smul.addr %s267, 8
      %s269 = scalar_lea.vmem %s7, %s268
      %s270 = smul.u32 64, %s18
      %p271 = scmp.lt.s32.totalorder %s270, 127
      %s272 = scalar_select %p271, %s270, 127
      %s273 = smul.addr %s272, 8
      %s274 = scalar_lea.vmem %s0, %s273
      %s275 = smul.u32 64, %s18
      %s276 = smul.u32 64, %s18
      %p277 = scmp.lt.s32.totalorder %s276, 127
      %s278 = scalar_select %p277, %s276, 127
      %s279 = smul.addr %s278, 8
      %s280 = scalar_lea.vmem %s7, %s279
      %s281 = smul.u32 64, %s18
      %v283 = vld [vmem:[%s274] sm:$0xff]
      %v284 = vld [vmem:[%s274 + $0x8] sm:$0xff]
      %v285 = vld [vmem:[%s274 + $0x10] sm:$0xff]
      %v286 = vld [vmem:[%s274 + $0x18] sm:$0xff]
      %v287 = vld [vmem:[%s274 + $0x20] sm:$0xff]
      %v288 = vld [vmem:[%s274 + $0x28] sm:$0xff]
      %v289 = vld [vmem:[%s274 + $0x30] sm:$0xff]
      %v290 = vld [vmem:[%s274 + $0x38] sm:$0xff]
      %v291 = vld [vmem:[%s274 + $0x40] sm:$0xff]
      %v292 = vld [vmem:[%s274 + $0x48] sm:$0xff]
      %v293 = vld [vmem:[%s274 + $0x50] sm:$0xff]
      %v294 = vld [vmem:[%s274 + $0x58] sm:$0xff]
      %v295 = vld [vmem:[%s274 + $0x60] sm:$0xff]
      %v296 = vld [vmem:[%s274 + $0x68] sm:$0xff]
      %v297 = vld [vmem:[%s274 + $0x70] sm:$0xff]
      %v298 = vld [vmem:[%s274 + $0x78] sm:$0xff]
      %v299 = vld [vmem:[%s274 + $0x80] sm:$0xff]
      %v300 = vld [vmem:[%s274 + $0x88] sm:$0xff]
      %v301 = vld [vmem:[%s274 + $0x90] sm:$0xff]
      %v302 = vld [vmem:[%s274 + $0x98] sm:$0xff]
      %v303 = vld [vmem:[%s274 + $0xa0] sm:$0xff]
      %v304 = vld [vmem:[%s274 + $0xa8] sm:$0xff]
      %v305 = vld [vmem:[%s274 + $0xb0] sm:$0xff]
      %v306 = vld [vmem:[%s274 + $0xb8] sm:$0xff]
      %v307 = vld [vmem:[%s274 + $0xc0] sm:$0xff]
      %v308 = vld [vmem:[%s274 + $0xc8] sm:$0xff]
      %v309 = vld [vmem:[%s274 + $0xd0] sm:$0xff]
      %v310 = vld [vmem:[%s274 + $0xd8] sm:$0xff]
      %v311 = vld [vmem:[%s274 + $0xe0] sm:$0xff]
      %v312 = vld [vmem:[%s274 + $0xe8] sm:$0xff]
      %v313 = vld [vmem:[%s274 + $0xf0] sm:$0xff]
      %v314 = vld [vmem:[%s274 + $0xf8] sm:$0xff]
      %v315 = vld [vmem:[%s274 + $0x100] sm:$0xff]
      %v316 = vld [vmem:[%s274 + $0x108] sm:$0xff]
      %v317 = vld [vmem:[%s274 + $0x110] sm:$0xff]
      %v318 = vld [vmem:[%s274 + $0x118] sm:$0xff]
      %v319 = vld [vmem:[%s274 + $0x120] sm:$0xff]
      %v320 = vld [vmem:[%s274 + $0x128] sm:$0xff]
      %v321 = vld [vmem:[%s274 + $0x130] sm:$0xff]
      %v322 = vld [vmem:[%s274 + $0x138] sm:$0xff]
      %v323 = vld [vmem:[%s274 + $0x140] sm:$0xff]
      %v324 = vld [vmem:[%s274 + $0x148] sm:$0xff]
      %v325 = vld [vmem:[%s274 + $0x150] sm:$0xff]
      %v326 = vld [vmem:[%s274 + $0x158] sm:$0xff]
      %v327 = vld [vmem:[%s274 + $0x160] sm:$0xff]
      %v328 = vld [vmem:[%s274 + $0x168] sm:$0xff]
      %v329 = vld [vmem:[%s274 + $0x170] sm:$0xff]
      %v330 = vld [vmem:[%s274 + $0x178] sm:$0xff]
      %v331 = vld [vmem:[%s274 + $0x180] sm:$0xff]
      %v332 = vld [vmem:[%s274 + $0x188] sm:$0xff]
      %v333 = vld [vmem:[%s274 + $0x190] sm:$0xff]
      %v334 = vld [vmem:[%s274 + $0x198] sm:$0xff]
      %v335 = vld [vmem:[%s274 + $0x1a0] sm:$0xff]
      %v336 = vld [vmem:[%s274 + $0x1a8] sm:$0xff]
      %v337 = vld [vmem:[%s274 + $0x1b0] sm:$0xff]
      %v338 = vld [vmem:[%s274 + $0x1b8] sm:$0xff]
      %v339 = vld [vmem:[%s274 + $0x1c0] sm:$0xff]
      %v340 = vld [vmem:[%s274 + $0x1c8] sm:$0xff]
      %v341 = vld [vmem:[%s274 + $0x1d0] sm:$0xff]
      %v342 = vld [vmem:[%s274 + $0x1d8] sm:$0xff]
      %v343 = vld [vmem:[%s274 + $0x1e0] sm:$0xff]
      %v344 = vld [vmem:[%s274 + $0x1e8] sm:$0xff]
      %v345 = vld [vmem:[%s274 + $0x1f0] sm:$0xff]
      %v346 = vld [vmem:[%s274 + $0x1f8] sm:$0xff]
      %v347 = vpack.c.bf16 %v284, %v283
      %v348 = vpack.c.bf16 %v286, %v285
      %v349 = vpack.c.bf16 %v288, %v287
      %v350 = vpack.c.bf16 %v290, %v289
      %v351 = vpack.c.bf16 %v292, %v291
      %v352 = vpack.c.bf16 %v294, %v293
      %v353 = vpack.c.bf16 %v296, %v295
      %v354 = vpack.c.bf16 %v298, %v297
      %v355 = vpack.c.bf16 %v300, %v299
      %v356 = vpack.c.bf16 %v302, %v301
      %v357 = vpack.c.bf16 %v304, %v303
      %v358 = vpack.c.bf16 %v306, %v305
      %v359 = vpack.c.bf16 %v308, %v307
      %v360 = vpack.c.bf16 %v310, %v309
      %v361 = vpack.c.bf16 %v312, %v311
      %v362 = vpack.c.bf16 %v314, %v313
      %v363 = vpack.c.bf16 %v316, %v315
      %v364 = vpack.c.bf16 %v318, %v317
      %v365 = vpack.c.bf16 %v320, %v319
      %v366 = vpack.c.bf16 %v322, %v321
      %v367 = vpack.c.bf16 %v324, %v323
      %v368 = vpack.c.bf16 %v326, %v325
      %v369 = vpack.c.bf16 %v328, %v327
      %v370 = vpack.c.bf16 %v330, %v329
      %v371 = vpack.c.bf16 %v332, %v331
      %v372 = vpack.c.bf16 %v334, %v333
      %v373 = vpack.c.bf16 %v336, %v335
      %v374 = vpack.c.bf16 %v338, %v337
      %v375 = vpack.c.bf16 %v340, %v339
      %v376 = vpack.c.bf16 %v342, %v341
      %v377 = vpack.c.bf16 %v344, %v343
      %v378 = vpack.c.bf16 %v346, %v345
      %v379 = vld [vmem:[%s1] sm:$0xf]
      %v380 = vld [vmem:[%s1 + $0x4] sm:$0xf]
      %v381 = vld [vmem:[%s1 + $0x8] sm:$0xf]
      %v382 = vld [vmem:[%s1 + $0xc] sm:$0xf]
      %v383 = vld [vmem:[%s2] sm:$0x1]
      %v385 = vlaneseq
      %v386 = vshrl.u32 %v385, 7
      %v387 = vsub.s32 0, %v386
      %v388 = vrot.slane %v383, %v387
      %v394 = vunpack.c.l.b16 %v379
      %v395 = vunpack.c.l.b16 %v380
      %v396 = vunpack.c.l.b16 %v381
      %v397 = vunpack.c.l.b16 %v382
      %v398 = vpack.c.b16 %v395, %v394
      %v399 = vpack.c.b16 %v397, %v396
      %vm402 = vcmask 261120
      %v404 = vsel %vm402, %v347, 0
      %v407 = vsel %vm402, %v348, 0
      %v410 = vsel %vm402, %v349, 0
      %v413 = vsel %vm402, %v350, 0
      %v416 = vsel %vm402, %v351, 0
      %v419 = vsel %vm402, %v352, 0
      %v422 = vsel %vm402, %v353, 0
      %v425 = vsel %vm402, %v354, 0
      %v428 = vsel %vm402, %v355, 0
      %v431 = vsel %vm402, %v356, 0
      %v434 = vsel %vm402, %v357, 0
      %v437 = vsel %vm402, %v358, 0
      %v440 = vsel %vm402, %v359, 0
      %v443 = vsel %vm402, %v360, 0
      %v446 = vsel %vm402, %v361, 0
      %v449 = vsel %vm402, %v362, 0
      %v452 = vsel %vm402, %v363, 0
      %v455 = vsel %vm402, %v364, 0
      %v458 = vsel %vm402, %v365, 0
      %v461 = vsel %vm402, %v366, 0
      %v464 = vsel %vm402, %v367, 0
      %v467 = vsel %vm402, %v368, 0
      %v470 = vsel %vm402, %v369, 0
      %v473 = vsel %vm402, %v370, 0
      %v476 = vsel %vm402, %v371, 0
      %v479 = vsel %vm402, %v372, 0
      %v482 = vsel %vm402, %v373, 0
      %v485 = vsel %vm402, %v374, 0
      %v488 = vsel %vm402, %v375, 0
      %v491 = vsel %vm402, %v376, 0
      %v494 = vsel %vm402, %v377, 0
      %v497 = vsel %vm402, %v378, 0
      %499 = vmatprep.subr.bf16.mxu0 0
      %500 = vmatpush1.bf16.msra.mxu0 0
      %501 = vmatprep.subr.bf16.mxu0 0
      %502 = vmatpush1.bf16.msra.mxu0 0
      %503 = vmatprep.subr.bf16.mxu0 0
      %504 = vmatpush1.bf16.msra.mxu0 0
      %505 = vmatprep.subr.bf16.mxu0 0
      %506 = vmatpush1.bf16.msra.mxu0 0
      %507 = vmatprep.subr.bf16.mxu0 0
      %508 = vmatpush1.bf16.msra.mxu0 0
      %509 = vmatprep.subr.bf16.mxu0 0
      %510 = vmatpush1.bf16.msra.mxu0 0
      %511 = vmatprep.subr.bf16.mxu0 0
      %512 = vmatpush1.bf16.msra.mxu0 %v399
      %513 = vmatprep.subr.bf16.mxu0 0
      %514 = vmatpush1.bf16.msra.mxu0 %v398
      %515 = vmatprep.subr.bf16.mxu0 0
      %516 = vmatpush2.bf16.msra.mxu0 0
      %517 = vmatprep.subr.bf16.mxu0 0
      %518 = vmatpush2.bf16.msra.mxu0 0
      %519 = vmatprep.subr.bf16.mxu0 0
      %520 = vmatpush2.bf16.msra.mxu0 0
      %521 = vmatprep.subr.bf16.mxu0 0
      %522 = vmatpush2.bf16.msra.mxu0 0
      %523 = vmatprep.subr.bf16.mxu0 0
      %524 = vmatpush2.bf16.msra.mxu0 0
      %525 = vmatprep.subr.bf16.mxu0 0
      %526 = vmatpush2.bf16.msra.mxu0 0
      %527 = vmatprep.subr.bf16.mxu0 0
      %528 = vmatpush2.bf16.msra.mxu0 0
      %529 = vmatprep.subr.bf16.mxu0 0
      %530 = vmatpush2.bf16.msra.mxu0 0
      %531 = vmatprep.mubr.bf16.mxu0 0
      %532 = vmatmul.mubr.bf16.gmra.mxu0 %v404
      %v533 = vpop.f32.mrf.mxu0
      %v534 = vadd.f32 %v388, %v533
      %v535 = vpop.f32.mrf.mxu0
      %v536 = vpop.f32.mrf.mxu0
      %v537 = vadd.f32 %v388, %v536
      %v538 = vpop.f32.mrf.mxu0
      %539 = vmatprep.mubr.bf16.mxu0 0
      %540 = vmatmul.mubr.bf16.gmra.mxu0 %v407
      %v541 = vpop.f32.mrf.mxu0
      %v542 = vadd.f32 %v388, %v541
      %v543 = vpop.f32.mrf.mxu0
      %v544 = vpop.f32.mrf.mxu0
      %v545 = vadd.f32 %v388, %v544
      %v546 = vpop.f32.mrf.mxu0
      %547 = vmatprep.mubr.bf16.mxu0 0
      %548 = vmatmul.mubr.bf16.gmra.mxu0 %v410
      %v549 = vpop.f32.mrf.mxu0
      %v550 = vadd.f32 %v388, %v549
      %v551 = vpop.f32.mrf.mxu0
      %v552 = vpop.f32.mrf.mxu0
      %v553 = vadd.f32 %v388, %v552
      %v554 = vpop.f32.mrf.mxu0
      %555 = vmatprep.mubr.bf16.mxu0 0
      %556 = vmatmul.mubr.bf16.gmra.mxu0 %v413
      %v557 = vpop.f32.mrf.mxu0
      %v558 = vadd.f32 %v388, %v557
      %v559 = vpop.f32.mrf.mxu0
      %v560 = vpop.f32.mrf.mxu0
      %v561 = vadd.f32 %v388, %v560
      %v562 = vpop.f32.mrf.mxu0
      %563 = vmatprep.mubr.bf16.mxu0 0
      %564 = vmatmul.mubr.bf16.gmra.mxu0 %v416
      %v565 = vpop.f32.mrf.mxu0
      %v566 = vadd.f32 %v388, %v565
      %v567 = vpop.f32.mrf.mxu0
      %v568 = vpop.f32.mrf.mxu0
      %v569 = vadd.f32 %v388, %v568
      %v570 = vpop.f32.mrf.mxu0
      %571 = vmatprep.mubr.bf16.mxu0 0
      %572 = vmatmul.mubr.bf16.gmra.mxu0 %v419
      %v573 = vpop.f32.mrf.mxu0
      %v574 = vadd.f32 %v388, %v573
      %v575 = vpop.f32.mrf.mxu0
      %v576 = vpop.f32.mrf.mxu0
      %v577 = vadd.f32 %v388, %v576
      %v578 = vpop.f32.mrf.mxu0
      %579 = vmatprep.mubr.bf16.mxu0 0
      %580 = vmatmul.mubr.bf16.gmra.mxu0 %v422
      %v581 = vpop.f32.mrf.mxu0
      %v582 = vadd.f32 %v388, %v581
      %v583 = vpop.f32.mrf.mxu0
      %v584 = vpop.f32.mrf.mxu0
      %v585 = vadd.f32 %v388, %v584
      %v586 = vpop.f32.mrf.mxu0
      %587 = vmatprep.mubr.bf16.mxu0 0
      %588 = vmatmul.mubr.bf16.gmra.mxu0 %v425
      %v589 = vpop.f32.mrf.mxu0
      %v590 = vadd.f32 %v388, %v589
      %v591 = vpop.f32.mrf.mxu0
      %v592 = vpop.f32.mrf.mxu0
      %v593 = vadd.f32 %v388, %v592
      %v594 = vpop.f32.mrf.mxu0
      %595 = vmatprep.mubr.bf16.mxu0 0
      %596 = vmatmul.mubr.bf16.gmra.mxu0 %v428
      %v597 = vpop.f32.mrf.mxu0
      %v598 = vadd.f32 %v388, %v597
      %v599 = vpop.f32.mrf.mxu0
      %v600 = vpop.f32.mrf.mxu0
      %v601 = vadd.f32 %v388, %v600
      %v602 = vpop.f32.mrf.mxu0
      %603 = vmatprep.mubr.bf16.mxu0 0
      %604 = vmatmul.mubr.bf16.gmra.mxu0 %v431
      %v605 = vpop.f32.mrf.mxu0
      %v606 = vadd.f32 %v388, %v605
      %v607 = vpop.f32.mrf.mxu0
      %v608 = vpop.f32.mrf.mxu0
      %v609 = vadd.f32 %v388, %v608
      %v610 = vpop.f32.mrf.mxu0
      %611 = vmatprep.mubr.bf16.mxu0 0
      %612 = vmatmul.mubr.bf16.gmra.mxu0 %v434
      %v613 = vpop.f32.mrf.mxu0
      %v614 = vadd.f32 %v388, %v613
      %v615 = vpop.f32.mrf.mxu0
      %v616 = vpop.f32.mrf.mxu0
      %v617 = vadd.f32 %v388, %v616
      %v618 = vpop.f32.mrf.mxu0
      %619 = vmatprep.mubr.bf16.mxu0 0
      %620 = vmatmul.mubr.bf16.gmra.mxu0 %v437
      %v621 = vpop.f32.mrf.mxu0
      %v622 = vadd.f32 %v388, %v621
      %v623 = vpop.f32.mrf.mxu0
      %v624 = vpop.f32.mrf.mxu0
      %v625 = vadd.f32 %v388, %v624
      %v626 = vpop.f32.mrf.mxu0
      %627 = vmatprep.mubr.bf16.mxu0 0
      %628 = vmatmul.mubr.bf16.gmra.mxu0 %v440
      %v629 = vpop.f32.mrf.mxu0
      %v630 = vadd.f32 %v388, %v629
      %v631 = vpop.f32.mrf.mxu0
      %v632 = vpop.f32.mrf.mxu0
      %v633 = vadd.f32 %v388, %v632
      %v634 = vpop.f32.mrf.mxu0
      %635 = vmatprep.mubr.bf16.mxu0 0
      %636 = vmatmul.mubr.bf16.gmra.mxu0 %v443
      %v637 = vpop.f32.mrf.mxu0
      %v638 = vadd.f32 %v388, %v637
      %v639 = vpop.f32.mrf.mxu0
      %v640 = vpop.f32.mrf.mxu0
      %v641 = vadd.f32 %v388, %v640
      %v642 = vpop.f32.mrf.mxu0
      %643 = vmatprep.mubr.bf16.mxu0 0
      %644 = vmatmul.mubr.bf16.gmra.mxu0 %v446
      %v645 = vpop.f32.mrf.mxu0
      %v646 = vadd.f32 %v388, %v645
      %v647 = vpop.f32.mrf.mxu0
      %v648 = vpop.f32.mrf.mxu0
      %v649 = vadd.f32 %v388, %v648
      %v650 = vpop.f32.mrf.mxu0
      %651 = vmatprep.mubr.bf16.mxu0 0
      %652 = vmatmul.mubr.bf16.gmra.mxu0 %v449
      %v653 = vpop.f32.mrf.mxu0
      %v654 = vadd.f32 %v388, %v653
      %v655 = vpop.f32.mrf.mxu0
      %v656 = vpop.f32.mrf.mxu0
      %v657 = vadd.f32 %v388, %v656
      %v658 = vpop.f32.mrf.mxu0
      %659 = vmatprep.mubr.bf16.mxu0 0
      %660 = vmatmul.mubr.bf16.gmra.mxu0 %v452
      %v661 = vpop.f32.mrf.mxu0
      %v662 = vadd.f32 %v388, %v661
      %v663 = vpop.f32.mrf.mxu0
      %v664 = vpop.f32.mrf.mxu0
      %v665 = vadd.f32 %v388, %v664
      %v666 = vpop.f32.mrf.mxu0
      %667 = vmatprep.mubr.bf16.mxu0 0
      %668 = vmatmul.mubr.bf16.gmra.mxu0 %v455
      %v669 = vpop.f32.mrf.mxu0
      %v670 = vadd.f32 %v388, %v669
      %v671 = vpop.f32.mrf.mxu0
      %v672 = vpop.f32.mrf.mxu0
      %v673 = vadd.f32 %v388, %v672
      %v674 = vpop.f32.mrf.mxu0
      %675 = vmatprep.mubr.bf16.mxu0 0
      %676 = vmatmul.mubr.bf16.gmra.mxu0 %v458
      %v677 = vpop.f32.mrf.mxu0
      %v678 = vadd.f32 %v388, %v677
      %v679 = vpop.f32.mrf.mxu0
      %v680 = vpop.f32.mrf.mxu0
      %v681 = vadd.f32 %v388, %v680
      %v682 = vpop.f32.mrf.mxu0
      %683 = vmatprep.mubr.bf16.mxu0 0
      %684 = vmatmul.mubr.bf16.gmra.mxu0 %v461
      %v685 = vpop.f32.mrf.mxu0
      %v686 = vadd.f32 %v388, %v685
      %v687 = vpop.f32.mrf.mxu0
      %v688 = vpop.f32.mrf.mxu0
      %v689 = vadd.f32 %v388, %v688
      %v690 = vpop.f32.mrf.mxu0
      %691 = vmatprep.mubr.bf16.mxu0 0
      %692 = vmatmul.mubr.bf16.gmra.mxu0 %v464
      %v693 = vpop.f32.mrf.mxu0
      %v694 = vadd.f32 %v388, %v693
      %v695 = vpop.f32.mrf.mxu0
      %v696 = vpop.f32.mrf.mxu0
      %v697 = vadd.f32 %v388, %v696
      %v698 = vpop.f32.mrf.mxu0
      %699 = vmatprep.mubr.bf16.mxu0 0
      %700 = vmatmul.mubr.bf16.gmra.mxu0 %v467
      %v701 = vpop.f32.mrf.mxu0
      %v702 = vadd.f32 %v388, %v701
      %v703 = vpop.f32.mrf.mxu0
      %v704 = vpop.f32.mrf.mxu0
      %v705 = vadd.f32 %v388, %v704
      %v706 = vpop.f32.mrf.mxu0
      %707 = vmatprep.mubr.bf16.mxu0 0
      %708 = vmatmul.mubr.bf16.gmra.mxu0 %v470
      %v709 = vpop.f32.mrf.mxu0
      %v710 = vadd.f32 %v388, %v709
      %v711 = vpop.f32.mrf.mxu0
      %v712 = vpop.f32.mrf.mxu0
      %v713 = vadd.f32 %v388, %v712
      %v714 = vpop.f32.mrf.mxu0
      %715 = vmatprep.mubr.bf16.mxu0 0
      %716 = vmatmul.mubr.bf16.gmra.mxu0 %v473
      %v717 = vpop.f32.mrf.mxu0
      %v718 = vadd.f32 %v388, %v717
      %v719 = vpop.f32.mrf.mxu0
      %v720 = vpop.f32.mrf.mxu0
      %v721 = vadd.f32 %v388, %v720
      %v722 = vpop.f32.mrf.mxu0
      %723 = vmatprep.mubr.bf16.mxu0 0
      %724 = vmatmul.mubr.bf16.gmra.mxu0 %v476
      %v725 = vpop.f32.mrf.mxu0
      %v726 = vadd.f32 %v388, %v725
      %v727 = vpop.f32.mrf.mxu0
      %v728 = vpop.f32.mrf.mxu0
      %v729 = vadd.f32 %v388, %v728
      %v730 = vpop.f32.mrf.mxu0
      %731 = vmatprep.mubr.bf16.mxu0 0
      %732 = vmatmul.mubr.bf16.gmra.mxu0 %v479
      %v733 = vpop.f32.mrf.mxu0
      %v734 = vadd.f32 %v388, %v733
      %v735 = vpop.f32.mrf.mxu0
      %v736 = vpop.f32.mrf.mxu0
      %v737 = vadd.f32 %v388, %v736
      %v738 = vpop.f32.mrf.mxu0
      %739 = vmatprep.mubr.bf16.mxu0 0
      %740 = vmatmul.mubr.bf16.gmra.mxu0 %v482
      %v741 = vpop.f32.mrf.mxu0
      %v742 = vadd.f32 %v388, %v741
      %v743 = vpop.f32.mrf.mxu0
      %v744 = vpop.f32.mrf.mxu0
      %v745 = vadd.f32 %v388, %v744
      %v746 = vpop.f32.mrf.mxu0
      %747 = vmatprep.mubr.bf16.mxu0 0
      %748 = vmatmul.mubr.bf16.gmra.mxu0 %v485
      %v749 = vpop.f32.mrf.mxu0
      %v750 = vadd.f32 %v388, %v749
      %v751 = vpop.f32.mrf.mxu0
      %v752 = vpop.f32.mrf.mxu0
      %v753 = vadd.f32 %v388, %v752
      %v754 = vpop.f32.mrf.mxu0
      %755 = vmatprep.mubr.bf16.mxu0 0
      %756 = vmatmul.mubr.bf16.gmra.mxu0 %v488
      %v757 = vpop.f32.mrf.mxu0
      %v758 = vadd.f32 %v388, %v757
      %v759 = vpop.f32.mrf.mxu0
      %v760 = vpop.f32.mrf.mxu0
      %v761 = vadd.f32 %v388, %v760
      %v762 = vpop.f32.mrf.mxu0
      %763 = vmatprep.mubr.bf16.mxu0 0
      %764 = vmatmul.mubr.bf16.gmra.mxu0 %v491
      %v765 = vpop.f32.mrf.mxu0
      %v766 = vadd.f32 %v388, %v765
      %v767 = vpop.f32.mrf.mxu0
      %v768 = vpop.f32.mrf.mxu0
      %v769 = vadd.f32 %v388, %v768
      %v770 = vpop.f32.mrf.mxu0
      %771 = vmatprep.mubr.bf16.mxu0 0
      %772 = vmatmul.mubr.bf16.gmra.mxu0 %v494
      %v773 = vpop.f32.mrf.mxu0
      %v774 = vadd.f32 %v388, %v773
      %v775 = vpop.f32.mrf.mxu0
      %v776 = vpop.f32.mrf.mxu0
      %v777 = vadd.f32 %v388, %v776
      %v778 = vpop.f32.mrf.mxu0
      %779 = vmatprep.mubr.bf16.mxu0 0
      %780 = vmatmul.mubr.bf16.gmra.mxu0 %v497
      %v781 = vpop.f32.mrf.mxu0
      %v782 = vadd.f32 %v388, %v781
      %v783 = vpop.f32.mrf.mxu0
      %v784 = vpop.f32.mrf.mxu0
      %v785 = vadd.f32 %v388, %v784
      %v786 = vpop.f32.mrf.mxu0
      %787 = vdwg.mxu0
      %v788 = vmax.f32 %v534, 0.0
      %v789 = vmax.f32 %v537, 0.0
      %v790 = vmax.f32 %v542, 0.0
      %v791 = vmax.f32 %v545, 0.0
      %v792 = vmax.f32 %v550, 0.0
      %v793 = vmax.f32 %v553, 0.0
      %v794 = vmax.f32 %v558, 0.0
      %v795 = vmax.f32 %v561, 0.0
      %v796 = vmax.f32 %v566, 0.0
      %v797 = vmax.f32 %v569, 0.0
      %v798 = vmax.f32 %v574, 0.0
      %v799 = vmax.f32 %v577, 0.0
      %v800 = vmax.f32 %v582, 0.0
      %v801 = vmax.f32 %v585, 0.0
      %v802 = vmax.f32 %v590, 0.0
      %v803 = vmax.f32 %v593, 0.0
      %v804 = vmax.f32 %v598, 0.0
      %v805 = vmax.f32 %v601, 0.0
      %v806 = vmax.f32 %v606, 0.0
      %v807 = vmax.f32 %v609, 0.0
      %v808 = vmax.f32 %v614, 0.0
      %v809 = vmax.f32 %v617, 0.0
      %v810 = vmax.f32 %v622, 0.0
      %v811 = vmax.f32 %v625, 0.0
      %v812 = vmax.f32 %v630, 0.0
      %v813 = vmax.f32 %v633, 0.0
      %v814 = vmax.f32 %v638, 0.0
      %v815 = vmax.f32 %v641, 0.0
      %v816 = vmax.f32 %v646, 0.0
      %v817 = vmax.f32 %v649, 0.0
      %v818 = vmax.f32 %v654, 0.0
      %v819 = vmax.f32 %v657, 0.0
      %v820 = vmax.f32 %v662, 0.0
      %v821 = vmax.f32 %v665, 0.0
      %v822 = vmax.f32 %v670, 0.0
      %v823 = vmax.f32 %v673, 0.0
      %v824 = vmax.f32 %v678, 0.0
      %v825 = vmax.f32 %v681, 0.0
      %v826 = vmax.f32 %v686, 0.0
      %v827 = vmax.f32 %v689, 0.0
      %v828 = vmax.f32 %v694, 0.0
      %v829 = vmax.f32 %v697, 0.0
      %v830 = vmax.f32 %v702, 0.0
      %v831 = vmax.f32 %v705, 0.0
      %v832 = vmax.f32 %v710, 0.0
      %v833 = vmax.f32 %v713, 0.0
      %v834 = vmax.f32 %v718, 0.0
      %v835 = vmax.f32 %v721, 0.0
      %v836 = vmax.f32 %v726, 0.0
      %v837 = vmax.f32 %v729, 0.0
      %v838 = vmax.f32 %v734, 0.0
      %v839 = vmax.f32 %v737, 0.0
      %v840 = vmax.f32 %v742, 0.0
      %v841 = vmax.f32 %v745, 0.0
      %v842 = vmax.f32 %v750, 0.0
      %v843 = vmax.f32 %v753, 0.0
      %v844 = vmax.f32 %v758, 0.0
      %v845 = vmax.f32 %v761, 0.0
      %v846 = vmax.f32 %v766, 0.0
      %v847 = vmax.f32 %v769, 0.0
      %v848 = vmax.f32 %v774, 0.0
      %v849 = vmax.f32 %v777, 0.0
      %v850 = vmax.f32 %v782, 0.0
      %v851 = vmax.f32 %v785, 0.0
      %v852 = vpack.c.bf16 %v789, %v788
      %v853 = vpack.c.bf16 %v791, %v790
      %v854 = vpack.c.bf16 %v793, %v792
      %v855 = vpack.c.bf16 %v795, %v794
      %v856 = vpack.c.bf16 %v797, %v796
      %v857 = vpack.c.bf16 %v799, %v798
      %v858 = vpack.c.bf16 %v801, %v800
      %v859 = vpack.c.bf16 %v803, %v802
      %v860 = vpack.c.bf16 %v805, %v804
      %v861 = vpack.c.bf16 %v807, %v806
      %v862 = vpack.c.bf16 %v809, %v808
      %v863 = vpack.c.bf16 %v811, %v810
      %v864 = vpack.c.bf16 %v813, %v812
      %v865 = vpack.c.bf16 %v815, %v814
      %v866 = vpack.c.bf16 %v817, %v816
      %v867 = vpack.c.bf16 %v819, %v818
      %v868 = vpack.c.bf16 %v821, %v820
      %v869 = vpack.c.bf16 %v823, %v822
      %v870 = vpack.c.bf16 %v825, %v824
      %v871 = vpack.c.bf16 %v827, %v826
      %v872 = vpack.c.bf16 %v829, %v828
      %v873 = vpack.c.bf16 %v831, %v830
      %v874 = vpack.c.bf16 %v833, %v832
      %v875 = vpack.c.bf16 %v835, %v834
      %v876 = vpack.c.bf16 %v837, %v836
      %v877 = vpack.c.bf16 %v839, %v838
      %v878 = vpack.c.bf16 %v841, %v840
      %v879 = vpack.c.bf16 %v843, %v842
      %v880 = vpack.c.bf16 %v845, %v844
      %v881 = vpack.c.bf16 %v847, %v846
      %v882 = vpack.c.bf16 %v849, %v848
      %v883 = vpack.c.bf16 %v851, %v850
      %v884 = vld [vmem:[%s3] sm:$0xf]
      %v885 = vld [vmem:[%s3 + $0x4] sm:$0xf]
      %v886 = vld [vmem:[%s3 + $0x8] sm:$0xf]
      %v887 = vld [vmem:[%s3 + $0xc] sm:$0xf]
      %v888 = vld [vmem:[%s3 + $0x10] sm:$0xf]
      %v889 = vld [vmem:[%s3 + $0x14] sm:$0xf]
      %v890 = vld [vmem:[%s3 + $0x18] sm:$0xf]
      %v891 = vld [vmem:[%s3 + $0x1c] sm:$0xf]
      %v892 = vld [vmem:[%s3 + $0x20] sm:$0xf]
      %v893 = vld [vmem:[%s3 + $0x24] sm:$0xf]
      %v894 = vld [vmem:[%s3 + $0x28] sm:$0xf]
      %v895 = vld [vmem:[%s3 + $0x2c] sm:$0xf]
      %v896 = vld [vmem:[%s3 + $0x30] sm:$0xf]
      %v897 = vld [vmem:[%s3 + $0x34] sm:$0xf]
      %v898 = vld [vmem:[%s3 + $0x38] sm:$0xf]
      %v899 = vld [vmem:[%s3 + $0x3c] sm:$0xf]
      %v900 = vld [vmem:[%s4] sm:$0x1]
      %v902 = vlaneseq
      %v903 = vshrl.u32 %v902, 7
      %v904 = vsub.s32 0, %v903
      %v905 = vrot.slane %v900, %v904
      %v923 = vunpack.c.l.b16 %v884
      %v924 = vunpack.c.l.b16 %v885
      %v925 = vunpack.c.l.b16 %v886
      %v926 = vunpack.c.l.b16 %v887
      %v927 = vunpack.c.l.b16 %v888
      %v928 = vunpack.c.l.b16 %v889
      %v929 = vunpack.c.l.b16 %v890
      %v930 = vunpack.c.l.b16 %v891
      %v931 = vunpack.c.l.b16 %v892
      %v932 = vunpack.c.l.b16 %v893
      %v933 = vunpack.c.l.b16 %v894
      %v934 = vunpack.c.l.b16 %v895
      %v935 = vunpack.c.l.b16 %v896
      %v936 = vunpack.c.l.b16 %v897
      %v937 = vunpack.c.l.b16 %v898
      %v938 = vunpack.c.l.b16 %v899
      %v939 = vpack.c.b16 %v924, %v923
      %v940 = vpack.c.b16 %v926, %v925
      %v941 = vpack.c.b16 %v928, %v927
      %v942 = vpack.c.b16 %v930, %v929
      %v943 = vpack.c.b16 %v932, %v931
      %v944 = vpack.c.b16 %v934, %v933
      %v945 = vpack.c.b16 %v936, %v935
      %v946 = vpack.c.b16 %v938, %v937
      %955 = vmatprep.subr.bf16.mxu0 0
      %956 = vmatpush1.bf16.msra.mxu0 %v946
      %957 = vmatprep.subr.bf16.mxu0 0
      %958 = vmatpush1.bf16.msra.mxu0 %v945
      %959 = vmatprep.subr.bf16.mxu0 0
      %960 = vmatpush1.bf16.msra.mxu0 %v944
      %961 = vmatprep.subr.bf16.mxu0 0
      %962 = vmatpush1.bf16.msra.mxu0 %v943
      %963 = vmatprep.subr.bf16.mxu0 0
      %964 = vmatpush1.bf16.msra.mxu0 %v942
      %965 = vmatprep.subr.bf16.mxu0 0
      %966 = vmatpush1.bf16.msra.mxu0 %v941
      %967 = vmatprep.subr.bf16.mxu0 0
      %968 = vmatpush1.bf16.msra.mxu0 %v940
      %969 = vmatprep.subr.bf16.mxu0 0
      %970 = vmatpush1.bf16.msra.mxu0 %v939
      %971 = vmatprep.subr.bf16.mxu0 0
      %972 = vmatpush2.bf16.msra.mxu0 0
      %973 = vmatprep.subr.bf16.mxu0 0
      %974 = vmatpush2.bf16.msra.mxu0 0
      %975 = vmatprep.subr.bf16.mxu0 0
      %976 = vmatpush2.bf16.msra.mxu0 0
      %977 = vmatprep.subr.bf16.mxu0 0
      %978 = vmatpush2.bf16.msra.mxu0 0
      %979 = vmatprep.subr.bf16.mxu0 0
      %980 = vmatpush2.bf16.msra.mxu0 0
      %981 = vmatprep.subr.bf16.mxu0 0
      %982 = vmatpush2.bf16.msra.mxu0 0
      %983 = vmatprep.subr.bf16.mxu0 0
      %984 = vmatpush2.bf16.msra.mxu0 0
      %985 = vmatprep.subr.bf16.mxu0 0
      %986 = vmatpush2.bf16.msra.mxu0 0
      %987 = vmatprep.mubr.bf16.mxu0 0
      %988 = vmatmul.mubr.bf16.gmra.mxu0 %v852
      %v989 = vpop.f32.mrf.mxu0
      %v990 = vadd.f32 %v905, %v989
      %v991 = vpop.f32.mrf.mxu0
      %v992 = vpop.f32.mrf.mxu0
      %v993 = vadd.f32 %v905, %v992
      %v994 = vpop.f32.mrf.mxu0
      %995 = vmatprep.mubr.bf16.mxu0 0
      %996 = vmatmul.mubr.bf16.gmra.mxu0 %v853
      %v997 = vpop.f32.mrf.mxu0
      %v998 = vadd.f32 %v905, %v997
      %v999 = vpop.f32.mrf.mxu0
      %v1000 = vpop.f32.mrf.mxu0
      %v1001 = vadd.f32 %v905, %v1000
      %v1002 = vpop.f32.mrf.mxu0
      %1003 = vmatprep.mubr.bf16.mxu0 0
      %1004 = vmatmul.mubr.bf16.gmra.mxu0 %v854
      %v1005 = vpop.f32.mrf.mxu0
      %v1006 = vadd.f32 %v905, %v1005
      %v1007 = vpop.f32.mrf.mxu0
      %v1008 = vpop.f32.mrf.mxu0
      %v1009 = vadd.f32 %v905, %v1008
      %v1010 = vpop.f32.mrf.mxu0
      %1011 = vmatprep.mubr.bf16.mxu0 0
      %1012 = vmatmul.mubr.bf16.gmra.mxu0 %v855
      %v1013 = vpop.f32.mrf.mxu0
      %v1014 = vadd.f32 %v905, %v1013
      %v1015 = vpop.f32.mrf.mxu0
      %v1016 = vpop.f32.mrf.mxu0
      %v1017 = vadd.f32 %v905, %v1016
      %v1018 = vpop.f32.mrf.mxu0
      %1019 = vmatprep.mubr.bf16.mxu0 0
      %1020 = vmatmul.mubr.bf16.gmra.mxu0 %v856
      %v1021 = vpop.f32.mrf.mxu0
      %v1022 = vadd.f32 %v905, %v1021
      %v1023 = vpop.f32.mrf.mxu0
      %v1024 = vpop.f32.mrf.mxu0
      %v1025 = vadd.f32 %v905, %v1024
      %v1026 = vpop.f32.mrf.mxu0
      %1027 = vmatprep.mubr.bf16.mxu0 0
      %1028 = vmatmul.mubr.bf16.gmra.mxu0 %v857
      %v1029 = vpop.f32.mrf.mxu0
      %v1030 = vadd.f32 %v905, %v1029
      %v1031 = vpop.f32.mrf.mxu0
      %v1032 = vpop.f32.mrf.mxu0
      %v1033 = vadd.f32 %v905, %v1032
      %v1034 = vpop.f32.mrf.mxu0
      %1035 = vmatprep.mubr.bf16.mxu0 0
      %1036 = vmatmul.mubr.bf16.gmra.mxu0 %v858
      %v1037 = vpop.f32.mrf.mxu0
      %v1038 = vadd.f32 %v905, %v1037
      %v1039 = vpop.f32.mrf.mxu0
      %v1040 = vpop.f32.mrf.mxu0
      %v1041 = vadd.f32 %v905, %v1040
      %v1042 = vpop.f32.mrf.mxu0
      %1043 = vmatprep.mubr.bf16.mxu0 0
      %1044 = vmatmul.mubr.bf16.gmra.mxu0 %v859
      %v1045 = vpop.f32.mrf.mxu0
      %v1046 = vadd.f32 %v905, %v1045
      %v1047 = vpop.f32.mrf.mxu0
      %v1048 = vpop.f32.mrf.mxu0
      %v1049 = vadd.f32 %v905, %v1048
      %v1050 = vpop.f32.mrf.mxu0
      %1051 = vmatprep.mubr.bf16.mxu0 0
      %1052 = vmatmul.mubr.bf16.gmra.mxu0 %v860
      %v1053 = vpop.f32.mrf.mxu0
      %v1054 = vadd.f32 %v905, %v1053
      %v1055 = vpop.f32.mrf.mxu0
      %v1056 = vpop.f32.mrf.mxu0
      %v1057 = vadd.f32 %v905, %v1056
      %v1058 = vpop.f32.mrf.mxu0
      %1059 = vmatprep.mubr.bf16.mxu0 0
      %1060 = vmatmul.mubr.bf16.gmra.mxu0 %v861
      %v1061 = vpop.f32.mrf.mxu0
      %v1062 = vadd.f32 %v905, %v1061
      %v1063 = vpop.f32.mrf.mxu0
      %v1064 = vpop.f32.mrf.mxu0
      %v1065 = vadd.f32 %v905, %v1064
      %v1066 = vpop.f32.mrf.mxu0
      %1067 = vmatprep.mubr.bf16.mxu0 0
      %1068 = vmatmul.mubr.bf16.gmra.mxu0 %v862
      %v1069 = vpop.f32.mrf.mxu0
      %v1070 = vadd.f32 %v905, %v1069
      %v1071 = vpop.f32.mrf.mxu0
      %v1072 = vpop.f32.mrf.mxu0
      %v1073 = vadd.f32 %v905, %v1072
      %v1074 = vpop.f32.mrf.mxu0
      %1075 = vmatprep.mubr.bf16.mxu0 0
      %1076 = vmatmul.mubr.bf16.gmra.mxu0 %v863
      %v1077 = vpop.f32.mrf.mxu0
      %v1078 = vadd.f32 %v905, %v1077
      %v1079 = vpop.f32.mrf.mxu0
      %v1080 = vpop.f32.mrf.mxu0
      %v1081 = vadd.f32 %v905, %v1080
      %v1082 = vpop.f32.mrf.mxu0
      %1083 = vmatprep.mubr.bf16.mxu0 0
      %1084 = vmatmul.mubr.bf16.gmra.mxu0 %v864
      %v1085 = vpop.f32.mrf.mxu0
      %v1086 = vadd.f32 %v905, %v1085
      %v1087 = vpop.f32.mrf.mxu0
      %v1088 = vpop.f32.mrf.mxu0
      %v1089 = vadd.f32 %v905, %v1088
      %v1090 = vpop.f32.mrf.mxu0
      %1091 = vmatprep.mubr.bf16.mxu0 0
      %1092 = vmatmul.mubr.bf16.gmra.mxu0 %v865
      %v1093 = vpop.f32.mrf.mxu0
      %v1094 = vadd.f32 %v905, %v1093
      %v1095 = vpop.f32.mrf.mxu0
      %v1096 = vpop.f32.mrf.mxu0
      %v1097 = vadd.f32 %v905, %v1096
      %v1098 = vpop.f32.mrf.mxu0
      %1099 = vmatprep.mubr.bf16.mxu0 0
      %1100 = vmatmul.mubr.bf16.gmra.mxu0 %v866
      %v1101 = vpop.f32.mrf.mxu0
      %v1102 = vadd.f32 %v905, %v1101
      %v1103 = vpop.f32.mrf.mxu0
      %v1104 = vpop.f32.mrf.mxu0
      %v1105 = vadd.f32 %v905, %v1104
      %v1106 = vpop.f32.mrf.mxu0
      %1107 = vmatprep.mubr.bf16.mxu0 0
      %1108 = vmatmul.mubr.bf16.gmra.mxu0 %v867
      %v1109 = vpop.f32.mrf.mxu0
      %v1110 = vadd.f32 %v905, %v1109
      %v1111 = vpop.f32.mrf.mxu0
      %v1112 = vpop.f32.mrf.mxu0
      %v1113 = vadd.f32 %v905, %v1112
      %v1114 = vpop.f32.mrf.mxu0
      %1115 = vmatprep.mubr.bf16.mxu0 0
      %1116 = vmatmul.mubr.bf16.gmra.mxu0 %v868
      %v1117 = vpop.f32.mrf.mxu0
      %v1118 = vadd.f32 %v905, %v1117
      %v1119 = vpop.f32.mrf.mxu0
      %v1120 = vpop.f32.mrf.mxu0
      %v1121 = vadd.f32 %v905, %v1120
      %v1122 = vpop.f32.mrf.mxu0
      %1123 = vmatprep.mubr.bf16.mxu0 0
      %1124 = vmatmul.mubr.bf16.gmra.mxu0 %v869
      %v1125 = vpop.f32.mrf.mxu0
      %v1126 = vadd.f32 %v905, %v1125
      %v1127 = vpop.f32.mrf.mxu0
      %v1128 = vpop.f32.mrf.mxu0
      %v1129 = vadd.f32 %v905, %v1128
      %v1130 = vpop.f32.mrf.mxu0
      %1131 = vmatprep.mubr.bf16.mxu0 0
      %1132 = vmatmul.mubr.bf16.gmra.mxu0 %v870
      %v1133 = vpop.f32.mrf.mxu0
      %v1134 = vadd.f32 %v905, %v1133
      %v1135 = vpop.f32.mrf.mxu0
      %v1136 = vpop.f32.mrf.mxu0
      %v1137 = vadd.f32 %v905, %v1136
      %v1138 = vpop.f32.mrf.mxu0
      %1139 = vmatprep.mubr.bf16.mxu0 0
      %1140 = vmatmul.mubr.bf16.gmra.mxu0 %v871
      %v1141 = vpop.f32.mrf.mxu0
      %v1142 = vadd.f32 %v905, %v1141
      %v1143 = vpop.f32.mrf.mxu0
      %v1144 = vpop.f32.mrf.mxu0
      %v1145 = vadd.f32 %v905, %v1144
      %v1146 = vpop.f32.mrf.mxu0
      %1147 = vmatprep.mubr.bf16.mxu0 0
      %1148 = vmatmul.mubr.bf16.gmra.mxu0 %v872
      %v1149 = vpop.f32.mrf.mxu0
      %v1150 = vadd.f32 %v905, %v1149
      %v1151 = vpop.f32.mrf.mxu0
      %v1152 = vpop.f32.mrf.mxu0
      %v1153 = vadd.f32 %v905, %v1152
      %v1154 = vpop.f32.mrf.mxu0
      %1155 = vmatprep.mubr.bf16.mxu0 0
      %1156 = vmatmul.mubr.bf16.gmra.mxu0 %v873
      %v1157 = vpop.f32.mrf.mxu0
      %v1158 = vadd.f32 %v905, %v1157
      %v1159 = vpop.f32.mrf.mxu0
      %v1160 = vpop.f32.mrf.mxu0
      %v1161 = vadd.f32 %v905, %v1160
      %v1162 = vpop.f32.mrf.mxu0
      %1163 = vmatprep.mubr.bf16.mxu0 0
      %1164 = vmatmul.mubr.bf16.gmra.mxu0 %v874
      %v1165 = vpop.f32.mrf.mxu0
      %v1166 = vadd.f32 %v905, %v1165
      %v1167 = vpop.f32.mrf.mxu0
      %v1168 = vpop.f32.mrf.mxu0
      %v1169 = vadd.f32 %v905, %v1168
      %v1170 = vpop.f32.mrf.mxu0
      %1171 = vmatprep.mubr.bf16.mxu0 0
      %1172 = vmatmul.mubr.bf16.gmra.mxu0 %v875
      %v1173 = vpop.f32.mrf.mxu0
      %v1174 = vadd.f32 %v905, %v1173
      %v1175 = vpop.f32.mrf.mxu0
      %v1176 = vpop.f32.mrf.mxu0
      %v1177 = vadd.f32 %v905, %v1176
      %v1178 = vpop.f32.mrf.mxu0
      %1179 = vmatprep.mubr.bf16.mxu0 0
      %1180 = vmatmul.mubr.bf16.gmra.mxu0 %v876
      %v1181 = vpop.f32.mrf.mxu0
      %v1182 = vadd.f32 %v905, %v1181
      %v1183 = vpop.f32.mrf.mxu0
      %v1184 = vpop.f32.mrf.mxu0
      %v1185 = vadd.f32 %v905, %v1184
      %v1186 = vpop.f32.mrf.mxu0
      %1187 = vmatprep.mubr.bf16.mxu0 0
      %1188 = vmatmul.mubr.bf16.gmra.mxu0 %v877
      %v1189 = vpop.f32.mrf.mxu0
      %v1190 = vadd.f32 %v905, %v1189
      %v1191 = vpop.f32.mrf.mxu0
      %v1192 = vpop.f32.mrf.mxu0
      %v1193 = vadd.f32 %v905, %v1192
      %v1194 = vpop.f32.mrf.mxu0
      %1195 = vmatprep.mubr.bf16.mxu0 0
      %1196 = vmatmul.mubr.bf16.gmra.mxu0 %v878
      %v1197 = vpop.f32.mrf.mxu0
      %v1198 = vadd.f32 %v905, %v1197
      %v1199 = vpop.f32.mrf.mxu0
      %v1200 = vpop.f32.mrf.mxu0
      %v1201 = vadd.f32 %v905, %v1200
      %v1202 = vpop.f32.mrf.mxu0
      %1203 = vmatprep.mubr.bf16.mxu0 0
      %1204 = vmatmul.mubr.bf16.gmra.mxu0 %v879
      %v1205 = vpop.f32.mrf.mxu0
      %v1206 = vadd.f32 %v905, %v1205
      %v1207 = vpop.f32.mrf.mxu0
      %v1208 = vpop.f32.mrf.mxu0
      %v1209 = vadd.f32 %v905, %v1208
      %v1210 = vpop.f32.mrf.mxu0
      %1211 = vmatprep.mubr.bf16.mxu0 0
      %1212 = vmatmul.mubr.bf16.gmra.mxu0 %v880
      %v1213 = vpop.f32.mrf.mxu0
      %v1214 = vadd.f32 %v905, %v1213
      %v1215 = vpop.f32.mrf.mxu0
      %v1216 = vpop.f32.mrf.mxu0
      %v1217 = vadd.f32 %v905, %v1216
      %v1218 = vpop.f32.mrf.mxu0
      %1219 = vmatprep.mubr.bf16.mxu0 0
      %1220 = vmatmul.mubr.bf16.gmra.mxu0 %v881
      %v1221 = vpop.f32.mrf.mxu0
      %v1222 = vadd.f32 %v905, %v1221
      %v1223 = vpop.f32.mrf.mxu0
      %v1224 = vpop.f32.mrf.mxu0
      %v1225 = vadd.f32 %v905, %v1224
      %v1226 = vpop.f32.mrf.mxu0
      %1227 = vmatprep.mubr.bf16.mxu0 0
      %1228 = vmatmul.mubr.bf16.gmra.mxu0 %v882
      %v1229 = vpop.f32.mrf.mxu0
      %v1230 = vadd.f32 %v905, %v1229
      %v1231 = vpop.f32.mrf.mxu0
      %v1232 = vpop.f32.mrf.mxu0
      %v1233 = vadd.f32 %v905, %v1232
      %v1234 = vpop.f32.mrf.mxu0
      %1235 = vmatprep.mubr.bf16.mxu0 0
      %1236 = vmatmul.mubr.bf16.gmra.mxu0 %v883
      %v1237 = vpop.f32.mrf.mxu0
      %v1238 = vadd.f32 %v905, %v1237
      %v1239 = vpop.f32.mrf.mxu0
      %v1240 = vpop.f32.mrf.mxu0
      %v1241 = vadd.f32 %v905, %v1240
      %v1242 = vpop.f32.mrf.mxu0
      %1243 = vdwg.mxu0
      %v1244 = vmax.f32 %v990, 0.0
      %v1245 = vmax.f32 %v993, 0.0
      %v1246 = vmax.f32 %v998, 0.0
      %v1247 = vmax.f32 %v1001, 0.0
      %v1248 = vmax.f32 %v1006, 0.0
      %v1249 = vmax.f32 %v1009, 0.0
      %v1250 = vmax.f32 %v1014, 0.0
      %v1251 = vmax.f32 %v1017, 0.0
      %v1252 = vmax.f32 %v1022, 0.0
      %v1253 = vmax.f32 %v1025, 0.0
      %v1254 = vmax.f32 %v1030, 0.0
      %v1255 = vmax.f32 %v1033, 0.0
      %v1256 = vmax.f32 %v1038, 0.0
      %v1257 = vmax.f32 %v1041, 0.0
      %v1258 = vmax.f32 %v1046, 0.0
      %v1259 = vmax.f32 %v1049, 0.0
      %v1260 = vmax.f32 %v1054, 0.0
      %v1261 = vmax.f32 %v1057, 0.0
      %v1262 = vmax.f32 %v1062, 0.0
      %v1263 = vmax.f32 %v1065, 0.0
      %v1264 = vmax.f32 %v1070, 0.0
      %v1265 = vmax.f32 %v1073, 0.0
      %v1266 = vmax.f32 %v1078, 0.0
      %v1267 = vmax.f32 %v1081, 0.0
      %v1268 = vmax.f32 %v1086, 0.0
      %v1269 = vmax.f32 %v1089, 0.0
      %v1270 = vmax.f32 %v1094, 0.0
      %v1271 = vmax.f32 %v1097, 0.0
      %v1272 = vmax.f32 %v1102, 0.0
      %v1273 = vmax.f32 %v1105, 0.0
      %v1274 = vmax.f32 %v1110, 0.0
      %v1275 = vmax.f32 %v1113, 0.0
      %v1276 = vmax.f32 %v1118, 0.0
      %v1277 = vmax.f32 %v1121, 0.0
      %v1278 = vmax.f32 %v1126, 0.0
      %v1279 = vmax.f32 %v1129, 0.0
      %v1280 = vmax.f32 %v1134, 0.0
      %v1281 = vmax.f32 %v1137, 0.0
      %v1282 = vmax.f32 %v1142, 0.0
      %v1283 = vmax.f32 %v1145, 0.0
      %v1284 = vmax.f32 %v1150, 0.0
      %v1285 = vmax.f32 %v1153, 0.0
      %v1286 = vmax.f32 %v1158, 0.0
      %v1287 = vmax.f32 %v1161, 0.0
      %v1288 = vmax.f32 %v1166, 0.0
      %v1289 = vmax.f32 %v1169, 0.0
      %v1290 = vmax.f32 %v1174, 0.0
      %v1291 = vmax.f32 %v1177, 0.0
      %v1292 = vmax.f32 %v1182, 0.0
      %v1293 = vmax.f32 %v1185, 0.0
      %v1294 = vmax.f32 %v1190, 0.0
      %v1295 = vmax.f32 %v1193, 0.0
      %v1296 = vmax.f32 %v1198, 0.0
      %v1297 = vmax.f32 %v1201, 0.0
      %v1298 = vmax.f32 %v1206, 0.0
      %v1299 = vmax.f32 %v1209, 0.0
      %v1300 = vmax.f32 %v1214, 0.0
      %v1301 = vmax.f32 %v1217, 0.0
      %v1302 = vmax.f32 %v1222, 0.0
      %v1303 = vmax.f32 %v1225, 0.0
      %v1304 = vmax.f32 %v1230, 0.0
      %v1305 = vmax.f32 %v1233, 0.0
      %v1306 = vmax.f32 %v1238, 0.0
      %v1307 = vmax.f32 %v1241, 0.0
      %v1308 = vpack.c.bf16 %v1245, %v1244
      %v1309 = vpack.c.bf16 %v1247, %v1246
      %v1310 = vpack.c.bf16 %v1249, %v1248
      %v1311 = vpack.c.bf16 %v1251, %v1250
      %v1312 = vpack.c.bf16 %v1253, %v1252
      %v1313 = vpack.c.bf16 %v1255, %v1254
      %v1314 = vpack.c.bf16 %v1257, %v1256
      %v1315 = vpack.c.bf16 %v1259, %v1258
      %v1316 = vpack.c.bf16 %v1261, %v1260
      %v1317 = vpack.c.bf16 %v1263, %v1262
      %v1318 = vpack.c.bf16 %v1265, %v1264
      %v1319 = vpack.c.bf16 %v1267, %v1266
      %v1320 = vpack.c.bf16 %v1269, %v1268
      %v1321 = vpack.c.bf16 %v1271, %v1270
      %v1322 = vpack.c.bf16 %v1273, %v1272
      %v1323 = vpack.c.bf16 %v1275, %v1274
      %v1324 = vpack.c.bf16 %v1277, %v1276
      %v1325 = vpack.c.bf16 %v1279, %v1278
      %v1326 = vpack.c.bf16 %v1281, %v1280
      %v1327 = vpack.c.bf16 %v1283, %v1282
      %v1328 = vpack.c.bf16 %v1285, %v1284
      %v1329 = vpack.c.bf16 %v1287, %v1286
      %v1330 = vpack.c.bf16 %v1289, %v1288
      %v1331 = vpack.c.bf16 %v1291, %v1290
      %v1332 = vpack.c.bf16 %v1293, %v1292
      %v1333 = vpack.c.bf16 %v1295, %v1294
      %v1334 = vpack.c.bf16 %v1297, %v1296
      %v1335 = vpack.c.bf16 %v1299, %v1298
      %v1336 = vpack.c.bf16 %v1301, %v1300
      %v1337 = vpack.c.bf16 %v1303, %v1302
      %v1338 = vpack.c.bf16 %v1305, %v1304
      %v1339 = vpack.c.bf16 %v1307, %v1306
      %v1340 = vld [vmem:[%s5] sm:$0xf]
      %v1341 = vld [vmem:[%s5 + $0x4] sm:$0xf]
      %v1342 = vld [vmem:[%s5 + $0x8] sm:$0xf]
      %v1343 = vld [vmem:[%s5 + $0xc] sm:$0xf]
      %v1344 = vld [vmem:[%s5 + $0x10] sm:$0xf]
      %v1345 = vld [vmem:[%s5 + $0x14] sm:$0xf]
      %v1346 = vld [vmem:[%s5 + $0x18] sm:$0xf]
      %v1347 = vld [vmem:[%s5 + $0x1c] sm:$0xf]
      %v1348 = vld [vmem:[%s5 + $0x20] sm:$0xf]
      %v1349 = vld [vmem:[%s5 + $0x24] sm:$0xf]
      %v1350 = vld [vmem:[%s5 + $0x28] sm:$0xf]
      %v1351 = vld [vmem:[%s5 + $0x2c] sm:$0xf]
      %v1352 = vld [vmem:[%s5 + $0x30] sm:$0xf]
      %v1353 = vld [vmem:[%s5 + $0x34] sm:$0xf]
      %v1354 = vld [vmem:[%s5 + $0x38] sm:$0xf]
      %v1355 = vld [vmem:[%s5 + $0x3c] sm:$0xf]
      %v1356 = vld [vmem:[%s6] sm:$0x1]
      %v1358 = vlaneseq
      %v1359 = vshrl.u32 %v1358, 7
      %v1360 = vsub.s32 0, %v1359
      %v1361 = vrot.slane %v1356, %v1360
      %v1379 = vunpack.c.l.b16 %v1340
      %v1380 = vunpack.c.l.b16 %v1341
      %v1381 = vunpack.c.l.b16 %v1342
      %v1382 = vunpack.c.l.b16 %v1343
      %v1383 = vunpack.c.l.b16 %v1344
      %v1384 = vunpack.c.l.b16 %v1345
      %v1385 = vunpack.c.l.b16 %v1346
      %v1386 = vunpack.c.l.b16 %v1347
      %v1387 = vunpack.c.l.b16 %v1348
      %v1388 = vunpack.c.l.b16 %v1349
      %v1389 = vunpack.c.l.b16 %v1350
      %v1390 = vunpack.c.l.b16 %v1351
      %v1391 = vunpack.c.l.b16 %v1352
      %v1392 = vunpack.c.l.b16 %v1353
      %v1393 = vunpack.c.l.b16 %v1354
      %v1394 = vunpack.c.l.b16 %v1355
      %v1395 = vpack.c.b16 %v1380, %v1379
      %v1396 = vpack.c.b16 %v1382, %v1381
      %v1397 = vpack.c.b16 %v1384, %v1383
      %v1398 = vpack.c.b16 %v1386, %v1385
      %v1399 = vpack.c.b16 %v1388, %v1387
      %v1400 = vpack.c.b16 %v1390, %v1389
      %v1401 = vpack.c.b16 %v1392, %v1391
      %v1402 = vpack.c.b16 %v1394, %v1393
      %1411 = vmatprep.subr.bf16.mxu0 0
      %1412 = vmatpush1.bf16.msra.mxu0 %v1402
      %1413 = vmatprep.subr.bf16.mxu0 0
      %1414 = vmatpush1.bf16.msra.mxu0 %v1401
      %1415 = vmatprep.subr.bf16.mxu0 0
      %1416 = vmatpush1.bf16.msra.mxu0 %v1400
      %1417 = vmatprep.subr.bf16.mxu0 0
      %1418 = vmatpush1.bf16.msra.mxu0 %v1399
      %1419 = vmatprep.subr.bf16.mxu0 0
      %1420 = vmatpush1.bf16.msra.mxu0 %v1398
      %1421 = vmatprep.subr.bf16.mxu0 0
      %1422 = vmatpush1.bf16.msra.mxu0 %v1397
      %1423 = vmatprep.subr.bf16.mxu0 0
      %1424 = vmatpush1.bf16.msra.mxu0 %v1396
      %1425 = vmatprep.subr.bf16.mxu0 0
      %1426 = vmatpush1.bf16.msra.mxu0 %v1395
      %1427 = vmatprep.subr.bf16.mxu0 0
      %1428 = vmatpush2.bf16.msra.mxu0 0
      %1429 = vmatprep.subr.bf16.mxu0 0
      %1430 = vmatpush2.bf16.msra.mxu0 0
      %1431 = vmatprep.subr.bf16.mxu0 0
      %1432 = vmatpush2.bf16.msra.mxu0 0
      %1433 = vmatprep.subr.bf16.mxu0 0
      %1434 = vmatpush2.bf16.msra.mxu0 0
      %1435 = vmatprep.subr.bf16.mxu0 0
      %1436 = vmatpush2.bf16.msra.mxu0 0
      %1437 = vmatprep.subr.bf16.mxu0 0
      %1438 = vmatpush2.bf16.msra.mxu0 0
      %1439 = vmatprep.subr.bf16.mxu0 0
      %1440 = vmatpush2.bf16.msra.mxu0 0
      %1441 = vmatprep.subr.bf16.mxu0 0
      %1442 = vmatpush2.bf16.msra.mxu0 0
      %1443 = vmatprep.mubr.bf16.mxu0 0
      %1444 = vmatmul.mubr.bf16.gmra.mxu0 %v1308
      %v1445 = vpop.f32.mrf.mxu0
      %v1446 = vadd.f32 %v1361, %v1445
      %v1447 = vpop.f32.mrf.mxu0
      %v1448 = vpop.f32.mrf.mxu0
      %v1449 = vadd.f32 %v1361, %v1448
      %v1450 = vpop.f32.mrf.mxu0
      %1451 = vmatprep.mubr.bf16.mxu0 0
      %1452 = vmatmul.mubr.bf16.gmra.mxu0 %v1309
      %v1453 = vpop.f32.mrf.mxu0
      %v1454 = vadd.f32 %v1361, %v1453
      %v1455 = vpop.f32.mrf.mxu0
      %v1456 = vpop.f32.mrf.mxu0
      %v1457 = vadd.f32 %v1361, %v1456
      %v1458 = vpop.f32.mrf.mxu0
      %1459 = vmatprep.mubr.bf16.mxu0 0
      %1460 = vmatmul.mubr.bf16.gmra.mxu0 %v1310
      %v1461 = vpop.f32.mrf.mxu0
      %v1462 = vadd.f32 %v1361, %v1461
      %v1463 = vpop.f32.mrf.mxu0
      %v1464 = vpop.f32.mrf.mxu0
      %v1465 = vadd.f32 %v1361, %v1464
      %v1466 = vpop.f32.mrf.mxu0
      %1467 = vmatprep.mubr.bf16.mxu0 0
      %1468 = vmatmul.mubr.bf16.gmra.mxu0 %v1311
      %v1469 = vpop.f32.mrf.mxu0
      %v1470 = vadd.f32 %v1361, %v1469
      %v1471 = vpop.f32.mrf.mxu0
      %v1472 = vpop.f32.mrf.mxu0
      %v1473 = vadd.f32 %v1361, %v1472
      %v1474 = vpop.f32.mrf.mxu0
      %1475 = vmatprep.mubr.bf16.mxu0 0
      %1476 = vmatmul.mubr.bf16.gmra.mxu0 %v1312
      %v1477 = vpop.f32.mrf.mxu0
      %v1478 = vadd.f32 %v1361, %v1477
      %v1479 = vpop.f32.mrf.mxu0
      %v1480 = vpop.f32.mrf.mxu0
      %v1481 = vadd.f32 %v1361, %v1480
      %v1482 = vpop.f32.mrf.mxu0
      %1483 = vmatprep.mubr.bf16.mxu0 0
      %1484 = vmatmul.mubr.bf16.gmra.mxu0 %v1313
      %v1485 = vpop.f32.mrf.mxu0
      %v1486 = vadd.f32 %v1361, %v1485
      %v1487 = vpop.f32.mrf.mxu0
      %v1488 = vpop.f32.mrf.mxu0
      %v1489 = vadd.f32 %v1361, %v1488
      %v1490 = vpop.f32.mrf.mxu0
      %1491 = vmatprep.mubr.bf16.mxu0 0
      %1492 = vmatmul.mubr.bf16.gmra.mxu0 %v1314
      %v1493 = vpop.f32.mrf.mxu0
      %v1494 = vadd.f32 %v1361, %v1493
      %v1495 = vpop.f32.mrf.mxu0
      %v1496 = vpop.f32.mrf.mxu0
      %v1497 = vadd.f32 %v1361, %v1496
      %v1498 = vpop.f32.mrf.mxu0
      %1499 = vmatprep.mubr.bf16.mxu0 0
      %1500 = vmatmul.mubr.bf16.gmra.mxu0 %v1315
      %v1501 = vpop.f32.mrf.mxu0
      %v1502 = vadd.f32 %v1361, %v1501
      %v1503 = vpop.f32.mrf.mxu0
      %v1504 = vpop.f32.mrf.mxu0
      %v1505 = vadd.f32 %v1361, %v1504
      %v1506 = vpop.f32.mrf.mxu0
      %1507 = vmatprep.mubr.bf16.mxu0 0
      %1508 = vmatmul.mubr.bf16.gmra.mxu0 %v1316
      %v1509 = vpop.f32.mrf.mxu0
      %v1510 = vadd.f32 %v1361, %v1509
      %v1511 = vpop.f32.mrf.mxu0
      %v1512 = vpop.f32.mrf.mxu0
      %v1513 = vadd.f32 %v1361, %v1512
      %v1514 = vpop.f32.mrf.mxu0
      %1515 = vmatprep.mubr.bf16.mxu0 0
      %1516 = vmatmul.mubr.bf16.gmra.mxu0 %v1317
      %v1517 = vpop.f32.mrf.mxu0
      %v1518 = vadd.f32 %v1361, %v1517
      %v1519 = vpop.f32.mrf.mxu0
      %v1520 = vpop.f32.mrf.mxu0
      %v1521 = vadd.f32 %v1361, %v1520
      %v1522 = vpop.f32.mrf.mxu0
      %1523 = vmatprep.mubr.bf16.mxu0 0
      %1524 = vmatmul.mubr.bf16.gmra.mxu0 %v1318
      %v1525 = vpop.f32.mrf.mxu0
      %v1526 = vadd.f32 %v1361, %v1525
      %v1527 = vpop.f32.mrf.mxu0
      %v1528 = vpop.f32.mrf.mxu0
      %v1529 = vadd.f32 %v1361, %v1528
      %v1530 = vpop.f32.mrf.mxu0
      %1531 = vmatprep.mubr.bf16.mxu0 0
      %1532 = vmatmul.mubr.bf16.gmra.mxu0 %v1319
      %v1533 = vpop.f32.mrf.mxu0
      %v1534 = vadd.f32 %v1361, %v1533
      %v1535 = vpop.f32.mrf.mxu0
      %v1536 = vpop.f32.mrf.mxu0
      %v1537 = vadd.f32 %v1361, %v1536
      %v1538 = vpop.f32.mrf.mxu0
      %1539 = vmatprep.mubr.bf16.mxu0 0
      %1540 = vmatmul.mubr.bf16.gmra.mxu0 %v1320
      %v1541 = vpop.f32.mrf.mxu0
      %v1542 = vadd.f32 %v1361, %v1541
      %v1543 = vpop.f32.mrf.mxu0
      %v1544 = vpop.f32.mrf.mxu0
      %v1545 = vadd.f32 %v1361, %v1544
      %v1546 = vpop.f32.mrf.mxu0
      %1547 = vmatprep.mubr.bf16.mxu0 0
      %1548 = vmatmul.mubr.bf16.gmra.mxu0 %v1321
      %v1549 = vpop.f32.mrf.mxu0
      %v1550 = vadd.f32 %v1361, %v1549
      %v1551 = vpop.f32.mrf.mxu0
      %v1552 = vpop.f32.mrf.mxu0
      %v1553 = vadd.f32 %v1361, %v1552
      %v1554 = vpop.f32.mrf.mxu0
      %1555 = vmatprep.mubr.bf16.mxu0 0
      %1556 = vmatmul.mubr.bf16.gmra.mxu0 %v1322
      %v1557 = vpop.f32.mrf.mxu0
      %v1558 = vadd.f32 %v1361, %v1557
      %v1559 = vpop.f32.mrf.mxu0
      %v1560 = vpop.f32.mrf.mxu0
      %v1561 = vadd.f32 %v1361, %v1560
      %v1562 = vpop.f32.mrf.mxu0
      %1563 = vmatprep.mubr.bf16.mxu0 0
      %1564 = vmatmul.mubr.bf16.gmra.mxu0 %v1323
      %v1565 = vpop.f32.mrf.mxu0
      %v1566 = vadd.f32 %v1361, %v1565
      %v1567 = vpop.f32.mrf.mxu0
      %v1568 = vpop.f32.mrf.mxu0
      %v1569 = vadd.f32 %v1361, %v1568
      %v1570 = vpop.f32.mrf.mxu0
      %1571 = vmatprep.mubr.bf16.mxu0 0
      %1572 = vmatmul.mubr.bf16.gmra.mxu0 %v1324
      %v1573 = vpop.f32.mrf.mxu0
      %v1574 = vadd.f32 %v1361, %v1573
      %v1575 = vpop.f32.mrf.mxu0
      %v1576 = vpop.f32.mrf.mxu0
      %v1577 = vadd.f32 %v1361, %v1576
      %v1578 = vpop.f32.mrf.mxu0
      %1579 = vmatprep.mubr.bf16.mxu0 0
      %1580 = vmatmul.mubr.bf16.gmra.mxu0 %v1325
      %v1581 = vpop.f32.mrf.mxu0
      %v1582 = vadd.f32 %v1361, %v1581
      %v1583 = vpop.f32.mrf.mxu0
      %v1584 = vpop.f32.mrf.mxu0
      %v1585 = vadd.f32 %v1361, %v1584
      %v1586 = vpop.f32.mrf.mxu0
      %1587 = vmatprep.mubr.bf16.mxu0 0
      %1588 = vmatmul.mubr.bf16.gmra.mxu0 %v1326
      %v1589 = vpop.f32.mrf.mxu0
      %v1590 = vadd.f32 %v1361, %v1589
      %v1591 = vpop.f32.mrf.mxu0
      %v1592 = vpop.f32.mrf.mxu0
      %v1593 = vadd.f32 %v1361, %v1592
      %v1594 = vpop.f32.mrf.mxu0
      %1595 = vmatprep.mubr.bf16.mxu0 0
      %1596 = vmatmul.mubr.bf16.gmra.mxu0 %v1327
      %v1597 = vpop.f32.mrf.mxu0
      %v1598 = vadd.f32 %v1361, %v1597
      %v1599 = vpop.f32.mrf.mxu0
      %v1600 = vpop.f32.mrf.mxu0
      %v1601 = vadd.f32 %v1361, %v1600
      %v1602 = vpop.f32.mrf.mxu0
      %1603 = vmatprep.mubr.bf16.mxu0 0
      %1604 = vmatmul.mubr.bf16.gmra.mxu0 %v1328
      %v1605 = vpop.f32.mrf.mxu0
      %v1606 = vadd.f32 %v1361, %v1605
      %v1607 = vpop.f32.mrf.mxu0
      %v1608 = vpop.f32.mrf.mxu0
      %v1609 = vadd.f32 %v1361, %v1608
      %v1610 = vpop.f32.mrf.mxu0
      %1611 = vmatprep.mubr.bf16.mxu0 0
      %1612 = vmatmul.mubr.bf16.gmra.mxu0 %v1329
      %v1613 = vpop.f32.mrf.mxu0
      %v1614 = vadd.f32 %v1361, %v1613
      %v1615 = vpop.f32.mrf.mxu0
      %v1616 = vpop.f32.mrf.mxu0
      %v1617 = vadd.f32 %v1361, %v1616
      %v1618 = vpop.f32.mrf.mxu0
      %1619 = vmatprep.mubr.bf16.mxu0 0
      %1620 = vmatmul.mubr.bf16.gmra.mxu0 %v1330
      %v1621 = vpop.f32.mrf.mxu0
      %v1622 = vadd.f32 %v1361, %v1621
      %v1623 = vpop.f32.mrf.mxu0
      %v1624 = vpop.f32.mrf.mxu0
      %v1625 = vadd.f32 %v1361, %v1624
      %v1626 = vpop.f32.mrf.mxu0
      %1627 = vmatprep.mubr.bf16.mxu0 0
      %1628 = vmatmul.mubr.bf16.gmra.mxu0 %v1331
      %v1629 = vpop.f32.mrf.mxu0
      %v1630 = vadd.f32 %v1361, %v1629
      %v1631 = vpop.f32.mrf.mxu0
      %v1632 = vpop.f32.mrf.mxu0
      %v1633 = vadd.f32 %v1361, %v1632
      %v1634 = vpop.f32.mrf.mxu0
      %1635 = vmatprep.mubr.bf16.mxu0 0
      %1636 = vmatmul.mubr.bf16.gmra.mxu0 %v1332
      %v1637 = vpop.f32.mrf.mxu0
      %v1638 = vadd.f32 %v1361, %v1637
      %v1639 = vpop.f32.mrf.mxu0
      %v1640 = vpop.f32.mrf.mxu0
      %v1641 = vadd.f32 %v1361, %v1640
      %v1642 = vpop.f32.mrf.mxu0
      %1643 = vmatprep.mubr.bf16.mxu0 0
      %1644 = vmatmul.mubr.bf16.gmra.mxu0 %v1333
      %v1645 = vpop.f32.mrf.mxu0
      %v1646 = vadd.f32 %v1361, %v1645
      %v1647 = vpop.f32.mrf.mxu0
      %v1648 = vpop.f32.mrf.mxu0
      %v1649 = vadd.f32 %v1361, %v1648
      %v1650 = vpop.f32.mrf.mxu0
      %1651 = vmatprep.mubr.bf16.mxu0 0
      %1652 = vmatmul.mubr.bf16.gmra.mxu0 %v1334
      %v1653 = vpop.f32.mrf.mxu0
      %v1654 = vadd.f32 %v1361, %v1653
      %v1655 = vpop.f32.mrf.mxu0
      %v1656 = vpop.f32.mrf.mxu0
      %v1657 = vadd.f32 %v1361, %v1656
      %v1658 = vpop.f32.mrf.mxu0
      %1659 = vmatprep.mubr.bf16.mxu0 0
      %1660 = vmatmul.mubr.bf16.gmra.mxu0 %v1335
      %v1661 = vpop.f32.mrf.mxu0
      %v1662 = vadd.f32 %v1361, %v1661
      %v1663 = vpop.f32.mrf.mxu0
      %v1664 = vpop.f32.mrf.mxu0
      %v1665 = vadd.f32 %v1361, %v1664
      %v1666 = vpop.f32.mrf.mxu0
      %1667 = vmatprep.mubr.bf16.mxu0 0
      %1668 = vmatmul.mubr.bf16.gmra.mxu0 %v1336
      %v1669 = vpop.f32.mrf.mxu0
      %v1670 = vadd.f32 %v1361, %v1669
      %v1671 = vpop.f32.mrf.mxu0
      %v1672 = vpop.f32.mrf.mxu0
      %v1673 = vadd.f32 %v1361, %v1672
      %v1674 = vpop.f32.mrf.mxu0
      %1675 = vmatprep.mubr.bf16.mxu0 0
      %1676 = vmatmul.mubr.bf16.gmra.mxu0 %v1337
      %v1677 = vpop.f32.mrf.mxu0
      %v1678 = vadd.f32 %v1361, %v1677
      %v1679 = vpop.f32.mrf.mxu0
      %v1680 = vpop.f32.mrf.mxu0
      %v1681 = vadd.f32 %v1361, %v1680
      %v1682 = vpop.f32.mrf.mxu0
      %1683 = vmatprep.mubr.bf16.mxu0 0
      %1684 = vmatmul.mubr.bf16.gmra.mxu0 %v1338
      %v1685 = vpop.f32.mrf.mxu0
      %v1686 = vadd.f32 %v1361, %v1685
      %v1687 = vpop.f32.mrf.mxu0
      %v1688 = vpop.f32.mrf.mxu0
      %v1689 = vadd.f32 %v1361, %v1688
      %v1690 = vpop.f32.mrf.mxu0
      %1691 = vmatprep.mubr.bf16.mxu0 0
      %1692 = vmatmul.mubr.bf16.gmra.mxu0 %v1339
      %v1693 = vpop.f32.mrf.mxu0
      %v1694 = vadd.f32 %v1361, %v1693
      %v1695 = vpop.f32.mrf.mxu0
      %v1696 = vpop.f32.mrf.mxu0
      %v1697 = vadd.f32 %v1361, %v1696
      %v1698 = vpop.f32.mrf.mxu0
      %1699 = vdwg.mxu0
      %vm1700 = vcmask 31744
      %1701 = vst.msk [vmem:[%s280] sm:$0xff] %vm1700, %v1446
      %1702 = vst.msk [vmem:[%s280 + $0x8] sm:$0xff] %vm1700, %v1449
      %1703 = vst.msk [vmem:[%s280 + $0x10] sm:$0xff] %vm1700, %v1454
      %1704 = vst.msk [vmem:[%s280 + $0x18] sm:$0xff] %vm1700, %v1457
      %1705 = vst.msk [vmem:[%s280 + $0x20] sm:$0xff] %vm1700, %v1462
      %1706 = vst.msk [vmem:[%s280 + $0x28] sm:$0xff] %vm1700, %v1465
      %1707 = vst.msk [vmem:[%s280 + $0x30] sm:$0xff] %vm1700, %v1470
      %1708 = vst.msk [vmem:[%s280 + $0x38] sm:$0xff] %vm1700, %v1473
      %1709 = vst.msk [vmem:[%s280 + $0x40] sm:$0xff] %vm1700, %v1478
      %1710 = vst.msk [vmem:[%s280 + $0x48] sm:$0xff] %vm1700, %v1481
      %1711 = vst.msk [vmem:[%s280 + $0x50] sm:$0xff] %vm1700, %v1486
      %1712 = vst.msk [vmem:[%s280 + $0x58] sm:$0xff] %vm1700, %v1489
      %1713 = vst.msk [vmem:[%s280 + $0x60] sm:$0xff] %vm1700, %v1494
      %1714 = vst.msk [vmem:[%s280 + $0x68] sm:$0xff] %vm1700, %v1497
      %1715 = vst.msk [vmem:[%s280 + $0x70] sm:$0xff] %vm1700, %v1502
      %1716 = vst.msk [vmem:[%s280 + $0x78] sm:$0xff] %vm1700, %v1505
      %1717 = vst.msk [vmem:[%s280 + $0x80] sm:$0xff] %vm1700, %v1510
      %1718 = vst.msk [vmem:[%s280 + $0x88] sm:$0xff] %vm1700, %v1513
      %1719 = vst.msk [vmem:[%s280 + $0x90] sm:$0xff] %vm1700, %v1518
      %1720 = vst.msk [vmem:[%s280 + $0x98] sm:$0xff] %vm1700, %v1521
      %1721 = vst.msk [vmem:[%s280 + $0xa0] sm:$0xff] %vm1700, %v1526
      %1722 = vst.msk [vmem:[%s280 + $0xa8] sm:$0xff] %vm1700, %v1529
      %1723 = vst.msk [vmem:[%s280 + $0xb0] sm:$0xff] %vm1700, %v1534
      %1724 = vst.msk [vmem:[%s280 + $0xb8] sm:$0xff] %vm1700, %v1537
      %1725 = vst.msk [vmem:[%s280 + $0xc0] sm:$0xff] %vm1700, %v1542
      %1726 = vst.msk [vmem:[%s280 + $0xc8] sm:$0xff] %vm1700, %v1545
      %1727 = vst.msk [vmem:[%s280 + $0xd0] sm:$0xff] %vm1700, %v1550
      %1728 = vst.msk [vmem:[%s280 + $0xd8] sm:$0xff] %vm1700, %v1553
      %1729 = vst.msk [vmem:[%s280 + $0xe0] sm:$0xff] %vm1700, %v1558
      %1730 = vst.msk [vmem:[%s280 + $0xe8] sm:$0xff] %vm1700, %v1561
      %1731 = vst.msk [vmem:[%s280 + $0xf0] sm:$0xff] %vm1700, %v1566
      %1732 = vst.msk [vmem:[%s280 + $0xf8] sm:$0xff] %vm1700, %v1569
      %1733 = vst.msk [vmem:[%s280 + $0x100] sm:$0xff] %vm1700, %v1574
      %1734 = vst.msk [vmem:[%s280 + $0x108] sm:$0xff] %vm1700, %v1577
      %1735 = vst.msk [vmem:[%s280 + $0x110] sm:$0xff] %vm1700, %v1582
      %1736 = vst.msk [vmem:[%s280 + $0x118] sm:$0xff] %vm1700, %v1585
      %1737 = vst.msk [vmem:[%s280 + $0x120] sm:$0xff] %vm1700, %v1590
      %1738 = vst.msk [vmem:[%s280 + $0x128] sm:$0xff] %vm1700, %v1593
      %1739 = vst.msk [vmem:[%s280 + $0x130] sm:$0xff] %vm1700, %v1598
      %1740 = vst.msk [vmem:[%s280 + $0x138] sm:$0xff] %vm1700, %v1601
      %1741 = vst.msk [vmem:[%s280 + $0x140] sm:$0xff] %vm1700, %v1606
      %1742 = vst.msk [vmem:[%s280 + $0x148] sm:$0xff] %vm1700, %v1609
      %1743 = vst.msk [vmem:[%s280 + $0x150] sm:$0xff] %vm1700, %v1614
      %1744 = vst.msk [vmem:[%s280 + $0x158] sm:$0xff] %vm1700, %v1617
      %1745 = vst.msk [vmem:[%s280 + $0x160] sm:$0xff] %vm1700, %v1622
      %1746 = vst.msk [vmem:[%s280 + $0x168] sm:$0xff] %vm1700, %v1625
      %1747 = vst.msk [vmem:[%s280 + $0x170] sm:$0xff] %vm1700, %v1630
      %1748 = vst.msk [vmem:[%s280 + $0x178] sm:$0xff] %vm1700, %v1633
      %1749 = vst.msk [vmem:[%s280 + $0x180] sm:$0xff] %vm1700, %v1638
      %1750 = vst.msk [vmem:[%s280 + $0x188] sm:$0xff] %vm1700, %v1641
      %1751 = vst.msk [vmem:[%s280 + $0x190] sm:$0xff] %vm1700, %v1646
      %1752 = vst.msk [vmem:[%s280 + $0x198] sm:$0xff] %vm1700, %v1649
      %1753 = vst.msk [vmem:[%s280 + $0x1a0] sm:$0xff] %vm1700, %v1654
      %1754 = vst.msk [vmem:[%s280 + $0x1a8] sm:$0xff] %vm1700, %v1657
      %1755 = vst.msk [vmem:[%s280 + $0x1b0] sm:$0xff] %vm1700, %v1662
      %1756 = vst.msk [vmem:[%s280 + $0x1b8] sm:$0xff] %vm1700, %v1665
      %1757 = vst.msk [vmem:[%s280 + $0x1c0] sm:$0xff] %vm1700, %v1670
      %1758 = vst.msk [vmem:[%s280 + $0x1c8] sm:$0xff] %vm1700, %v1673
      %1759 = vst.msk [vmem:[%s280 + $0x1d0] sm:$0xff] %vm1700, %v1678
      %1760 = vst.msk [vmem:[%s280 + $0x1d8] sm:$0xff] %vm1700, %v1681
      %1761 = vst.msk [vmem:[%s280 + $0x1e0] sm:$0xff] %vm1700, %v1686
      %1762 = vst.msk [vmem:[%s280 + $0x1e8] sm:$0xff] %vm1700, %v1689
      %1763 = vst.msk [vmem:[%s280 + $0x1f0] sm:$0xff] %vm1700, %v1694
      %1764 = vst.msk [vmem:[%s280 + $0x1f8] sm:$0xff] %vm1700, %v1697
      %s1765 = smul.u32 64, %s18
      %p1766 = scmp.lt.s32.totalorder %s1765, 127
      %s1767 = scalar_select %p1766, %s1765, 127
      %s1768 = smul.addr %s1767, 8
      %s1769 = scalar_lea.vmem %s7, %s1768
      // Predicated region
      $region49: #{tpu_custom_call.1} parent=47 // pred_check
        %p1770 = pneg %p188
      $region50: #{tpu_custom_call.1} parent=47 // pred_check_branch
        %1772 = sbr.rel (%p1770) target = $region52
      $region51: #{tpu_custom_call.1} parent=47 // pred_region
        %s1773 = smul.u32 64, %s18
      $region52: #{tpu_custom_call.1} parent=47 // pred_fallthru
        _
    $region48: #{tpu_custom_call.1} parent=5 // pred_fallthru
      _
    %p1774 = scmp.le.s32.totalorder 2, %s13
    // Predicated region
    $region53: #{tpu_custom_call.1} parent=5 // pred_check
      %p1775 = pneg %p1774
    $region54: #{tpu_custom_call.1} parent=5 // pred_check_branch
      %1777 = sbr.rel (%p1775) target = $region56
    $region55: #{tpu_custom_call.1} parent=5 // pred_region
      %s1778 = ssub.s32 %s13, 2
      // Predicated region
      $region57: #{tpu_custom_call.1} parent=55 // pred_check
        %p1779 = pneg %p194
      $region58: #{tpu_custom_call.1} parent=55 // pred_check_branch
        %1781 = sbr.rel (%p1779) target = $region60
      $region59: #{tpu_custom_call.1} parent=55 // pred_region
        %s1782 = smul.u32 64, %s19
        %p1783 = scmp.lt.s32.totalorder %s1782, 127
        %s1784 = scalar_select %p1783, %s1782, 127
        %s1785 = smul.addr %s1784, 8
        %s1786 = scalar_lea.vmem %s7, %s1785
      $region60: #{tpu_custom_call.1} parent=55 // pred_fallthru
        _
    $region56: #{tpu_custom_call.1} parent=5 // pred_fallthru
      _
  $region6: #{tpu_custom_call.1} parent=0 // loop_footer
    %s17 = sadd.s32 1, %s13
  $region7: #{tpu_custom_call.1} parent=0 // loop_footer_branch
    %12 = sbr.rel target = $region3
  $region8: #{tpu_custom_call.1} parent=0 // loop_exit
    _

</llo_original>
